<compile_context>
chip_gen: v7x
topology: tpu7x:2x2x1
jax: 0.10.0
libtpu: 0.0.40
codegen_flags: <defaults>
</compile_context>

<pallas_src>
import functools

import jax
import jax.numpy as jnp
from jax import lax
from jax.experimental import pallas as pl
from jax.experimental.pallas import tpu as pltpu

BN_EPS = 1e-5
F32 = jnp.float32
BF16 = jnp.bfloat16
LANE = 128
NEG_INF = -1e30


def _round_up(x, m):
    return (x + m - 1) // m * m


def _dotf32(a, b):
    return jnp.dot(a, b, preferred_element_type=F32)


def _pad2(a, rows, cols, dtype):
    r, c = a.shape
    return jnp.pad(a, ((0, rows - r), (0, cols - c))).astype(dtype)


def _pack_rows(rows, width):
    """Pack a list of short vectors into one (8, width) f32 array (one DMA)."""
    out = jnp.zeros((8, width), F32)
    for i, v in enumerate(rows):
        v = jnp.ravel(v).astype(F32)
        out = out.at[i, : v.shape[0]].set(v)
    return out


def _cparams(sem):
    return pltpu.CompilerParams(dimension_semantics=sem,
                                vmem_limit_bytes=32 * 1024 * 1024)


# ---------------------------------------------------------------------------
# Kernel 0 (optional): R = x @ w_rel  (only when D > nw, so the O(N^2) matmul
# in kernel 1 runs at the narrower width nw)
# ---------------------------------------------------------------------------
def _project_kernel(x_ref, w_ref, r_ref):
    r_ref[...] = _dotf32(x_ref[...], w_ref[...]).astype(BF16)


# ---------------------------------------------------------------------------
# Kernel 1: GraphConv   g = (A @ R)[@ w_rel] + x @ w_root + b_gnn
# grid = (row tiles "parallel", reduction tiles "arbitrary"), VMEM accumulator.
# On the premul path w_rel is already folded into R and is not passed at all.
# ---------------------------------------------------------------------------
def _graphconv_kernel(a_ref, r_ref, x_ref, *refs, premul):
    if premul:
        w_root_ref, b_ref, g_ref, acc_ref = refs
        w_rel_ref = None
    else:
        w_rel_ref, w_root_ref, b_ref, g_ref, acc_ref = refs
    k = pl.program_id(1)

    @pl.when(k == 0)
    def _():
        acc_ref[...] = jnp.zeros_like(acc_ref)

    acc_ref[...] += _dotf32(a_ref[...], r_ref[...])

    @pl.when(k == pl.num_programs(1) - 1)
    def _():
        agg = acc_ref[...]
        if premul:
            rel = agg                                            # w_rel already applied
        else:
            rel = _dotf32(agg.astype(BF16), w_rel_ref[...])
        root = _dotf32(x_ref[...], w_root_ref[...])
        g_ref[...] = rel + root + b_ref[...]


# ---------------------------------------------------------------------------
# Kernel 2: enc1g = tanh(g*a + b)  (folded BN);  gated encoder;
#           per-tile per-document partial sums of enc2.
# ---------------------------------------------------------------------------
def _encode_kernel(g_ref, x_ref, s_ref, vec_ref,
                   w1a_ref, w1b_ref, w2a_ref, w2b_ref,
                   enc1g_ref, enc2p_ref, *, nwp, hp):
    # packed rows: 0 a_bn, 1 b_bn, 2 b_fc1, 3 b_fc2
    a_bn = vec_ref[0:1, :nwp]
    b_bn = vec_ref[1:2, :nwp]
    b1 = vec_ref[2:3, :hp]
    b2 = vec_ref[3:4, :hp]

    g = g_ref[...]                                               # [TM, NWp] f32
    enc1g = jnp.tanh(g * a_bn + b_bn)
    enc1g_b = enc1g.astype(BF16)
    enc1g_ref[...] = enc1g_b

    x = x_ref[...]                                               # [TM, Dp] bf16
    z1 = _dotf32(enc1g_b, w1a_ref[...]) + _dotf32(x, w1b_ref[...]) + b1
    z2 = _dotf32(enc1g_b, w2a_ref[...]) + _dotf32(x, w2b_ref[...]) + b2
    enc2_node = jax.nn.sigmoid(z1) * jnp.tanh(z2)                # [TM, Hp] f32
    # Dropout(0.2) is the eval-mode identity.
    # per-document partial sums for this row tile (scatter-add as a matmul)
    enc2p_ref[...] = _dotf32(s_ref[...], enc2_node.astype(BF16))  # [B, Hp]


# ---------------------------------------------------------------------------
# Kernel 3: mean / logvar heads over the (small) document batch B.
# ---------------------------------------------------------------------------
def _heads_kernel(enc2_ref, w_mean_ref, w_lv_ref, vec_ref, mean_ref, logvar_ref):
    # packed rows: 0 b_mean, 1 beta_mean, 2 b_lv
    e2 = enc2_ref[...].astype(BF16)
    b_mean = vec_ref[0:1, :]
    beta_mean = vec_ref[1:2, :]
    b_lv = vec_ref[2:3, :]

    mean_pre = _dotf32(e2, w_mean_ref[...]) + b_mean
    mu = jnp.mean(mean_pre, axis=0, keepdims=True)
    var = jnp.mean((mean_pre - mu) * (mean_pre - mu), axis=0, keepdims=True)
    # mean_bn weight frozen to 1.0 (per module __init__)
    mean_ref[...] = (mean_pre - mu) * lax.rsqrt(var + BN_EPS) + beta_mean
    # logvar_fc is zero-initialised by reset_parameters but stays trainable,
    # so the (tiny B x H x T) matmul is kept general.  No BN on logvar in fwd.
    logvar_ref[...] = _dotf32(e2, w_lv_ref[...]) + b_lv


# ---------------------------------------------------------------------------
# Kernel 4: phi head over node-row tiles (masked softmax, EUP reciprocal).
# ---------------------------------------------------------------------------
def _phi_kernel(enc1g_ref, x_ref, s_ref, enc2_ref,
                wa_ref, wb_ref, wc_ref, b_ref, phi_ref, *, t_real):
    # enc2[x_batch] for this row tile, via a B-axis contraction (no S.T input).
    enc2_back = lax.dot_general(
        s_ref[...], enc2_ref[...],
        dimension_numbers=(((0,), (0,)), ((), ())),
        preferred_element_type=F32)                              # [TM, Hp]

    logits = (_dotf32(enc1g_ref[...], wa_ref[...])
              + _dotf32(x_ref[...], wb_ref[...])
              + _dotf32(enc2_back.astype(BF16), wc_ref[...])
              + b_ref[...])                                      # [TM, Tp]

    lane = lax.broadcasted_iota(jnp.int32, logits.shape, 1)
    logits = jnp.where(lane < t_real, logits, NEG_INF)           # mask padded topics
    m = jnp.max(logits, axis=-1, keepdims=True)
    e = jnp.exp(logits - m)
    denom = jnp.sum(e, axis=-1, keepdims=True)
    phi_ref[...] = e * pl.reciprocal(denom, approx=True)


# ---------------------------------------------------------------------------
# Parameters (torch-Linear-like init; logvar_fc zeroed per reset_parameters)
# ---------------------------------------------------------------------------
def init_params(key, D, nw, H, T):
    ks = jax.random.split(key, 16)

    def lin(k, fan_in, shape):
        bound = 1.0 / float(fan_in) ** 0.5
        return jax.random.uniform(k, shape, F32, -bound, bound)

    return dict(
        w_rel=lin(ks[0], D, (D, nw)),
        w_root=lin(ks[1], D, (D, nw)),
        b_gnn=lin(ks[2], D, (1, nw)),
        gamma1=jnp.ones((1, nw), F32),
        beta1=jnp.zeros((1, nw), F32),
        w_fc1a=lin(ks[3], nw + D, (nw, H)),
        w_fc1b=lin(ks[4], nw + D, (D, H)),
        b_fc1=lin(ks[5], nw + D, (1, H)),
        w_fc2a=lin(ks[6], nw + D, (nw, H)),
        w_fc2b=lin(ks[7], nw + D, (D, H)),
        b_fc2=lin(ks[8], nw + D, (1, H)),
        w_mean=lin(ks[9], H, (H, T)),
        b_mean=lin(ks[10], H, (1, T)),
        beta_mean=jnp.zeros((1, T), F32),            # mean_bn bias (weight frozen to 1)
        w_lv=jnp.zeros((H, T), F32),                 # logvar_fc zero-init
        b_lv=jnp.zeros((1, T), F32),
        w_phia=lin(ks[11], nw + D + H, (nw, T)),
        w_phib=lin(ks[12], nw + D + H, (D, T)),
        w_phic=lin(ks[13], nw + D + H, (H, T)),
        b_phi=lin(ks[14], nw + D + H, (1, T)),
    )


# ---------------------------------------------------------------------------
# Jitted wrapper (num_docs is static: no host sync, whole pipeline fuses)
# ---------------------------------------------------------------------------
@functools.partial(jax.jit, static_argnames=("num_docs",))
def gnn_dir2_encoder_forward(params, word_vec, idx_x, idx_w, x_batch,
                             edge_index, edge_weight, *, num_docs):
    N = idx_x.shape[0]
    D = word_vec.shape[1]
    nw = params["w_rel"].shape[1]
    H = params["w_fc1a"].shape[1]
    T = params["w_mean"].shape[1]
    B = num_docs

    dp, nwp, hp, tp = (_round_up(d, LANE) for d in (D, nw, H, T))
    tn = min(512, _round_up(N, LANE))          # node-row / reduction tile (mult. of 128)
    np_ = _round_up(N, tn)
    ni = np_ // tn
    premul = D > nw                            # GraphConv association order

    # ---- gather + pad node features ---------------------------------------
    x = word_vec[idx_x].astype(F32)                                 # [N, D]
    x_b = _pad2(x, np_, dp, BF16)                                   # [Np, Dp]

    # ---- dense (padded, zero-filled) adjacency -----------------------------
    # TODO(synk): replace the dense O(N^2) adjacency with a CSR SpMM using
    # PrefetchScalarGridSpec (edge offsets / indices / weights in SMEM) so the
    # aggregation is O(E) instead of O(N^2) for large sparse graphs.
    src, dst = edge_index[0], edge_index[1]
    A = jnp.zeros((np_, np_), F32)
    A = A.at[dst, src].add(edge_weight.astype(F32))
    A = A.at[jnp.arange(N), jnp.arange(N)].add(idx_w.astype(F32))   # self loops, weight idx_w
    A_b = A.astype(BF16)

    # ---- document one-hot (padded nodes -> no document => contribute zero) --
    xb_pad = jnp.full((np_,), B, dtype=jnp.int32).at[:N].set(x_batch.astype(jnp.int32))
    S = (xb_pad[None, :] == jnp.arange(B, dtype=jnp.int32)[:, None]).astype(BF16)  # [B, Np]

    # ---- padded / bf16 weights ---------------------------------------------
    w_rel_b = _pad2(params["w_rel"], dp, nwp, BF16)
    w_root_b = _pad2(params["w_root"], dp, nwp, BF16)
    b_gnn = _pad2(params["b_gnn"], 1, nwp, F32)
    w1a = _pad2(params["w_fc1a"], nwp, hp, BF16)
    w1b = _pad2(params["w_fc1b"], dp, hp, BF16)
    w2a = _pad2(params["w_fc2a"], nwp, hp, BF16)
    w2b = _pad2(params["w_fc2b"], dp, hp, BF16)
    w_mean = _pad2(params["w_mean"], hp, tp, BF16)
    w_lv = _pad2(params["w_lv"], hp, tp, BF16)
    w_phia = _pad2(params["w_phia"], nwp, tp, BF16)
    w_phib = _pad2(params["w_phib"], dp, tp, BF16)
    w_phic = _pad2(params["w_phic"], hp, tp, BF16)
    b_phi = _pad2(params["b_phi"], 1, tp, F32)

    vmem = pl.BlockSpec(memory_space=pltpu.MemorySpace.VMEM)

    # ---- optional pre-multiply so the O(N^2) matmul runs at width min(D, nw)
    if premul:
        r_b = pl.pallas_call(
            _project_kernel,
            grid=(ni,),
            in_specs=[pl.BlockSpec((tn, dp), lambda i: (i, 0)),
                      pl.BlockSpec((dp, nwp), lambda i: (0, 0))],
            out_specs=pl.BlockSpec((tn, nwp), lambda i: (i, 0)),
            out_shape=jax.ShapeDtypeStruct((np_, nwp), BF16),
            compiler_params=_cparams(("parallel",)),
        )(x_b, w_rel_b)
        fr = nwp
    else:
        r_b = x_b
        fr = dp

    # ---- kernel 1: GraphConv ------------------------------------------------
    gc_in_specs = [
        pl.BlockSpec((tn, tn), lambda i, k: (i, k)),     # A tile
        pl.BlockSpec((tn, fr), lambda i, k: (k, 0)),     # R tile (reduction side)
        pl.BlockSpec((tn, dp), lambda i, k: (i, 0)),     # x rows (root term)
    ]
    gc_args = [A_b, r_b, x_b]
    if not premul:
        gc_in_specs.append(pl.BlockSpec((dp, nwp), lambda i, k: (0, 0)))   # w_rel
        gc_args.append(w_rel_b)
    gc_in_specs += [
        pl.BlockSpec((dp, nwp), lambda i, k: (0, 0)),    # w_root
        pl.BlockSpec((1, nwp), lambda i, k: (0, 0)),     # b_gnn
    ]
    gc_args += [w_root_b, b_gnn]

    g_pad = pl.pallas_call(
        functools.partial(_graphconv_kernel, premul=premul),
        grid=(ni, ni),
        in_specs=gc_in_specs,
        out_specs=pl.BlockSpec((tn, nwp), lambda i, k: (i, 0)),
        out_shape=jax.ShapeDtypeStruct((np_, nwp), F32),
        scratch_shapes=[pltpu.VMEM((tn, fr), F32)],
        compiler_params=_cparams(("parallel", "arbitrary")),
    )(*gc_args)

    # ---- exact global BatchNorm statistics over the N real rows --------------
    # (row-tile grid stays "parallel"; this O(N*nw) reduction is negligible)
    g_valid = g_pad[:N, :nw]
    mu_g = jnp.mean(g_valid, axis=0)
    var_g = jnp.mean((g_valid - mu_g[None, :]) ** 2, axis=0)
    a_bn = params["gamma1"][0] * lax.rsqrt(var_g + BN_EPS)          # folded BN scale
    b_bn = params["beta1"][0] - mu_g * a_bn                          # folded BN shift

    f2 = max(nwp, hp)
    vec2 = _pack_rows([a_bn, b_bn, params["b_fc1"], params["b_fc2"]], f2)

    # ---- kernel 2: enc1g + gated encoder + per-tile document partial sums ----
    enc1g_b, enc2_partial = pl.pallas_call(
        functools.partial(_encode_kernel, nwp=nwp, hp=hp),
        grid=(ni,),
        in_specs=[
            pl.BlockSpec((tn, nwp), lambda i: (i, 0)),       # g
            pl.BlockSpec((tn, dp), lambda i: (i, 0)),        # x
            pl.BlockSpec((B, tn), lambda i: (0, i)),         # S columns of this tile
            pl.BlockSpec((8, f2), lambda i: (0, 0)),         # packed vectors
            pl.BlockSpec((nwp, hp), lambda i: (0, 0)),       # w_fc1a
            pl.BlockSpec((dp, hp), lambda i: (0, 0)),        # w_fc1b
            pl.BlockSpec((nwp, hp), lambda i: (0, 0)),       # w_fc2a
            pl.BlockSpec((dp, hp), lambda i: (0, 0)),        # w_fc2b
        ],
        out_specs=(
            pl.BlockSpec((tn, nwp), lambda i: (i, 0)),
            pl.BlockSpec((None, B, hp), lambda i: (i, 0, 0)),
        ),
        out_shape=(
            jax.ShapeDtypeStruct((np_, nwp), BF16),
            jax.ShapeDtypeStruct((ni, B, hp), F32),
        ),
        compiler_params=_cparams(("parallel",)),
    )(g_pad, x_b, S, vec2, w1a, w1b, w2a, w2b)

    enc2 = jnp.sum(enc2_partial, axis=0)                     # [B, Hp] scatter-sum
    enc2_b = enc2.astype(BF16)

    # ---- kernel 3: mean / logvar heads (tiny, B x Tp) -------------------------
    headvec = _pack_rows([params["b_mean"], params["beta_mean"], params["b_lv"]], tp)
    mean_p, logvar_p = pl.pallas_call(
        _heads_kernel,
        in_specs=[vmem] * 4,
        out_specs=(vmem, vmem),
        out_shape=(jax.ShapeDtypeStruct((B, tp), F32),
                   jax.ShapeDtypeStruct((B, tp), F32)),
        compiler_params=pltpu.CompilerParams(vmem_limit_bytes=32 * 1024 * 1024),
    )(enc2, w_mean, w_lv, headvec)

    # ---- kernel 4: phi head over node-row tiles -------------------------------
    phi_p = pl.pallas_call(
        functools.partial(_phi_kernel, t_real=T),
        grid=(ni,),
        in_specs=[
            pl.BlockSpec((tn, nwp), lambda i: (i, 0)),       # enc1g
            pl.BlockSpec((tn, dp), lambda i: (i, 0)),        # x
            pl.BlockSpec((B, tn), lambda i: (0, i)),         # S columns of this tile
            pl.BlockSpec((B, hp), lambda i: (0, 0)),         # enc2
            pl.BlockSpec((nwp, tp), lambda i: (0, 0)),       # w_phia
            pl.BlockSpec((dp, tp), lambda i: (0, 0)),        # w_phib
            pl.BlockSpec((hp, tp), lambda i: (0, 0)),        # w_phic
            pl.BlockSpec((1, tp), lambda i: (0, 0)),         # b_phi
        ],
        out_specs=pl.BlockSpec((tn, tp), lambda i: (i, 0)),
        out_shape=jax.ShapeDtypeStruct((np_, tp), F32),
        compiler_params=_cparams(("parallel",)),
    )(enc1g_b, x_b, S, enc2_b, w_phia, w_phib, w_phic, b_phi)

    return (mean_p[:, :T], logvar_p[:, :T]), phi_p[:N, :T]


# ---------------------------------------------------------------------------
# Pure-JAX reference mirroring the kernel's bf16-operand / f32-accumulate casts
# ---------------------------------------------------------------------------
def reference_forward(params, x, A, S, x_batch, premul):
    def dot(a, b):
        return jnp.dot(a.astype(BF16), b.astype(BF16), preferred_element_type=F32)

    if premul:
        r = dot(x, params["w_rel"]).astype(BF16)
        rel = jnp.dot(A.astype(BF16), r, preferred_element_type=F32)
    else:
        rel = dot(dot(A, x), params["w_rel"])
    g = rel + dot(x, params["w_root"]) + params["b_gnn"]

    mu = jnp.mean(g, axis=0, keepdims=True)
    var = jnp.mean((g - mu) ** 2, axis=0, keepdims=True)
    a_bn = params["gamma1"] * lax.rsqrt(var + BN_EPS)
    b_bn = params["beta1"] - mu * a_bn
    enc1g = jnp.tanh(g * a_bn + b_bn)
    enc1g_b = enc1g.astype(BF16)

    z1 = dot(enc1g_b, params["w_fc1a"]) + dot(x, params["w_fc1b"]) + params["b_fc1"]
    z2 = dot(enc1g_b, params["w_fc2a"]) + dot(x, params["w_fc2b"]) + params["b_fc2"]
    enc2_node = jax.nn.sigmoid(z1) * jnp.tanh(z2)
    enc2 = jnp.dot(S.astype(BF16), enc2_node.astype(BF16), preferred_element_type=F32)

    mean_pre = dot(enc2, params["w_mean"]) + params["b_mean"]
    mmu = jnp.mean(mean_pre, axis=0, keepdims=True)
    mvar = jnp.mean((mean_pre - mmu) ** 2, axis=0, keepdims=True)
    mean = (mean_pre - mmu) * lax.rsqrt(mvar + BN_EPS) + params["beta_mean"]
    logvar = dot(enc2, params["w_lv"]) + params["b_lv"]

    enc2_back = enc2.astype(BF16).astype(F32)[x_batch]
    logits = (dot(enc1g_b, params["w_phia"]) + dot(x, params["w_phib"])
              + dot(enc2_back, params["w_phic"]) + params["b_phi"])
    phi = jax.nn.softmax(logits, axis=-1)
    return (mean, logvar), phi


def _build_dense(word_vec, idx_x, idx_w, x_batch, edge_index, edge_weight, num_docs):
    N = idx_x.shape[0]
    x = word_vec[idx_x].astype(F32)
    src, dst = edge_index[0], edge_index[1]
    A = jnp.zeros((N, N), F32).at[dst, src].add(edge_weight.astype(F32))
    A = A.at[jnp.arange(N), jnp.arange(N)].add(idx_w.astype(F32))
    S = (x_batch[None, :] == jnp.arange(num_docs, dtype=x_batch.dtype)[:, None]).astype(F32)
    return x, A, S


def _run_case(key, V, D, NW, H, T, N, Bdocs, E):
    ks = jax.random.split(key, 8)
    word_vec = jax.random.normal(ks[0], (V, D), F32)
    idx_x = jax.random.randint(ks[1], (N,), 0, V)
    idx_w = jax.random.uniform(ks[2], (N,), F32, 0.5, 1.5)
    x_batch = (jnp.arange(N, dtype=jnp.int32) % Bdocs)
    edge_index = jnp.stack([jax.random.randint(ks[3], (E,), 0, N),
                            jax.random.randint(ks[4], (E,), 0, N)])
    edge_weight = jax.random.uniform(ks[5], (E,), F32, 0.1, 1.0)
    params = init_params(ks[6], D, NW, H, T)

    (mean, logvar), phi = gnn_dir2_encoder_forward(
        params, word_vec, idx_x, idx_w, x_batch, edge_index, edge_weight,
        num_docs=Bdocs)
    jax.block_until_ready((mean, logvar, phi))

    x, A, S = _build_dense(word_vec, idx_x, idx_w, x_batch, edge_index, edge_weight, Bdocs)
    (mean_r, logvar_r), phi_r = reference_forward(params, x, A, S, x_batch, premul=D > NW)

    assert mean.shape == (Bdocs, T) and logvar.shape == (Bdocs, T) and phi.shape == (N, T)
    assert bool(jnp.all(jnp.isfinite(mean))) and bool(jnp.all(jnp.isfinite(phi)))
    assert jnp.allclose(mean, mean_r, rtol=5e-2, atol=2e-2), float(jnp.max(jnp.abs(mean - mean_r)))
    assert jnp.allclose(logvar, logvar_r, rtol=1e-2, atol=1e-4)
    assert jnp.allclose(phi, phi_r, rtol=3e-2, atol=3e-3), float(jnp.max(jnp.abs(phi - phi_r)))


if __name__ == "__main__":
    key = jax.random.PRNGKey(0)
    k1, k2 = jax.random.split(key)

    # case 1: module's small shapes (D <= nw path): vocab=20, D=16, nw=32,
    #         enc_nh=32, num_topic=8, N=8 nodes, 2 docs, 12 edges
    _run_case(k1, V=20, D=16, NW=32, H=32, T=8, N=8, Bdocs=2, E=12)

    # case 2: D > nw path (pre-multiplied GraphConv) with non-aligned sizes
    _run_case(k2, V=30, D=40, NW=16, H=24, T=10, N=24, Bdocs=3, E=40)

    print("KERNEL_OK")
</pallas_src>

<mosaic_0001>
module attributes {stable_mosaic.version = 11 : i64} {
  func.func @_graphconv_kernel(%arg0: i32, %arg1: i32, %arg2: memref<128x128xbf16, #tpu.memory_space<vmem>>, %arg3: memref<128x128xbf16, #tpu.memory_space<vmem>>, %arg4: memref<128x128xbf16, #tpu.memory_space<vmem>>, %arg5: memref<128x128xbf16, #tpu.memory_space<vmem>>, %arg6: memref<128x128xbf16, #tpu.memory_space<vmem>>, %arg7: memref<1x128xf32, #tpu.memory_space<vmem>>, %arg8: memref<128x128xf32, #tpu.memory_space<vmem>>, %arg9: memref<128x128xf32, #tpu.memory_space<vmem>>) attributes {dimension_semantics = [#tpu.dimension_semantics<parallel>, #tpu.dimension_semantics<arbitrary>], iteration_bounds = array<i64: 1, 1>, scalar_prefetch = 0 : i64, scratch_operands = 1 : i64, tpu.core_type = #tpu.core_type<tc>, window_params = [{transform_indices = @transform_0, window_bounds = array<i64: 128, 128>}, {transform_indices = @transform_1, window_bounds = array<i64: 128, 128>}, {transform_indices = @transform_2, window_bounds = array<i64: 128, 128>}, {pipeline_mode = #tpu.pipeline_mode<synchronous>, transform_indices = @transform_3, window_bounds = array<i64: 128, 128>}, {pipeline_mode = #tpu.pipeline_mode<synchronous>, transform_indices = @transform_4, window_bounds = array<i64: 128, 128>}, {pipeline_mode = #tpu.pipeline_mode<synchronous>, transform_indices = @transform_5, window_bounds = array<i64: 1, 128>}, {transform_indices = @transform_6, window_bounds = array<i64: 128, 128>}]} {
    %c0_i32 = arith.constant 0 : i32
    %0 = arith.cmpi eq, %arg1, %c0_i32 : i32
    %1 = arith.extui %0 : i1 to i32
    %c0_i32_0 = arith.constant 0 : i32
    %2 = arith.cmpi ne, %1, %c0_i32_0 : i32
    scf.if %2 {
      %cst_10 = arith.constant 0.000000e+00 : f32
      %12 = vector.broadcast %cst_10 : f32 to vector<128x128xf32>
      %c0_11 = arith.constant 0 : index
      %c0_12 = arith.constant 0 : index
      %13 = vector.load %arg9[%c0_11, %c0_12] : memref<128x128xf32, #tpu.memory_space<vmem>>, vector<128x128xf32>
      tpu.vector_store %arg9[%c0_11, %c0_12], %12 {strides = array<i32>} : memref<128x128xf32, #tpu.memory_space<vmem>>, vector<128x128xf32>,
    } else {
    }
    %c0 = arith.constant 0 : index
    %c0_1 = arith.constant 0 : index
    %3 = vector.load %arg9[%c0, %c0_1] : memref<128x128xf32, #tpu.memory_space<vmem>>, vector<128x128xf32>
    %c0_2 = arith.constant 0 : index
    %c0_3 = arith.constant 0 : index
    %4 = vector.load %arg2[%c0_2, %c0_3] : memref<128x128xbf16, #tpu.memory_space<vmem>>, vector<128x128xbf16>
    %c0_4 = arith.constant 0 : index
    %c0_5 = arith.constant 0 : index
    %5 = vector.load %arg3[%c0_4, %c0_5] : memref<128x128xbf16, #tpu.memory_space<vmem>>, vector<128x128xbf16>
    %cst = arith.constant dense<0.000000e+00> : vector<128x128xf32>
    %6 = tpu.matmul %4, %5, %cst {dimension_numbers = #tpu.dot_dimension_numbers<[1], [0], [0], [1], [0, 0, 1, 1], [], []>} : vector<128x128xbf16>, vector<128x128xbf16>, vector<128x128xf32> -> vector<128x128xf32>
    %7 = arith.addf %3, %6 : vector<128x128xf32>
    %c0_6 = arith.constant 0 : index
    %c0_7 = arith.constant 0 : index
    %8 = vector.load %arg9[%c0_6, %c0_7] : memref<128x128xf32, #tpu.memory_space<vmem>>, vector<128x128xf32>
    tpu.vector_store %arg9[%c0_6, %c0_7], %7 {strides = array<i32>} : memref<128x128xf32, #tpu.memory_space<vmem>>, vector<128x128xf32>,
    %c0_i32_8 = arith.constant 0 : i32
    %9 = arith.cmpi eq, %arg1, %c0_i32_8 : i32
    %10 = arith.extui %9 : i1 to i32
    %c0_i32_9 = arith.constant 0 : i32
    %11 = arith.cmpi ne, %10, %c0_i32_9 : i32
    scf.if %11 {
      %c0_10 = arith.constant 0 : index
      %c0_11 = arith.constant 0 : index
      %12 = vector.load %arg9[%c0_10, %c0_11] : memref<128x128xf32, #tpu.memory_space<vmem>>, vector<128x128xf32>
      %13 = arith.truncf %12 : vector<128x128xf32> to vector<128x128xbf16>
      %c0_12 = arith.constant 0 : index
      %c0_13 = arith.constant 0 : index
      %14 = vector.load %arg5[%c0_12, %c0_13] : memref<128x128xbf16, #tpu.memory_space<vmem>>, vector<128x128xbf16>
      %cst_14 = arith.constant dense<0.000000e+00> : vector<128x128xf32>
      %15 = tpu.matmul %13, %14, %cst_14 {dimension_numbers = #tpu.dot_dimension_numbers<[1], [0], [0], [1], [0, 0, 1, 1], [], []>} : vector<128x128xbf16>, vector<128x128xbf16>, vector<128x128xf32> -> vector<128x128xf32>
      %c0_15 = arith.constant 0 : index
      %c0_16 = arith.constant 0 : index
      %16 = vector.load %arg4[%c0_15, %c0_16] : memref<128x128xbf16, #tpu.memory_space<vmem>>, vector<128x128xbf16>
      %c0_17 = arith.constant 0 : index
      %c0_18 = arith.constant 0 : index
      %17 = vector.load %arg6[%c0_17, %c0_18] : memref<128x128xbf16, #tpu.memory_space<vmem>>, vector<128x128xbf16>
      %cst_19 = arith.constant dense<0.000000e+00> : vector<128x128xf32>
      %18 = tpu.matmul %16, %17, %cst_19 {dimension_numbers = #tpu.dot_dimension_numbers<[1], [0], [0], [1], [0, 0, 1, 1], [], []>} : vector<128x128xbf16>, vector<128x128xbf16>, vector<128x128xf32> -> vector<128x128xf32>
      %19 = arith.addf %15, %18 : vector<128x128xf32>
      %c0_20 = arith.constant 0 : index
      %c0_21 = arith.constant 0 : index
      %20 = vector.load %arg7[%c0_20, %c0_21] : memref<1x128xf32, #tpu.memory_space<vmem>>, vector<1x128xf32>
      %21 = vector.broadcast %20 : vector<1x128xf32> to vector<128x128xf32>
      %22 = arith.addf %19, %21 : vector<128x128xf32>
      %c0_22 = arith.constant 0 : index
      %c0_23 = arith.constant 0 : index
      %23 = vector.load %arg8[%c0_22, %c0_23] : memref<128x128xf32, #tpu.memory_space<vmem>>, vector<128x128xf32>
      tpu.vector_store %arg8[%c0_22, %c0_23], %22 {strides = array<i32>} : memref<128x128xf32, #tpu.memory_space<vmem>>, vector<128x128xf32>,
    } else {
    }
    return
  }
  func.func @transform_0(%arg0: i32, %arg1: i32) -> (i32, i32) {
    %c0_i32 = arith.constant 0 : i32
    return %arg0, %arg1 : i32, i32
  }
  func.func @transform_1(%arg0: i32, %arg1: i32) -> (i32, i32) {
    %c0_i32 = arith.constant 0 : i32
    %c0_i32_0 = arith.constant 0 : i32
    return %arg1, %c0_i32 : i32, i32
  }
  func.func @transform_2(%arg0: i32, %arg1: i32) -> (i32, i32) {
    %c0_i32 = arith.constant 0 : i32
    %c0_i32_0 = arith.constant 0 : i32
    return %arg0, %c0_i32 : i32, i32
  }
  func.func @transform_3(%arg0: i32, %arg1: i32) -> (i32, i32) {
    %c0_i32 = arith.constant 0 : i32
    %c0_i32_0 = arith.constant 0 : i32
    %c0_i32_1 = arith.constant 0 : i32
    return %c0_i32, %c0_i32_0 : i32, i32
  }
  func.func @transform_4(%arg0: i32, %arg1: i32) -> (i32, i32) {
    %c0_i32 = arith.constant 0 : i32
    %c0_i32_0 = arith.constant 0 : i32
    %c0_i32_1 = arith.constant 0 : i32
    return %c0_i32, %c0_i32_0 : i32, i32
  }
  func.func @transform_5(%arg0: i32, %arg1: i32) -> (i32, i32) {
    %c0_i32 = arith.constant 0 : i32
    %c0_i32_0 = arith.constant 0 : i32
    %c0_i32_1 = arith.constant 0 : i32
    return %c0_i32, %c0_i32_0 : i32, i32
  }
  func.func @transform_6(%arg0: i32, %arg1: i32) -> (i32, i32) {
    %c0_i32 = arith.constant 0 : i32
    %c0_i32_0 = arith.constant 0 : i32
    return %arg0, %c0_i32 : i32, i32
  }
}

module attributes {stable_mosaic.version = 11 : i64} {
  func.func @_encode_kernel(%arg0: i32, %arg1: memref<128x128xf32, #tpu.memory_space<vmem>>, %arg2: memref<128x128xbf16, #tpu.memory_space<vmem>>, %arg3: memref<2x128xbf16, #tpu.memory_space<vmem>>, %arg4: memref<8x128xf32, #tpu.memory_space<vmem>>, %arg5: memref<128x128xbf16, #tpu.memory_space<vmem>>, %arg6: memref<128x128xbf16, #tpu.memory_space<vmem>>, %arg7: memref<128x128xbf16, #tpu.memory_space<vmem>>, %arg8: memref<128x128xbf16, #tpu.memory_space<vmem>>, %arg9: memref<128x128xbf16, #tpu.memory_space<vmem>>, %arg10: memref<1x2x128xf32, #tpu.memory_space<vmem>>) attributes {dimension_semantics = [#tpu.dimension_semantics<parallel>], iteration_bounds = array<i64: 1>, scalar_prefetch = 0 : i64, scratch_operands = 0 : i64, tpu.core_type = #tpu.core_type<tc>, window_params = [{transform_indices = @transform_0, window_bounds = array<i64: 128, 128>}, {transform_indices = @transform_1, window_bounds = array<i64: 128, 128>}, {transform_indices = @transform_2, window_bounds = array<i64: 2, 128>}, {pipeline_mode = #tpu.pipeline_mode<synchronous>, transform_indices = @transform_3, window_bounds = array<i64: 8, 128>}, {pipeline_mode = #tpu.pipeline_mode<synchronous>, transform_indices = @transform_4, window_bounds = array<i64: 128, 128>}, {pipeline_mode = #tpu.pipeline_mode<synchronous>, transform_indices = @transform_5, window_bounds = array<i64: 128, 128>}, {pipeline_mode = #tpu.pipeline_mode<synchronous>, transform_indices = @transform_6, window_bounds = array<i64: 128, 128>}, {pipeline_mode = #tpu.pipeline_mode<synchronous>, transform_indices = @transform_7, window_bounds = array<i64: 128, 128>}, {transform_indices = @transform_8, window_bounds = array<i64: 128, 128>}, {transform_indices = @transform_9, window_bounds = array<i64: 1, 2, 128>}]} {
    %c0 = arith.constant 0 : index
    %c0_0 = arith.constant 0 : index
    %0 = vector.load %arg4[%c0, %c0_0] : memref<8x128xf32, #tpu.memory_space<vmem>>, vector<1x128xf32>
    %c1 = arith.constant 1 : index
    %c0_1 = arith.constant 0 : index
    %1 = vector.load %arg4[%c1, %c0_1] : memref<8x128xf32, #tpu.memory_space<vmem>>, vector<1x128xf32>
    %c2 = arith.constant 2 : index
    %c0_2 = arith.constant 0 : index
    %2 = vector.load %arg4[%c2, %c0_2] : memref<8x128xf32, #tpu.memory_space<vmem>>, vector<1x128xf32>
    %c3 = arith.constant 3 : index
    %c0_3 = arith.constant 0 : index
    %3 = vector.load %arg4[%c3, %c0_3] : memref<8x128xf32, #tpu.memory_space<vmem>>, vector<1x128xf32>
    %c0_4 = arith.constant 0 : index
    %c0_5 = arith.constant 0 : index
    %4 = vector.load %arg1[%c0_4, %c0_5] : memref<128x128xf32, #tpu.memory_space<vmem>>, vector<128x128xf32>
    %5 = vector.broadcast %0 : vector<1x128xf32> to vector<128x128xf32>
    %6 = arith.mulf %4, %5 : vector<128x128xf32>
    %7 = vector.broadcast %1 : vector<1x128xf32> to vector<128x128xf32>
    %8 = arith.addf %6, %7 : vector<128x128xf32>
    %9 = math.tanh %8 : vector<128x128xf32>
    %10 = arith.truncf %9 : vector<128x128xf32> to vector<128x128xbf16>
    %c0_6 = arith.constant 0 : index
    %c0_7 = arith.constant 0 : index
    %11 = vector.load %arg9[%c0_6, %c0_7] : memref<128x128xbf16, #tpu.memory_space<vmem>>, vector<128x128xbf16>
    tpu.vector_store %arg9[%c0_6, %c0_7], %10 {strides = array<i32>} : memref<128x128xbf16, #tpu.memory_space<vmem>>, vector<128x128xbf16>,
    %c0_8 = arith.constant 0 : index
    %c0_9 = arith.constant 0 : index
    %12 = vector.load %arg2[%c0_8, %c0_9] : memref<128x128xbf16, #tpu.memory_space<vmem>>, vector<128x128xbf16>
    %c0_10 = arith.constant 0 : index
    %c0_11 = arith.constant 0 : index
    %13 = vector.load %arg5[%c0_10, %c0_11] : memref<128x128xbf16, #tpu.memory_space<vmem>>, vector<128x128xbf16>
    %cst = arith.constant dense<0.000000e+00> : vector<128x128xf32>
    %14 = tpu.matmul %10, %13, %cst {dimension_numbers = #tpu.dot_dimension_numbers<[1], [0], [0], [1], [0, 0, 1, 1], [], []>} : vector<128x128xbf16>, vector<128x128xbf16>, vector<128x128xf32> -> vector<128x128xf32>
    %c0_12 = arith.constant 0 : index
    %c0_13 = arith.constant 0 : index
    %15 = vector.load %arg6[%c0_12, %c0_13] : memref<128x128xbf16, #tpu.memory_space<vmem>>, vector<128x128xbf16>
    %cst_14 = arith.constant dense<0.000000e+00> : vector<128x128xf32>
    %16 = tpu.matmul %12, %15, %cst_14 {dimension_numbers = #tpu.dot_dimension_numbers<[1], [0], [0], [1], [0, 0, 1, 1], [], []>} : vector<128x128xbf16>, vector<128x128xbf16>, vector<128x128xf32> -> vector<128x128xf32>
    %17 = arith.addf %14, %16 : vector<128x128xf32>
    %18 = vector.broadcast %2 : vector<1x128xf32> to vector<128x128xf32>
    %19 = arith.addf %17, %18 : vector<128x128xf32>
    %c0_15 = arith.constant 0 : index
    %c0_16 = arith.constant 0 : index
    %20 = vector.load %arg7[%c0_15, %c0_16] : memref<128x128xbf16, #tpu.memory_space<vmem>>, vector<128x128xbf16>
    %cst_17 = arith.constant dense<0.000000e+00> : vector<128x128xf32>
    %21 = tpu.matmul %10, %20, %cst_17 {dimension_numbers = #tpu.dot_dimension_numbers<[1], [0], [0], [1], [0, 0, 1, 1], [], []>} : vector<128x128xbf16>, vector<128x128xbf16>, vector<128x128xf32> -> vector<128x128xf32>
    %c0_18 = arith.constant 0 : index
    %c0_19 = arith.constant 0 : index
    %22 = vector.load %arg8[%c0_18, %c0_19] : memref<128x128xbf16, #tpu.memory_space<vmem>>, vector<128x128xbf16>
    %cst_20 = arith.constant dense<0.000000e+00> : vector<128x128xf32>
    %23 = tpu.matmul %12, %22, %cst_20 {dimension_numbers = #tpu.dot_dimension_numbers<[1], [0], [0], [1], [0, 0, 1, 1], [], []>} : vector<128x128xbf16>, vector<128x128xbf16>, vector<128x128xf32> -> vector<128x128xf32>
    %24 = arith.addf %21, %23 : vector<128x128xf32>
    %25 = vector.broadcast %3 : vector<1x128xf32> to vector<128x128xf32>
    %26 = arith.addf %24, %25 : vector<128x128xf32>
    %27 = arith.negf %19 : vector<128x128xf32>
    %28 = math.exp %27 : vector<128x128xf32>
    %cst_21 = arith.constant 1.000000e+00 : f32
    %29 = vector.broadcast %cst_21 : f32 to vector<128x128xf32>
    %30 = arith.addf %29, %28 : vector<128x128xf32>
    %31 = arith.divf %29, %30 : vector<128x128xf32>
    %32 = math.tanh %26 : vector<128x128xf32>
    %33 = arith.mulf %31, %32 : vector<128x128xf32>
    %c0_22 = arith.constant 0 : index
    %c0_23 = arith.constant 0 : index
    %34 = vector.load %arg3[%c0_22, %c0_23] : memref<2x128xbf16, #tpu.memory_space<vmem>>, vector<2x128xbf16>
    %35 = arith.truncf %33 : vector<128x128xf32> to vector<128x128xbf16>
    %cst_24 = arith.constant dense<0.000000e+00> : vector<2x128xf32>
    %36 = tpu.matmul %34, %35, %cst_24 {dimension_numbers = #tpu.dot_dimension_numbers<[1], [0], [0], [1], [0, 0, 1, 1], [], []>} : vector<2x128xbf16>, vector<128x128xbf16>, vector<2x128xf32> -> vector<2x128xf32>
    %c0_25 = arith.constant 0 : index
    %c0_26 = arith.constant 0 : index
    %c0_27 = arith.constant 0 : index
    %37 = vector.load %arg10[%c0_25, %c0_26, %c0_27] : memref<1x2x128xf32, #tpu.memory_space<vmem>>, vector<1x2x128xf32>
    %38 = vector.shape_cast %37 : vector<1x2x128xf32> to vector<2x128xf32>
    %39 = vector.shape_cast %36 : vector<2x128xf32> to vector<1x2x128xf32>
    tpu.vector_store %arg10[%c0_25, %c0_26, %c0_27], %39 {strides = array<i32>} : memref<1x2x128xf32, #tpu.memory_space<vmem>>, vector<1x2x128xf32>,
    return
  }
  func.func @transform_0(%arg0: i32) -> (i32, i32) {
    %c0_i32 = arith.constant 0 : i32
    %c0_i32_0 = arith.constant 0 : i32
    return %arg0, %c0_i32 : i32, i32
  }
  func.func @transform_1(%arg0: i32) -> (i32, i32) {
    %c0_i32 = arith.constant 0 : i32
    %c0_i32_0 = arith.constant 0 : i32
    return %arg0, %c0_i32 : i32, i32
  }
  func.func @transform_2(%arg0: i32) -> (i32, i32) {
    %c0_i32 = arith.constant 0 : i32
    %c0_i32_0 = arith.constant 0 : i32
    return %c0_i32, %arg0 : i32, i32
  }
  func.func @transform_3(%arg0: i32) -> (i32, i32) {
    %c0_i32 = arith.constant 0 : i32
    %c0_i32_0 = arith.constant 0 : i32
    %c0_i32_1 = arith.constant 0 : i32
    return %c0_i32, %c0_i32_0 : i32, i32
  }
  func.func @transform_4(%arg0: i32) -> (i32, i32) {
    %c0_i32 = arith.constant 0 : i32
    %c0_i32_0 = arith.constant 0 : i32
    %c0_i32_1 = arith.constant 0 : i32
    return %c0_i32, %c0_i32_0 : i32, i32
  }
  func.func @transform_5(%arg0: i32) -> (i32, i32) {
    %c0_i32 = arith.constant 0 : i32
    %c0_i32_0 = arith.constant 0 : i32
    %c0_i32_1 = arith.constant 0 : i32
    return %c0_i32, %c0_i32_0 : i32, i32
  }
  func.func @transform_6(%arg0: i32) -> (i32, i32) {
    %c0_i32 = arith.constant 0 : i32
    %c0_i32_0 = arith.constant 0 : i32
    %c0_i32_1 = arith.constant 0 : i32
    return %c0_i32, %c0_i32_0 : i32, i32
  }
  func.func @transform_7(%arg0: i32) -> (i32, i32) {
    %c0_i32 = arith.constant 0 : i32
    %c0_i32_0 = arith.constant 0 : i32
    %c0_i32_1 = arith.constant 0 : i32
    return %c0_i32, %c0_i32_0 : i32, i32
  }
  func.func @transform_8(%arg0: i32) -> (i32, i32) {
    %c0_i32 = arith.constant 0 : i32
    %c0_i32_0 = arith.constant 0 : i32
    return %arg0, %c0_i32 : i32, i32
  }
  func.func @transform_9(%arg0: i32) -> (i32, i32, i32) {
    %c0_i32 = arith.constant 0 : i32
    %c0_i32_0 = arith.constant 0 : i32
    %c0_i32_1 = arith.constant 0 : i32
    return %arg0, %c0_i32, %c0_i32_0 : i32, i32, i32
  }
}

module attributes {stable_mosaic.version = 11 : i64} {
  func.func @_phi_kernel(%arg0: i32, %arg1: memref<128x128xbf16, #tpu.memory_space<vmem>>, %arg2: memref<128x128xbf16, #tpu.memory_space<vmem>>, %arg3: memref<2x128xbf16, #tpu.memory_space<vmem>>, %arg4: memref<2x128xbf16, #tpu.memory_space<vmem>>, %arg5: memref<128x128xbf16, #tpu.memory_space<vmem>>, %arg6: memref<128x128xbf16, #tpu.memory_space<vmem>>, %arg7: memref<128x128xbf16, #tpu.memory_space<vmem>>, %arg8: memref<1x128xf32, #tpu.memory_space<vmem>>, %arg9: memref<128x128xf32, #tpu.memory_space<vmem>>) attributes {dimension_semantics = [#tpu.dimension_semantics<parallel>], iteration_bounds = array<i64: 1>, scalar_prefetch = 0 : i64, scratch_operands = 0 : i64, tpu.core_type = #tpu.core_type<tc>, window_params = [{transform_indices = @transform_0, window_bounds = array<i64: 128, 128>}, {transform_indices = @transform_1, window_bounds = array<i64: 128, 128>}, {transform_indices = @transform_2, window_bounds = array<i64: 2, 128>}, {pipeline_mode = #tpu.pipeline_mode<synchronous>, transform_indices = @transform_3, window_bounds = array<i64: 2, 128>}, {pipeline_mode = #tpu.pipeline_mode<synchronous>, transform_indices = @transform_4, window_bounds = array<i64: 128, 128>}, {pipeline_mode = #tpu.pipeline_mode<synchronous>, transform_indices = @transform_5, window_bounds = array<i64: 128, 128>}, {pipeline_mode = #tpu.pipeline_mode<synchronous>, transform_indices = @transform_6, window_bounds = array<i64: 128, 128>}, {pipeline_mode = #tpu.pipeline_mode<synchronous>, transform_indices = @transform_7, window_bounds = array<i64: 1, 128>}, {transform_indices = @transform_8, window_bounds = array<i64: 128, 128>}]} {
    %c0 = arith.constant 0 : index
    %c0_0 = arith.constant 0 : index
    %0 = vector.load %arg3[%c0, %c0_0] : memref<2x128xbf16, #tpu.memory_space<vmem>>, vector<2x128xbf16>
    %c0_1 = arith.constant 0 : index
    %c0_2 = arith.constant 0 : index
    %1 = vector.load %arg4[%c0_1, %c0_2] : memref<2x128xbf16, #tpu.memory_space<vmem>>, vector<2x128xbf16>
    %cst = arith.constant dense<0.000000e+00> : vector<128x128xf32>
    %2 = tpu.matmul %0, %1, %cst {dimension_numbers = #tpu.dot_dimension_numbers<[0], [0], [1], [1], [0, 1, 1, 1], [], []>} : vector<2x128xbf16>, vector<2x128xbf16>, vector<128x128xf32> -> vector<128x128xf32>
    %c0_3 = arith.constant 0 : index
    %c0_4 = arith.constant 0 : index
    %3 = vector.load %arg1[%c0_3, %c0_4] : memref<128x128xbf16, #tpu.memory_space<vmem>>, vector<128x128xbf16>
    %c0_5 = arith.constant 0 : index
    %c0_6 = arith.constant 0 : index
    %4 = vector.load %arg5[%c0_5, %c0_6] : memref<128x128xbf16, #tpu.memory_space<vmem>>, vector<128x128xbf16>
    %cst_7 = arith.constant dense<0.000000e+00> : vector<128x128xf32>
    %5 = tpu.matmul %3, %4, %cst_7 {dimension_numbers = #tpu.dot_dimension_numbers<[1], [0], [0], [1], [0, 0, 1, 1], [], []>} : vector<128x128xbf16>, vector<128x128xbf16>, vector<128x128xf32> -> vector<128x128xf32>
    %c0_8 = arith.constant 0 : index
    %c0_9 = arith.constant 0 : index
    %6 = vector.load %arg2[%c0_8, %c0_9] : memref<128x128xbf16, #tpu.memory_space<vmem>>, vector<128x128xbf16>
    %c0_10 = arith.constant 0 : index
    %c0_11 = arith.constant 0 : index
    %7 = vector.load %arg6[%c0_10, %c0_11] : memref<128x128xbf16, #tpu.memory_space<vmem>>, vector<128x128xbf16>
    %cst_12 = arith.constant dense<0.000000e+00> : vector<128x128xf32>
    %8 = tpu.matmul %6, %7, %cst_12 {dimension_numbers = #tpu.dot_dimension_numbers<[1], [0], [0], [1], [0, 0, 1, 1], [], []>} : vector<128x128xbf16>, vector<128x128xbf16>, vector<128x128xf32> -> vector<128x128xf32>
    %9 = arith.addf %5, %8 : vector<128x128xf32>
    %10 = arith.truncf %2 : vector<128x128xf32> to vector<128x128xbf16>
    %c0_13 = arith.constant 0 : index
    %c0_14 = arith.constant 0 : index
    %11 = vector.load %arg7[%c0_13, %c0_14] : memref<128x128xbf16, #tpu.memory_space<vmem>>, vector<128x128xbf16>
    %cst_15 = arith.constant dense<0.000000e+00> : vector<128x128xf32>
    %12 = tpu.matmul %10, %11, %cst_15 {dimension_numbers = #tpu.dot_dimension_numbers<[1], [0], [0], [1], [0, 0, 1, 1], [], []>} : vector<128x128xbf16>, vector<128x128xbf16>, vector<128x128xf32> -> vector<128x128xf32>
    %13 = arith.addf %9, %12 : vector<128x128xf32>
    %c0_16 = arith.constant 0 : index
    %c0_17 = arith.constant 0 : index
    %14 = vector.load %arg8[%c0_16, %c0_17] : memref<1x128xf32, #tpu.memory_space<vmem>>, vector<1x128xf32>
    %15 = vector.broadcast %14 : vector<1x128xf32> to vector<128x128xf32>
    %16 = arith.addf %13, %15 : vector<128x128xf32>
    %17 = tpu.iota {dimensions = array<i32: 1>} : vector<128x128xi32>
    %c8_i32 = arith.constant 8 : i32
    %18 = vector.broadcast %c8_i32 : i32 to vector<128x128xi32>
    %19 = arith.cmpi slt, %17, %18 : vector<128x128xi32>
    %cst_18 = arith.constant -1.000000e+30 : f32
    %20 = vector.broadcast %cst_18 : f32 to vector<128x128xf32>
    %21 = arith.select %19, %16, %20 : vector<128x128xi1>, vector<128x128xf32>
    %cst_19 = arith.constant dense<0xFF800000> : vector<128xf32>
    %22 = vector.multi_reduction <maximumf>, %21, %cst_19 [1] : vector<128x128xf32> to vector<128xf32>
    %23 = vector.shape_cast %22 : vector<128xf32> to vector<128x1xf32>
    %24 = vector.broadcast %23 : vector<128x1xf32> to vector<128x128xf32>
    %25 = arith.subf %21, %24 : vector<128x128xf32>
    %26 = math.exp %25 : vector<128x128xf32>
    %cst_20 = arith.constant dense<0.000000e+00> : vector<128xf32>
    %27 = vector.multi_reduction <add>, %26, %cst_20 [1] : vector<128x128xf32> to vector<128xf32>
    %28 = vector.shape_cast %27 : vector<128xf32> to vector<128x1xf32>
    %29 = tpu.reciprocal %28 {approx = true} : vector<128x1xf32> -> vector<128x1xf32>
    %30 = vector.broadcast %29 : vector<128x1xf32> to vector<128x128xf32>
    %31 = arith.mulf %26, %30 : vector<128x128xf32>
    %c0_21 = arith.constant 0 : index
    %c0_22 = arith.constant 0 : index
    %32 = vector.load %arg9[%c0_21, %c0_22] : memref<128x128xf32, #tpu.memory_space<vmem>>, vector<128x128xf32>
    tpu.vector_store %arg9[%c0_21, %c0_22], %31 {strides = array<i32>} : memref<128x128xf32, #tpu.memory_space<vmem>>, vector<128x128xf32>,
    return
  }
  func.func @transform_0(%arg0: i32) -> (i32, i32) {
    %c0_i32 = arith.constant 0 : i32
    %c0_i32_0 = arith.constant 0 : i32
    return %arg0, %c0_i32 : i32, i32
  }
  func.func @transform_1(%arg0: i32) -> (i32, i32) {
    %c0_i32 = arith.constant 0 : i32
    %c0_i32_0 = arith.constant 0 : i32
    return %arg0, %c0_i32 : i32, i32
  }
  func.func @transform_2(%arg0: i32) -> (i32, i32) {
    %c0_i32 = arith.constant 0 : i32
    %c0_i32_0 = arith.constant 0 : i32
    return %c0_i32, %arg0 : i32, i32
  }
  func.func @transform_3(%arg0: i32) -> (i32, i32) {
    %c0_i32 = arith.constant 0 : i32
    %c0_i32_0 = arith.constant 0 : i32
    %c0_i32_1 = arith.constant 0 : i32
    return %c0_i32, %c0_i32_0 : i32, i32
  }
  func.func @transform_4(%arg0: i32) -> (i32, i32) {
    %c0_i32 = arith.constant 0 : i32
    %c0_i32_0 = arith.constant 0 : i32
    %c0_i32_1 = arith.constant 0 : i32
    return %c0_i32, %c0_i32_0 : i32, i32
  }
  func.func @transform_5(%arg0: i32) -> (i32, i32) {
    %c0_i32 = arith.constant 0 : i32
    %c0_i32_0 = arith.constant 0 : i32
    %c0_i32_1 = arith.constant 0 : i32
    return %c0_i32, %c0_i32_0 : i32, i32
  }
  func.func @transform_6(%arg0: i32) -> (i32, i32) {
    %c0_i32 = arith.constant 0 : i32
    %c0_i32_0 = arith.constant 0 : i32
    %c0_i32_1 = arith.constant 0 : i32
    return %c0_i32, %c0_i32_0 : i32, i32
  }
  func.func @transform_7(%arg0: i32) -> (i32, i32) {
    %c0_i32 = arith.constant 0 : i32
    %c0_i32_0 = arith.constant 0 : i32
    %c0_i32_1 = arith.constant 0 : i32
    return %c0_i32, %c0_i32_0 : i32, i32
  }
  func.func @transform_8(%arg0: i32) -> (i32, i32) {
    %c0_i32 = arith.constant 0 : i32
    %c0_i32_0 = arith.constant 0 : i32
    return %arg0, %c0_i32 : i32, i32
  }
}

module attributes {stable_mosaic.version = 11 : i64} {
  func.func @_heads_kernel(%arg0: memref<2x128xf32, #tpu.memory_space<vmem>>, %arg1: memref<128x128xbf16, #tpu.memory_space<vmem>>, %arg2: memref<128x128xbf16, #tpu.memory_space<vmem>>, %arg3: memref<8x128xf32, #tpu.memory_space<vmem>>, %arg4: memref<2x128xf32, #tpu.memory_space<vmem>>, %arg5: memref<2x128xf32, #tpu.memory_space<vmem>>) attributes {dimension_semantics = [], scalar_prefetch = 0 : i64, scratch_operands = 0 : i64, tpu.core_type = #tpu.core_type<tc>} {
    %c0 = arith.constant 0 : index
    %c0_0 = arith.constant 0 : index
    %0 = vector.load %arg0[%c0, %c0_0] : memref<2x128xf32, #tpu.memory_space<vmem>>, vector<2x128xf32>
    %1 = arith.truncf %0 : vector<2x128xf32> to vector<2x128xbf16>
    %c0_1 = arith.constant 0 : index
    %c0_2 = arith.constant 0 : index
    %2 = vector.load %arg3[%c0_1, %c0_2] : memref<8x128xf32, #tpu.memory_space<vmem>>, vector<1x128xf32>
    %c1 = arith.constant 1 : index
    %c0_3 = arith.constant 0 : index
    %3 = vector.load %arg3[%c1, %c0_3] : memref<8x128xf32, #tpu.memory_space<vmem>>, vector<1x128xf32>
    %c2 = arith.constant 2 : index
    %c0_4 = arith.constant 0 : index
    %4 = vector.load %arg3[%c2, %c0_4] : memref<8x128xf32, #tpu.memory_space<vmem>>, vector<1x128xf32>
    %c0_5 = arith.constant 0 : index
    %c0_6 = arith.constant 0 : index
    %5 = vector.load %arg1[%c0_5, %c0_6] : memref<128x128xbf16, #tpu.memory_space<vmem>>, vector<128x128xbf16>
    %cst = arith.constant dense<0.000000e+00> : vector<2x128xf32>
    %6 = tpu.matmul %1, %5, %cst {dimension_numbers = #tpu.dot_dimension_numbers<[1], [0], [0], [1], [0, 0, 1, 1], [], []>} : vector<2x128xbf16>, vector<128x128xbf16>, vector<2x128xf32> -> vector<2x128xf32>
    %7 = vector.broadcast %2 : vector<1x128xf32> to vector<2x128xf32>
    %8 = arith.addf %6, %7 : vector<2x128xf32>
    %cst_7 = arith.constant dense<0.000000e+00> : vector<128xf32>
    %9 = vector.multi_reduction <add>, %8, %cst_7 [0] : vector<2x128xf32> to vector<128xf32>
    %10 = vector.shape_cast %9 : vector<128xf32> to vector<1x128xf32>
    %cst_8 = arith.constant 2.000000e+00 : f32
    %11 = vector.broadcast %cst_8 : f32 to vector<1x128xf32>
    %12 = arith.divf %10, %11 : vector<1x128xf32>
    %13 = vector.broadcast %12 : vector<1x128xf32> to vector<2x128xf32>
    %14 = arith.subf %8, %13 : vector<2x128xf32>
    %15 = vector.broadcast %12 : vector<1x128xf32> to vector<2x128xf32>
    %16 = arith.subf %8, %15 : vector<2x128xf32>
    %17 = arith.mulf %14, %16 : vector<2x128xf32>
    %cst_9 = arith.constant dense<0.000000e+00> : vector<128xf32>
    %18 = vector.multi_reduction <add>, %17, %cst_9 [0] : vector<2x128xf32> to vector<128xf32>
    %19 = vector.shape_cast %18 : vector<128xf32> to vector<1x128xf32>
    %cst_10 = arith.constant 2.000000e+00 : f32
    %20 = vector.broadcast %cst_10 : f32 to vector<1x128xf32>
    %21 = arith.divf %19, %20 : vector<1x128xf32>
    %22 = vector.broadcast %12 : vector<1x128xf32> to vector<2x128xf32>
    %23 = arith.subf %8, %22 : vector<2x128xf32>
    %cst_11 = arith.constant 9.99999974E-6 : f32
    %24 = vector.broadcast %cst_11 : f32 to vector<1x128xf32>
    %25 = arith.addf %21, %24 : vector<1x128xf32>
    %26 = math.rsqrt %25 : vector<1x128xf32>
    %27 = vector.broadcast %26 : vector<1x128xf32> to vector<2x128xf32>
    %28 = arith.mulf %23, %27 : vector<2x128xf32>
    %29 = vector.broadcast %3 : vector<1x128xf32> to vector<2x128xf32>
    %30 = arith.addf %28, %29 : vector<2x128xf32>
    %c0_12 = arith.constant 0 : index
    %c0_13 = arith.constant 0 : index
    %31 = vector.load %arg4[%c0_12, %c0_13] : memref<2x128xf32, #tpu.memory_space<vmem>>, vector<2x128xf32>
    tpu.vector_store %arg4[%c0_12, %c0_13], %30 {strides = array<i32>} : memref<2x128xf32, #tpu.memory_space<vmem>>, vector<2x128xf32>,
    %c0_14 = arith.constant 0 : index
    %c0_15 = arith.constant 0 : index
    %32 = vector.load %arg2[%c0_14, %c0_15] : memref<128x128xbf16, #tpu.memory_space<vmem>>, vector<128x128xbf16>
    %cst_16 = arith.constant dense<0.000000e+00> : vector<2x128xf32>
    %33 = tpu.matmul %1, %32, %cst_16 {dimension_numbers = #tpu.dot_dimension_numbers<[1], [0], [0], [1], [0, 0, 1, 1], [], []>} : vector<2x128xbf16>, vector<128x128xbf16>, vector<2x128xf32> -> vector<2x128xf32>
    %34 = vector.broadcast %4 : vector<1x128xf32> to vector<2x128xf32>
    %35 = arith.addf %33, %34 : vector<2x128xf32>
    %c0_17 = arith.constant 0 : index
    %c0_18 = arith.constant 0 : index
    %36 = vector.load %arg5[%c0_17, %c0_18] : memref<2x128xf32, #tpu.memory_space<vmem>>, vector<2x128xf32>
    tpu.vector_store %arg5[%c0_17, %c0_18], %35 {strides = array<i32>} : memref<2x128xf32, #tpu.memory_space<vmem>>, vector<2x128xf32>,
    return
  }
}

</mosaic_0001>

<llo_original>
// kernel: gnn_dir2_encoder_forward.4
$region0: #{gnn_dir2_encoder_forward.4}
  #allocation0 [shape = 'u32[]', space=smem, size = 0x4, offset = 0x4, fixed_abs, tag = 'smem constant byte address 0x4 - core index']
  #allocation1 [shape = 'u32[144,128]{1,0:T(1,128)}', space=vmem, size = 0x12000, scoped, tag = 'internal scratch']
  #allocation2 [shape = 'f32[128,128]{1,0:T(8,128)}', space=vmem, size = 0x10000, scoped, tag = 'scratch operand']
  %s0 = inlined_call_operand.vmem [shape: bf16[128,128], index: 0, kind: input, shape index: {}]
  %s1 = inlined_call_operand.vmem [shape: bf16[128,128], index: 1, kind: input, shape index: {}, may-alias: {1,2}]
  %s2 = inlined_call_operand.vmem [shape: bf16[128,128], index: 2, kind: input, shape index: {}, may-alias: {1,2}]
  %s3 = inlined_call_operand.vmem [shape: bf16[128,128], index: 3, kind: input, shape index: {}]
  %s4 = inlined_call_operand.vmem [shape: bf16[128,128], index: 4, kind: input, shape index: {}]
  %s5 = inlined_call_operand.vmem [shape: f32[1,128], index: 5, kind: input, shape index: {}]
  %s6 = inlined_call_operand.vmem [shape: f32[128,128], index: 6, kind: output, shape index: {}]
  %s7 = sld [smem:[#allocation0]]
  $region42: #{gnn_dir2_encoder_forward.4} parent=0
    _
  %s9 = ssub.s32 1, %s7
  %s10 = scalar_select 0, %s9, %s7
  // Predicated region
  $region2: #{gnn_dir2_encoder_forward.4} parent=0 // pred_check
    _
  $region3: #{gnn_dir2_encoder_forward.4} parent=0 // pred_check_branch
    %12 = sbr.rel (0) target = $region5
  $region4: #{gnn_dir2_encoder_forward.4} parent=0 // pred_region
    _
  $region5: #{gnn_dir2_encoder_forward.4} parent=0 // pred_fallthru
    _
  // Predicated region
  $region6: #{gnn_dir2_encoder_forward.4} parent=0 // pred_check
    _
  $region7: #{gnn_dir2_encoder_forward.4} parent=0 // pred_check_branch
    %14 = sbr.rel (0) target = $region9
  $region8: #{gnn_dir2_encoder_forward.4} parent=0 // pred_region
    _
  $region9: #{gnn_dir2_encoder_forward.4} parent=0 // pred_fallthru
    _
  // Predicated region
  $region10: #{gnn_dir2_encoder_forward.4} parent=0 // pred_check
    _
  $region11: #{gnn_dir2_encoder_forward.4} parent=0 // pred_check_branch
    %16 = sbr.rel (0) target = $region13
  $region12: #{gnn_dir2_encoder_forward.4} parent=0 // pred_region
    _
  $region13: #{gnn_dir2_encoder_forward.4} parent=0 // pred_fallthru
    _
  // Predicated region
  $region14: #{gnn_dir2_encoder_forward.4} parent=0 // pred_check
    _
  $region15: #{gnn_dir2_encoder_forward.4} parent=0 // pred_check_branch
    %18 = sbr.rel (0) target = $region17
  $region16: #{gnn_dir2_encoder_forward.4} parent=0 // pred_region
    _
  $region17: #{gnn_dir2_encoder_forward.4} parent=0 // pred_fallthru
    _
  // Predicated region
  $region18: #{gnn_dir2_encoder_forward.4} parent=0 // pred_check
    _
  $region19: #{gnn_dir2_encoder_forward.4} parent=0 // pred_check_branch
    %20 = sbr.rel (0) target = $region21
  $region20: #{gnn_dir2_encoder_forward.4} parent=0 // pred_region
    _
  $region21: #{gnn_dir2_encoder_forward.4} parent=0 // pred_fallthru
    _
  // Predicated region
  $region22: #{gnn_dir2_encoder_forward.4} parent=0 // pred_check
    _
  $region23: #{gnn_dir2_encoder_forward.4} parent=0 // pred_check_branch
    %22 = sbr.rel (0) target = $region25
  $region24: #{gnn_dir2_encoder_forward.4} parent=0 // pred_region
    _
  $region25: #{gnn_dir2_encoder_forward.4} parent=0 // pred_fallthru
    _
  %p24 = scmp.eq.s32.totalorder 0, 0
  // Predicated region
  $region26: #{gnn_dir2_encoder_forward.4} parent=0 // pred_check
    %p25 = pneg %p24
  $region27: #{gnn_dir2_encoder_forward.4} parent=0 // pred_check_branch
    %27 = sbr.rel (%p25) target = $region29
  $region28: #{gnn_dir2_encoder_forward.4} parent=0 // pred_region
    %28 = vst [vmem:[#allocation2] sm:$0xff] 0.0
    %29 = vst [vmem:[#allocation2 + $0x8] sm:$0xff] 0.0
    %30 = vst [vmem:[#allocation2 + $0x10] sm:$0xff] 0.0
    %31 = vst [vmem:[#allocation2 + $0x18] sm:$0xff] 0.0
    %32 = vst [vmem:[#allocation2 + $0x20] sm:$0xff] 0.0
    %33 = vst [vmem:[#allocation2 + $0x28] sm:$0xff] 0.0
    %34 = vst [vmem:[#allocation2 + $0x30] sm:$0xff] 0.0
    %35 = vst [vmem:[#allocation2 + $0x38] sm:$0xff] 0.0
    %36 = vst [vmem:[#allocation2 + $0x40] sm:$0xff] 0.0
    %37 = vst [vmem:[#allocation2 + $0x48] sm:$0xff] 0.0
    %38 = vst [vmem:[#allocation2 + $0x50] sm:$0xff] 0.0
    %39 = vst [vmem:[#allocation2 + $0x58] sm:$0xff] 0.0
    %40 = vst [vmem:[#allocation2 + $0x60] sm:$0xff] 0.0
    %41 = vst [vmem:[#allocation2 + $0x68] sm:$0xff] 0.0
    %42 = vst [vmem:[#allocation2 + $0x70] sm:$0xff] 0.0
    %43 = vst [vmem:[#allocation2 + $0x78] sm:$0xff] 0.0
  $region29: #{gnn_dir2_encoder_forward.4} parent=0 // pred_fallthru
    _
  %v44 = vld [vmem:[#allocation2] sm:$0xff]
  %v45 = vld [vmem:[#allocation2 + $0x8] sm:$0xff]
  %v46 = vld [vmem:[#allocation2 + $0x10] sm:$0xff]
  %v47 = vld [vmem:[#allocation2 + $0x18] sm:$0xff]
  %v48 = vld [vmem:[#allocation2 + $0x20] sm:$0xff]
  %v49 = vld [vmem:[#allocation2 + $0x28] sm:$0xff]
  %v50 = vld [vmem:[#allocation2 + $0x30] sm:$0xff]
  %v51 = vld [vmem:[#allocation2 + $0x38] sm:$0xff]
  %v52 = vld [vmem:[#allocation2 + $0x40] sm:$0xff]
  %v53 = vld [vmem:[#allocation2 + $0x48] sm:$0xff]
  %v54 = vld [vmem:[#allocation2 + $0x50] sm:$0xff]
  %v55 = vld [vmem:[#allocation2 + $0x58] sm:$0xff]
  %v56 = vld [vmem:[#allocation2 + $0x60] sm:$0xff]
  %v57 = vld [vmem:[#allocation2 + $0x68] sm:$0xff]
  %v58 = vld [vmem:[#allocation2 + $0x70] sm:$0xff]
  %v59 = vld [vmem:[#allocation2 + $0x78] sm:$0xff]
  %v60 = vld [vmem:[%s0] sm:$0xf]
  %v61 = vld [vmem:[%s0 + $0x4] sm:$0xf]
  %v62 = vld [vmem:[%s0 + $0x8] sm:$0xf]
  %v63 = vld [vmem:[%s0 + $0xc] sm:$0xf]
  %v64 = vld [vmem:[%s0 + $0x10] sm:$0xf]
  %v65 = vld [vmem:[%s0 + $0x14] sm:$0xf]
  %v66 = vld [vmem:[%s0 + $0x18] sm:$0xf]
  %v67 = vld [vmem:[%s0 + $0x1c] sm:$0xf]
  %v68 = vld [vmem:[%s0 + $0x20] sm:$0xf]
  %v69 = vld [vmem:[%s0 + $0x24] sm:$0xf]
  %v70 = vld [vmem:[%s0 + $0x28] sm:$0xf]
  %v71 = vld [vmem:[%s0 + $0x2c] sm:$0xf]
  %v72 = vld [vmem:[%s0 + $0x30] sm:$0xf]
  %v73 = vld [vmem:[%s0 + $0x34] sm:$0xf]
  %v74 = vld [vmem:[%s0 + $0x38] sm:$0xf]
  %v75 = vld [vmem:[%s0 + $0x3c] sm:$0xf]
  %v76 = vld [vmem:[%s1] sm:$0xf]
  %v77 = vld [vmem:[%s1 + $0x4] sm:$0xf]
  %v78 = vld [vmem:[%s1 + $0x8] sm:$0xf]
  %v79 = vld [vmem:[%s1 + $0xc] sm:$0xf]
  %v80 = vld [vmem:[%s1 + $0x10] sm:$0xf]
  %v81 = vld [vmem:[%s1 + $0x14] sm:$0xf]
  %v82 = vld [vmem:[%s1 + $0x18] sm:$0xf]
  %v83 = vld [vmem:[%s1 + $0x1c] sm:$0xf]
  %v84 = vld [vmem:[%s1 + $0x20] sm:$0xf]
  %v85 = vld [vmem:[%s1 + $0x24] sm:$0xf]
  %v86 = vld [vmem:[%s1 + $0x28] sm:$0xf]
  %v87 = vld [vmem:[%s1 + $0x2c] sm:$0xf]
  %v88 = vld [vmem:[%s1 + $0x30] sm:$0xf]
  %v89 = vld [vmem:[%s1 + $0x34] sm:$0xf]
  %v90 = vld [vmem:[%s1 + $0x38] sm:$0xf]
  %v91 = vld [vmem:[%s1 + $0x3c] sm:$0xf]
  %v108 = vunpack.c.l.b16 %v60
  %v109 = vunpack.c.l.b16 %v61
  %v110 = vunpack.c.l.b16 %v62
  %v111 = vunpack.c.l.b16 %v63
  %v112 = vunpack.c.l.b16 %v64
  %v113 = vunpack.c.l.b16 %v65
  %v114 = vunpack.c.l.b16 %v66
  %v115 = vunpack.c.l.b16 %v67
  %v116 = vunpack.c.l.b16 %v68
  %v117 = vunpack.c.l.b16 %v69
  %v118 = vunpack.c.l.b16 %v70
  %v119 = vunpack.c.l.b16 %v71
  %v120 = vunpack.c.l.b16 %v72
  %v121 = vunpack.c.l.b16 %v73
  %v122 = vunpack.c.l.b16 %v74
  %v123 = vunpack.c.l.b16 %v75
  %v124 = vpack.c.b16 %v109, %v108
  %v125 = vpack.c.b16 %v111, %v110
  %v126 = vpack.c.b16 %v113, %v112
  %v127 = vpack.c.b16 %v115, %v114
  %v128 = vpack.c.b16 %v117, %v116
  %v129 = vpack.c.b16 %v119, %v118
  %v130 = vpack.c.b16 %v121, %v120
  %v131 = vpack.c.b16 %v123, %v122
  %v156 = vunpack.c.l.b16 %v76
  %v157 = vunpack.c.l.b16 %v77
  %v158 = vunpack.c.l.b16 %v78
  %v159 = vunpack.c.l.b16 %v79
  %v160 = vunpack.c.l.b16 %v80
  %v161 = vunpack.c.l.b16 %v81
  %v162 = vunpack.c.l.b16 %v82
  %v163 = vunpack.c.l.b16 %v83
  %v164 = vunpack.c.l.b16 %v84
  %v165 = vunpack.c.l.b16 %v85
  %v166 = vunpack.c.l.b16 %v86
  %v167 = vunpack.c.l.b16 %v87
  %v168 = vunpack.c.l.b16 %v88
  %v169 = vunpack.c.l.b16 %v89
  %v170 = vunpack.c.l.b16 %v90
  %v171 = vunpack.c.l.b16 %v91
  %v172 = vpack.c.b16 %v157, %v156
  %v173 = vpack.c.b16 %v159, %v158
  %v174 = vpack.c.b16 %v161, %v160
  %v175 = vpack.c.b16 %v163, %v162
  %v176 = vpack.c.b16 %v165, %v164
  %v177 = vpack.c.b16 %v167, %v166
  %v178 = vpack.c.b16 %v169, %v168
  %v179 = vpack.c.b16 %v171, %v170
  %188 = vmatprep.subr.bf16.mxu0 0
  %189 = vmatpush1.bf16.msra.mxu0 %v172
  %190 = vmatprep.subr.bf16.mxu0 0
  %191 = vmatpush1.bf16.msra.mxu0 %v173
  %192 = vmatprep.subr.bf16.mxu0 0
  %193 = vmatpush1.bf16.msra.mxu0 %v174
  %194 = vmatprep.subr.bf16.mxu0 0
  %195 = vmatpush1.bf16.msra.mxu0 %v175
  %196 = vmatprep.subr.bf16.mxu0 0
  %197 = vmatpush1.bf16.msra.mxu0 %v176
  %198 = vmatprep.subr.bf16.mxu0 0
  %199 = vmatpush1.bf16.msra.mxu0 %v177
  %200 = vmatprep.subr.bf16.mxu0 0
  %201 = vmatpush1.bf16.msra.mxu0 %v178
  %202 = vmatprep.subr.bf16.mxu0 0
  %203 = vmatpush1.bf16.msra.mxu0 %v179
  %204 = vmatprep.subr.bf16.mxu0 0
  %205 = vmatpush1.bf16.msra.mxu0 0
  %206 = vmatprep.subr.bf16.mxu0 0
  %207 = vmatpush1.bf16.msra.mxu0 0
  %208 = vmatprep.subr.bf16.mxu0 0
  %209 = vmatpush1.bf16.msra.mxu0 0
  %210 = vmatprep.subr.bf16.mxu0 0
  %211 = vmatpush1.bf16.msra.mxu0 0
  %212 = vmatprep.subr.bf16.mxu0 0
  %213 = vmatpush1.bf16.msra.mxu0 0
  %214 = vmatprep.subr.bf16.mxu0 0
  %215 = vmatpush1.bf16.msra.mxu0 0
  %216 = vmatprep.subr.bf16.mxu0 0
  %217 = vmatpush1.bf16.msra.mxu0 0
  %218 = vmatprep.subr.bf16.mxu0 0
  %219 = vmatpush1.bf16.msra.mxu0 0
  %220 = vmatprep.mubr.bf16.mxu0 0
  %221 = vmatmul.mubr.bf16.gmra.mrb[0].mxu0 %v124
  %v222 = vpop.f32.mrb[0].mxu0
  %v223 = vadd.f32 0.0, %v222
  %v224 = vpop.f32.mrb[0].mxu0
  %v225 = vpop.f32.mrb[0].mxu0
  %v226 = vadd.f32 0.0, %v225
  %v227 = vpop.f32.mrb[0].mxu0
  %228 = vmatprep.mubr.bf16.mxu0 0
  %229 = vmatmul.mubr.bf16.gmra.mrb[0].mxu0 %v125
  %v230 = vpop.f32.mrb[0].mxu0
  %v231 = vadd.f32 0.0, %v230
  %v232 = vpop.f32.mrb[0].mxu0
  %v233 = vpop.f32.mrb[0].mxu0
  %v234 = vadd.f32 0.0, %v233
  %v235 = vpop.f32.mrb[0].mxu0
  %236 = vmatprep.mubr.bf16.mxu0 0
  %237 = vmatmul.mubr.bf16.gmra.mrb[0].mxu0 %v126
  %v238 = vpop.f32.mrb[0].mxu0
  %v239 = vadd.f32 0.0, %v238
  %v240 = vpop.f32.mrb[0].mxu0
  %v241 = vpop.f32.mrb[0].mxu0
  %v242 = vadd.f32 0.0, %v241
  %v243 = vpop.f32.mrb[0].mxu0
  %244 = vmatprep.mubr.bf16.mxu0 0
  %245 = vmatmul.mubr.bf16.gmra.mrb[0].mxu0 %v127
  %v246 = vpop.f32.mrb[0].mxu0
  %v247 = vadd.f32 0.0, %v246
  %v248 = vpop.f32.mrb[0].mxu0
  %v249 = vpop.f32.mrb[0].mxu0
  %v250 = vadd.f32 0.0, %v249
  %v251 = vpop.f32.mrb[0].mxu0
  %252 = vmatprep.mubr.bf16.mxu0 0
  %253 = vmatmul.mubr.bf16.gmra.mrb[0].mxu0 %v128
  %v254 = vpop.f32.mrb[0].mxu0
  %v255 = vadd.f32 0.0, %v254
  %v256 = vpop.f32.mrb[0].mxu0
  %v257 = vpop.f32.mrb[0].mxu0
  %v258 = vadd.f32 0.0, %v257
  %v259 = vpop.f32.mrb[0].mxu0
  %260 = vmatprep.mubr.bf16.mxu0 0
  %261 = vmatmul.mubr.bf16.gmra.mrb[0].mxu0 %v129
  %v262 = vpop.f32.mrb[0].mxu0
  %v263 = vadd.f32 0.0, %v262
  %v264 = vpop.f32.mrb[0].mxu0
  %v265 = vpop.f32.mrb[0].mxu0
  %v266 = vadd.f32 0.0, %v265
  %v267 = vpop.f32.mrb[0].mxu0
  %268 = vmatprep.mubr.bf16.mxu0 0
  %269 = vmatmul.mubr.bf16.gmra.mrb[0].mxu0 %v130
  %v270 = vpop.f32.mrb[0].mxu0
  %v271 = vadd.f32 0.0, %v270
  %v272 = vpop.f32.mrb[0].mxu0
  %v273 = vpop.f32.mrb[0].mxu0
  %v274 = vadd.f32 0.0, %v273
  %v275 = vpop.f32.mrb[0].mxu0
  %276 = vmatprep.mubr.bf16.mxu0 0
  %277 = vmatmul.mubr.bf16.gmra.mrb[0].mxu0 %v131
  %v278 = vpop.f32.mrb[0].mxu0
  %v279 = vadd.f32 0.0, %v278
  %v280 = vpop.f32.mrb[0].mxu0
  %v281 = vpop.f32.mrb[0].mxu0
  %v282 = vadd.f32 0.0, %v281
  %v283 = vpop.f32.mrb[0].mxu0
  %284 = vdwg.mxu0
  %v285 = vadd.f32 %v44, %v223
  %v286 = vadd.f32 %v45, %v226
  %v287 = vadd.f32 %v46, %v231
  %v288 = vadd.f32 %v47, %v234
  %v289 = vadd.f32 %v48, %v239
  %v290 = vadd.f32 %v49, %v242
  %v291 = vadd.f32 %v50, %v247
  %v292 = vadd.f32 %v51, %v250
  %v293 = vadd.f32 %v52, %v255
  %v294 = vadd.f32 %v53, %v258
  %v295 = vadd.f32 %v54, %v263
  %v296 = vadd.f32 %v55, %v266
  %v297 = vadd.f32 %v56, %v271
  %v298 = vadd.f32 %v57, %v274
  %v299 = vadd.f32 %v58, %v279
  %v300 = vadd.f32 %v59, %v282
  %301 = vst [vmem:[#allocation2] sm:$0xff] %v285
  %302 = vst [vmem:[#allocation2 + $0x8] sm:$0xff] %v286
  %303 = vst [vmem:[#allocation2 + $0x10] sm:$0xff] %v287
  %304 = vst [vmem:[#allocation2 + $0x18] sm:$0xff] %v288
  %305 = vst [vmem:[#allocation2 + $0x20] sm:$0xff] %v289
  %306 = vst [vmem:[#allocation2 + $0x28] sm:$0xff] %v290
  %307 = vst [vmem:[#allocation2 + $0x30] sm:$0xff] %v291
  %308 = vst [vmem:[#allocation2 + $0x38] sm:$0xff] %v292
  %309 = vst [vmem:[#allocation2 + $0x40] sm:$0xff] %v293
  %310 = vst [vmem:[#allocation2 + $0x48] sm:$0xff] %v294
  %311 = vst [vmem:[#allocation2 + $0x50] sm:$0xff] %v295
  %312 = vst [vmem:[#allocation2 + $0x58] sm:$0xff] %v296
  %313 = vst [vmem:[#allocation2 + $0x60] sm:$0xff] %v297
  %314 = vst [vmem:[#allocation2 + $0x68] sm:$0xff] %v298
  %315 = vst [vmem:[#allocation2 + $0x70] sm:$0xff] %v299
  %316 = vst [vmem:[#allocation2 + $0x78] sm:$0xff] %v300
  // Predicated region
  $region30: #{gnn_dir2_encoder_forward.4} parent=0 // pred_check
    %p317 = pneg %p24
  $region31: #{gnn_dir2_encoder_forward.4} parent=0 // pred_check_branch
    %319 = sbr.rel (%p317) target = $region33
  $region32: #{gnn_dir2_encoder_forward.4} parent=0 // pred_region
    %v320 = vld [vmem:[#allocation2] sm:$0xff]
    %v321 = vld [vmem:[#allocation2 + $0x8] sm:$0xff]
    %v322 = vld [vmem:[#allocation2 + $0x10] sm:$0xff]
    %v323 = vld [vmem:[#allocation2 + $0x18] sm:$0xff]
    %v324 = vld [vmem:[#allocation2 + $0x20] sm:$0xff]
    %v325 = vld [vmem:[#allocation2 + $0x28] sm:$0xff]
    %v326 = vld [vmem:[#allocation2 + $0x30] sm:$0xff]
    %v327 = vld [vmem:[#allocation2 + $0x38] sm:$0xff]
    %v328 = vld [vmem:[#allocation2 + $0x40] sm:$0xff]
    %v329 = vld [vmem:[#allocation2 + $0x48] sm:$0xff]
    %v330 = vld [vmem:[#allocation2 + $0x50] sm:$0xff]
    %v331 = vld [vmem:[#allocation2 + $0x58] sm:$0xff]
    %v332 = vld [vmem:[#allocation2 + $0x60] sm:$0xff]
    %v333 = vld [vmem:[#allocation2 + $0x68] sm:$0xff]
    %v334 = vld [vmem:[#allocation2 + $0x70] sm:$0xff]
    %v335 = vld [vmem:[#allocation2 + $0x78] sm:$0xff]
    %v336 = vpack.c.bf16 %v321, %v320
    %v337 = vpack.c.bf16 %v323, %v322
    %v338 = vpack.c.bf16 %v325, %v324
    %v339 = vpack.c.bf16 %v327, %v326
    %v340 = vpack.c.bf16 %v329, %v328
    %v341 = vpack.c.bf16 %v331, %v330
    %v342 = vpack.c.bf16 %v333, %v332
    %v343 = vpack.c.bf16 %v335, %v334
    %v344 = vld [vmem:[%s3] sm:$0xf]
    %v345 = vld [vmem:[%s3 + $0x4] sm:$0xf]
    %v346 = vld [vmem:[%s3 + $0x8] sm:$0xf]
    %v347 = vld [vmem:[%s3 + $0xc] sm:$0xf]
    %v348 = vld [vmem:[%s3 + $0x10] sm:$0xf]
    %v349 = vld [vmem:[%s3 + $0x14] sm:$0xf]
    %v350 = vld [vmem:[%s3 + $0x18] sm:$0xf]
    %v351 = vld [vmem:[%s3 + $0x1c] sm:$0xf]
    %v352 = vld [vmem:[%s3 + $0x20] sm:$0xf]
    %v353 = vld [vmem:[%s3 + $0x24] sm:$0xf]
    %v354 = vld [vmem:[%s3 + $0x28] sm:$0xf]
    %v355 = vld [vmem:[%s3 + $0x2c] sm:$0xf]
    %v356 = vld [vmem:[%s3 + $0x30] sm:$0xf]
    %v357 = vld [vmem:[%s3 + $0x34] sm:$0xf]
    %v358 = vld [vmem:[%s3 + $0x38] sm:$0xf]
    %v359 = vld [vmem:[%s3 + $0x3c] sm:$0xf]
    %v360 = vld [vmem:[%s2] sm:$0xf]
    %v361 = vld [vmem:[%s2 + $0x4] sm:$0xf]
    %v362 = vld [vmem:[%s2 + $0x8] sm:$0xf]
    %v363 = vld [vmem:[%s2 + $0xc] sm:$0xf]
    %v364 = vld [vmem:[%s2 + $0x10] sm:$0xf]
    %v365 = vld [vmem:[%s2 + $0x14] sm:$0xf]
    %v366 = vld [vmem:[%s2 + $0x18] sm:$0xf]
    %v367 = vld [vmem:[%s2 + $0x1c] sm:$0xf]
    %v368 = vld [vmem:[%s2 + $0x20] sm:$0xf]
    %v369 = vld [vmem:[%s2 + $0x24] sm:$0xf]
    %v370 = vld [vmem:[%s2 + $0x28] sm:$0xf]
    %v371 = vld [vmem:[%s2 + $0x2c] sm:$0xf]
    %v372 = vld [vmem:[%s2 + $0x30] sm:$0xf]
    %v373 = vld [vmem:[%s2 + $0x34] sm:$0xf]
    %v374 = vld [vmem:[%s2 + $0x38] sm:$0xf]
    %v375 = vld [vmem:[%s2 + $0x3c] sm:$0xf]
    %v376 = vld [vmem:[%s4] sm:$0xf]
    %v377 = vld [vmem:[%s4 + $0x4] sm:$0xf]
    %v378 = vld [vmem:[%s4 + $0x8] sm:$0xf]
    %v379 = vld [vmem:[%s4 + $0xc] sm:$0xf]
    %v380 = vld [vmem:[%s4 + $0x10] sm:$0xf]
    %v381 = vld [vmem:[%s4 + $0x14] sm:$0xf]
    %v382 = vld [vmem:[%s4 + $0x18] sm:$0xf]
    %v383 = vld [vmem:[%s4 + $0x1c] sm:$0xf]
    %v384 = vld [vmem:[%s4 + $0x20] sm:$0xf]
    %v385 = vld [vmem:[%s4 + $0x24] sm:$0xf]
    %v386 = vld [vmem:[%s4 + $0x28] sm:$0xf]
    %v387 = vld [vmem:[%s4 + $0x2c] sm:$0xf]
    %v388 = vld [vmem:[%s4 + $0x30] sm:$0xf]
    %v389 = vld [vmem:[%s4 + $0x34] sm:$0xf]
    %v390 = vld [vmem:[%s4 + $0x38] sm:$0xf]
    %v391 = vld [vmem:[%s4 + $0x3c] sm:$0xf]
    %v408 = vunpack.c.l.b16 %v360
    %v409 = vunpack.c.l.b16 %v361
    %v410 = vunpack.c.l.b16 %v362
    %v411 = vunpack.c.l.b16 %v363
    %v412 = vunpack.c.l.b16 %v364
    %v413 = vunpack.c.l.b16 %v365
    %v414 = vunpack.c.l.b16 %v366
    %v415 = vunpack.c.l.b16 %v367
    %v416 = vunpack.c.l.b16 %v368
    %v417 = vunpack.c.l.b16 %v369
    %v418 = vunpack.c.l.b16 %v370
    %v419 = vunpack.c.l.b16 %v371
    %v420 = vunpack.c.l.b16 %v372
    %v421 = vunpack.c.l.b16 %v373
    %v422 = vunpack.c.l.b16 %v374
    %v423 = vunpack.c.l.b16 %v375
    %v424 = vpack.c.b16 %v409, %v408
    %v425 = vpack.c.b16 %v411, %v410
    %v426 = vpack.c.b16 %v413, %v412
    %v427 = vpack.c.b16 %v415, %v414
    %v428 = vpack.c.b16 %v417, %v416
    %v429 = vpack.c.b16 %v419, %v418
    %v430 = vpack.c.b16 %v421, %v420
    %v431 = vpack.c.b16 %v423, %v422
    %v456 = vunpack.c.l.b16 %v376
    %v457 = vunpack.c.l.b16 %v377
    %v458 = vunpack.c.l.b16 %v378
    %v459 = vunpack.c.l.b16 %v379
    %v460 = vunpack.c.l.b16 %v380
    %v461 = vunpack.c.l.b16 %v381
    %v462 = vunpack.c.l.b16 %v382
    %v463 = vunpack.c.l.b16 %v383
    %v464 = vunpack.c.l.b16 %v384
    %v465 = vunpack.c.l.b16 %v385
    %v466 = vunpack.c.l.b16 %v386
    %v467 = vunpack.c.l.b16 %v387
    %v468 = vunpack.c.l.b16 %v388
    %v469 = vunpack.c.l.b16 %v389
    %v470 = vunpack.c.l.b16 %v390
    %v471 = vunpack.c.l.b16 %v391
    %v472 = vpack.c.b16 %v457, %v456
    %v473 = vpack.c.b16 %v459, %v458
    %v474 = vpack.c.b16 %v461, %v460
    %v475 = vpack.c.b16 %v463, %v462
    %v476 = vpack.c.b16 %v465, %v464
    %v477 = vpack.c.b16 %v467, %v466
    %v478 = vpack.c.b16 %v469, %v468
    %v479 = vpack.c.b16 %v471, %v470
    %488 = vmatprep.subr.bf16.mxu0 0
    %489 = vmatpush1.bf16.msra.mxu0 %v472
    %490 = vmatprep.subr.bf16.mxu0 0
    %491 = vmatpush1.bf16.msra.mxu0 %v473
    %492 = vmatprep.subr.bf16.mxu0 0
    %493 = vmatpush1.bf16.msra.mxu0 %v474
    %494 = vmatprep.subr.bf16.mxu0 0
    %495 = vmatpush1.bf16.msra.mxu0 %v475
    %496 = vmatprep.subr.bf16.mxu0 0
    %497 = vmatpush1.bf16.msra.mxu0 %v476
    %498 = vmatprep.subr.bf16.mxu0 0
    %499 = vmatpush1.bf16.msra.mxu0 %v477
    %500 = vmatprep.subr.bf16.mxu0 0
    %501 = vmatpush1.bf16.msra.mxu0 %v478
    %502 = vmatprep.subr.bf16.mxu0 0
    %503 = vmatpush1.bf16.msra.mxu0 %v479
    %504 = vmatprep.subr.bf16.mxu0 0
    %505 = vmatpush1.bf16.msra.mxu0 0
    %506 = vmatprep.subr.bf16.mxu0 0
    %507 = vmatpush1.bf16.msra.mxu0 0
    %508 = vmatprep.subr.bf16.mxu0 0
    %509 = vmatpush1.bf16.msra.mxu0 0
    %510 = vmatprep.subr.bf16.mxu0 0
    %511 = vmatpush1.bf16.msra.mxu0 0
    %512 = vmatprep.subr.bf16.mxu0 0
    %513 = vmatpush1.bf16.msra.mxu0 0
    %514 = vmatprep.subr.bf16.mxu0 0
    %515 = vmatpush1.bf16.msra.mxu0 0
    %516 = vmatprep.subr.bf16.mxu0 0
    %517 = vmatpush1.bf16.msra.mxu0 0
    %518 = vmatprep.subr.bf16.mxu0 0
    %519 = vmatpush1.bf16.msra.mxu0 0
    %520 = vmatprep.mubr.bf16.mxu0 0
    %521 = vmatmul.mubr.bf16.gmra.mrb[0].mxu0 %v424
    %v522 = vpop.f32.mrb[0].mxu0
    %v523 = vadd.f32 0.0, %v522
    %v524 = vpop.f32.mrb[0].mxu0
    %v525 = vpop.f32.mrb[0].mxu0
    %v526 = vadd.f32 0.0, %v525
    %v527 = vpop.f32.mrb[0].mxu0
    %528 = vmatprep.mubr.bf16.mxu0 0
    %529 = vmatmul.mubr.bf16.gmra.mrb[0].mxu0 %v425
    %v530 = vpop.f32.mrb[0].mxu0
    %v531 = vadd.f32 0.0, %v530
    %v532 = vpop.f32.mrb[0].mxu0
    %v533 = vpop.f32.mrb[0].mxu0
    %v534 = vadd.f32 0.0, %v533
    %v535 = vpop.f32.mrb[0].mxu0
    %536 = vmatprep.mubr.bf16.mxu0 0
    %537 = vmatmul.mubr.bf16.gmra.mrb[0].mxu0 %v426
    %v538 = vpop.f32.mrb[0].mxu0
    %v539 = vadd.f32 0.0, %v538
    %v540 = vpop.f32.mrb[0].mxu0
    %v541 = vpop.f32.mrb[0].mxu0
    %v542 = vadd.f32 0.0, %v541
    %v543 = vpop.f32.mrb[0].mxu0
    %544 = vmatprep.mubr.bf16.mxu0 0
    %545 = vmatmul.mubr.bf16.gmra.mrb[0].mxu0 %v427
    %v546 = vpop.f32.mrb[0].mxu0
    %v547 = vadd.f32 0.0, %v546
    %v548 = vpop.f32.mrb[0].mxu0
    %v549 = vpop.f32.mrb[0].mxu0
    %v550 = vadd.f32 0.0, %v549
    %v551 = vpop.f32.mrb[0].mxu0
    %552 = vmatprep.mubr.bf16.mxu0 0
    %553 = vmatmul.mubr.bf16.gmra.mrb[0].mxu0 %v428
    %v554 = vpop.f32.mrb[0].mxu0
    %v555 = vadd.f32 0.0, %v554
    %v556 = vpop.f32.mrb[0].mxu0
    %v557 = vpop.f32.mrb[0].mxu0
    %v558 = vadd.f32 0.0, %v557
    %v559 = vpop.f32.mrb[0].mxu0
    %560 = vmatprep.mubr.bf16.mxu0 0
    %561 = vmatmul.mubr.bf16.gmra.mrb[0].mxu0 %v429
    %v562 = vpop.f32.mrb[0].mxu0
    %v563 = vadd.f32 0.0, %v562
    %v564 = vpop.f32.mrb[0].mxu0
    %v565 = vpop.f32.mrb[0].mxu0
    %v566 = vadd.f32 0.0, %v565
    %v567 = vpop.f32.mrb[0].mxu0
    %568 = vmatprep.mubr.bf16.mxu0 0
    %569 = vmatmul.mubr.bf16.gmra.mrb[0].mxu0 %v430
    %v570 = vpop.f32.mrb[0].mxu0
    %v571 = vadd.f32 0.0, %v570
    %v572 = vpop.f32.mrb[0].mxu0
    %v573 = vpop.f32.mrb[0].mxu0
    %v574 = vadd.f32 0.0, %v573
    %v575 = vpop.f32.mrb[0].mxu0
    %576 = vmatprep.mubr.bf16.mxu0 0
    %577 = vmatmul.mubr.bf16.gmra.mrb[0].mxu0 %v431
    %v578 = vpop.f32.mrb[0].mxu0
    %v579 = vadd.f32 0.0, %v578
    %v580 = vpop.f32.mrb[0].mxu0
    %v581 = vpop.f32.mrb[0].mxu0
    %v582 = vadd.f32 0.0, %v581
    %v583 = vpop.f32.mrb[0].mxu0
    %584 = vdwg.mxu0
    %v601 = vunpack.c.l.b16 %v344
    %v602 = vunpack.c.l.b16 %v345
    %v603 = vunpack.c.l.b16 %v346
    %v604 = vunpack.c.l.b16 %v347
    %v605 = vunpack.c.l.b16 %v348
    %v606 = vunpack.c.l.b16 %v349
    %v607 = vunpack.c.l.b16 %v350
    %v608 = vunpack.c.l.b16 %v351
    %v609 = vunpack.c.l.b16 %v352
    %v610 = vunpack.c.l.b16 %v353
    %v611 = vunpack.c.l.b16 %v354
    %v612 = vunpack.c.l.b16 %v355
    %v613 = vunpack.c.l.b16 %v356
    %v614 = vunpack.c.l.b16 %v357
    %v615 = vunpack.c.l.b16 %v358
    %v616 = vunpack.c.l.b16 %v359
    %v617 = vpack.c.b16 %v602, %v601
    %v618 = vpack.c.b16 %v604, %v603
    %v619 = vpack.c.b16 %v606, %v605
    %v620 = vpack.c.b16 %v608, %v607
    %v621 = vpack.c.b16 %v610, %v609
    %v622 = vpack.c.b16 %v612, %v611
    %v623 = vpack.c.b16 %v614, %v613
    %v624 = vpack.c.b16 %v616, %v615
    %633 = vmatprep.subr.bf16.mxu0 0
    %634 = vmatpush1.bf16.msra.mxu0 %v617
    %635 = vmatprep.subr.bf16.mxu0 0
    %636 = vmatpush1.bf16.msra.mxu0 %v618
    %637 = vmatprep.subr.bf16.mxu0 0
    %638 = vmatpush1.bf16.msra.mxu0 %v619
    %639 = vmatprep.subr.bf16.mxu0 0
    %640 = vmatpush1.bf16.msra.mxu0 %v620
    %641 = vmatprep.subr.bf16.mxu0 0
    %642 = vmatpush1.bf16.msra.mxu0 %v621
    %643 = vmatprep.subr.bf16.mxu0 0
    %644 = vmatpush1.bf16.msra.mxu0 %v622
    %645 = vmatprep.subr.bf16.mxu0 0
    %646 = vmatpush1.bf16.msra.mxu0 %v623
    %647 = vmatprep.subr.bf16.mxu0 0
    %648 = vmatpush1.bf16.msra.mxu0 %v624
    %649 = vmatprep.subr.bf16.mxu0 0
    %650 = vmatpush1.bf16.msra.mxu0 0
    %651 = vmatprep.subr.bf16.mxu0 0
    %652 = vmatpush1.bf16.msra.mxu0 0
    %653 = vmatprep.subr.bf16.mxu0 0
    %654 = vmatpush1.bf16.msra.mxu0 0
    %655 = vmatprep.subr.bf16.mxu0 0
    %656 = vmatpush1.bf16.msra.mxu0 0
    %657 = vmatprep.subr.bf16.mxu0 0
    %658 = vmatpush1.bf16.msra.mxu0 0
    %659 = vmatprep.subr.bf16.mxu0 0
    %660 = vmatpush1.bf16.msra.mxu0 0
    %661 = vmatprep.subr.bf16.mxu0 0
    %662 = vmatpush1.bf16.msra.mxu0 0
    %663 = vmatprep.subr.bf16.mxu0 0
    %664 = vmatpush1.bf16.msra.mxu0 0
    %665 = vmatprep.mubr.bf16.mxu0 0
    %666 = vmatmul.mubr.bf16.gmra.mrb[0].mxu0 %v336
    %v667 = vpop.f32.mrb[0].mxu0
    %v668 = vadd.f32 %v523, %v667
    %v669 = vpop.f32.mrb[0].mxu0
    %v670 = vpop.f32.mrb[0].mxu0
    %v671 = vadd.f32 %v526, %v670
    %v672 = vpop.f32.mrb[0].mxu0
    %673 = vmatprep.mubr.bf16.mxu0 0
    %674 = vmatmul.mubr.bf16.gmra.mrb[0].mxu0 %v337
    %v675 = vpop.f32.mrb[0].mxu0
    %v676 = vadd.f32 %v531, %v675
    %v677 = vpop.f32.mrb[0].mxu0
    %v678 = vpop.f32.mrb[0].mxu0
    %v679 = vadd.f32 %v534, %v678
    %v680 = vpop.f32.mrb[0].mxu0
    %681 = vmatprep.mubr.bf16.mxu0 0
    %682 = vmatmul.mubr.bf16.gmra.mrb[0].mxu0 %v338
    %v683 = vpop.f32.mrb[0].mxu0
    %v684 = vadd.f32 %v539, %v683
    %v685 = vpop.f32.mrb[0].mxu0
    %v686 = vpop.f32.mrb[0].mxu0
    %v687 = vadd.f32 %v542, %v686
    %v688 = vpop.f32.mrb[0].mxu0
    %689 = vmatprep.mubr.bf16.mxu0 0
    %690 = vmatmul.mubr.bf16.gmra.mrb[0].mxu0 %v339
    %v691 = vpop.f32.mrb[0].mxu0
    %v692 = vadd.f32 %v547, %v691
    %v693 = vpop.f32.mrb[0].mxu0
    %v694 = vpop.f32.mrb[0].mxu0
    %v695 = vadd.f32 %v550, %v694
    %v696 = vpop.f32.mrb[0].mxu0
    %697 = vmatprep.mubr.bf16.mxu0 0
    %698 = vmatmul.mubr.bf16.gmra.mrb[0].mxu0 %v340
    %v699 = vpop.f32.mrb[0].mxu0
    %v700 = vadd.f32 %v555, %v699
    %v701 = vpop.f32.mrb[0].mxu0
    %v702 = vpop.f32.mrb[0].mxu0
    %v703 = vadd.f32 %v558, %v702
    %v704 = vpop.f32.mrb[0].mxu0
    %705 = vmatprep.mubr.bf16.mxu0 0
    %706 = vmatmul.mubr.bf16.gmra.mrb[0].mxu0 %v341
    %v707 = vpop.f32.mrb[0].mxu0
    %v708 = vadd.f32 %v563, %v707
    %v709 = vpop.f32.mrb[0].mxu0
    %v710 = vpop.f32.mrb[0].mxu0
    %v711 = vadd.f32 %v566, %v710
    %v712 = vpop.f32.mrb[0].mxu0
    %713 = vmatprep.mubr.bf16.mxu0 0
    %714 = vmatmul.mubr.bf16.gmra.mrb[0].mxu0 %v342
    %v715 = vpop.f32.mrb[0].mxu0
    %v716 = vadd.f32 %v571, %v715
    %v717 = vpop.f32.mrb[0].mxu0
    %v718 = vpop.f32.mrb[0].mxu0
    %v719 = vadd.f32 %v574, %v718
    %v720 = vpop.f32.mrb[0].mxu0
    %721 = vmatprep.mubr.bf16.mxu0 0
    %722 = vmatmul.mubr.bf16.gmra.mrb[0].mxu0 %v343
    %v723 = vpop.f32.mrb[0].mxu0
    %v724 = vadd.f32 %v579, %v723
    %v725 = vpop.f32.mrb[0].mxu0
    %v726 = vpop.f32.mrb[0].mxu0
    %v727 = vadd.f32 %v582, %v726
    %v728 = vpop.f32.mrb[0].mxu0
    %729 = vdwg.mxu0
    %v730 = vld [vmem:[%s5] sm:$0x1]
    %v732 = vlaneseq
    %v733 = vshrl.u32 %v732, 7
    %v734 = vsub.s32 0, %v733
    %v735 = vrot.slane %v730, %v734
    %v737 = vadd.f32 %v668, %v735
    %v738 = vadd.f32 %v671, %v735
    %v739 = vadd.f32 %v676, %v735
    %v740 = vadd.f32 %v679, %v735
    %v741 = vadd.f32 %v684, %v735
    %v742 = vadd.f32 %v687, %v735
    %v743 = vadd.f32 %v692, %v735
    %v744 = vadd.f32 %v695, %v735
    %v745 = vadd.f32 %v700, %v735
    %v746 = vadd.f32 %v703, %v735
    %v747 = vadd.f32 %v708, %v735
    %v748 = vadd.f32 %v711, %v735
    %v749 = vadd.f32 %v716, %v735
    %v750 = vadd.f32 %v719, %v735
    %v751 = vadd.f32 %v724, %v735
    %v752 = vadd.f32 %v727, %v735
    %753 = vst [vmem:[%s6] sm:$0xff] %v737
    %754 = vst [vmem:[%s6 + $0x8] sm:$0xff] %v738
    %755 = vst [vmem:[%s6 + $0x10] sm:$0xff] %v739
    %756 = vst [vmem:[%s6 + $0x18] sm:$0xff] %v740
    %757 = vst [vmem:[%s6 + $0x20] sm:$0xff] %v741
    %758 = vst [vmem:[%s6 + $0x28] sm:$0xff] %v742
    %759 = vst [vmem:[%s6 + $0x30] sm:$0xff] %v743
    %760 = vst [vmem:[%s6 + $0x38] sm:$0xff] %v744
    %761 = vst [vmem:[%s6 + $0x40] sm:$0xff] %v745
    %762 = vst [vmem:[%s6 + $0x48] sm:$0xff] %v746
    %763 = vst [vmem:[%s6 + $0x50] sm:$0xff] %v747
    %764 = vst [vmem:[%s6 + $0x58] sm:$0xff] %v748
    %765 = vst [vmem:[%s6 + $0x60] sm:$0xff] %v749
    %766 = vst [vmem:[%s6 + $0x68] sm:$0xff] %v750
    %767 = vst [vmem:[%s6 + $0x70] sm:$0xff] %v751
    %768 = vst [vmem:[%s6 + $0x78] sm:$0xff] %v752
  $region33: #{gnn_dir2_encoder_forward.4} parent=0 // pred_fallthru
    _
  // Predicated region
  $region34: #{gnn_dir2_encoder_forward.4} parent=0 // pred_check
    _
  $region35: #{gnn_dir2_encoder_forward.4} parent=0 // pred_check_branch
    %770 = sbr.rel (0) target = $region37
  $region36: #{gnn_dir2_encoder_forward.4} parent=0 // pred_region
    _
  $region37: #{gnn_dir2_encoder_forward.4} parent=0 // pred_fallthru
    _
  // Predicated region
  $region38: #{gnn_dir2_encoder_forward.4} parent=0 // pred_check
    _
  $region39: #{gnn_dir2_encoder_forward.4} parent=0 // pred_check_branch
    %772 = sbr.rel (0) target = $region41
  $region40: #{gnn_dir2_encoder_forward.4} parent=0 // pred_region
    _
  $region41: #{gnn_dir2_encoder_forward.4} parent=0 // pred_fallthru
    _

// kernel: gnn_dir2_encoder_forward.5
$region0: #{gnn_dir2_encoder_forward.5}
  #allocation0 [shape = 'u32[]', space=smem, size = 0x4, offset = 0x4, fixed_abs, tag = 'smem constant byte address 0x4 - core index']
  #allocation1 [shape = 'u32[144,128]{1,0:T(1,128)}', space=vmem, size = 0x12000, scoped, tag = 'internal scratch']
  %s0 = inlined_call_operand.vmem [shape: f32[128,128], index: 0, kind: input, shape index: {}]
  %s1 = inlined_call_operand.vmem [shape: bf16[128,128], index: 1, kind: input, shape index: {}]
  %s2 = inlined_call_operand.vmem [shape: bf16[2,128], index: 2, kind: input, shape index: {}]
  %s3 = inlined_call_operand.vmem [shape: f32[8,128], index: 3, kind: input, shape index: {}]
  %s4 = inlined_call_operand.vmem [shape: bf16[128,128], index: 4, kind: input, shape index: {}]
  %s5 = inlined_call_operand.vmem [shape: bf16[128,128], index: 5, kind: input, shape index: {}]
  %s6 = inlined_call_operand.vmem [shape: bf16[128,128], index: 6, kind: input, shape index: {}]
  %s7 = inlined_call_operand.vmem [shape: bf16[128,128], index: 7, kind: input, shape index: {}]
  %s8 = inlined_call_operand.vmem [shape: bf16[128,128], index: 8, kind: output, shape index: {0}]
  %s9 = inlined_call_operand.vmem [shape: f32[1,2,128], index: 9, kind: output, shape index: {1}]
  %10 = xla_tuple %s8, %s9
  %s11 = sld [smem:[#allocation0]]
  $region50: #{gnn_dir2_encoder_forward.5} parent=0
    _
  %s13 = ssub.s32 1, %s11
  %s14 = scalar_select 0, %s13, %s11
  // Predicated region
  $region2: #{gnn_dir2_encoder_forward.5} parent=0 // pred_check
    _
  $region3: #{gnn_dir2_encoder_forward.5} parent=0 // pred_check_branch
    %16 = sbr.rel (0) target = $region5
  $region4: #{gnn_dir2_encoder_forward.5} parent=0 // pred_region
    _
  $region5: #{gnn_dir2_encoder_forward.5} parent=0 // pred_fallthru
    _
  // Predicated region
  $region6: #{gnn_dir2_encoder_forward.5} parent=0 // pred_check
    _
  $region7: #{gnn_dir2_encoder_forward.5} parent=0 // pred_check_branch
    %18 = sbr.rel (0) target = $region9
  $region8: #{gnn_dir2_encoder_forward.5} parent=0 // pred_region
    _
  $region9: #{gnn_dir2_encoder_forward.5} parent=0 // pred_fallthru
    _
  // Predicated region
  $region10: #{gnn_dir2_encoder_forward.5} parent=0 // pred_check
    _
  $region11: #{gnn_dir2_encoder_forward.5} parent=0 // pred_check_branch
    %20 = sbr.rel (0) target = $region13
  $region12: #{gnn_dir2_encoder_forward.5} parent=0 // pred_region
    _
  $region13: #{gnn_dir2_encoder_forward.5} parent=0 // pred_fallthru
    _
  // Predicated region
  $region14: #{gnn_dir2_encoder_forward.5} parent=0 // pred_check
    _
  $region15: #{gnn_dir2_encoder_forward.5} parent=0 // pred_check_branch
    %22 = sbr.rel (0) target = $region17
  $region16: #{gnn_dir2_encoder_forward.5} parent=0 // pred_region
    _
  $region17: #{gnn_dir2_encoder_forward.5} parent=0 // pred_fallthru
    _
  // Predicated region
  $region18: #{gnn_dir2_encoder_forward.5} parent=0 // pred_check
    _
  $region19: #{gnn_dir2_encoder_forward.5} parent=0 // pred_check_branch
    %24 = sbr.rel (0) target = $region21
  $region20: #{gnn_dir2_encoder_forward.5} parent=0 // pred_region
    _
  $region21: #{gnn_dir2_encoder_forward.5} parent=0 // pred_fallthru
    _
  // Predicated region
  $region22: #{gnn_dir2_encoder_forward.5} parent=0 // pred_check
    _
  $region23: #{gnn_dir2_encoder_forward.5} parent=0 // pred_check_branch
    %26 = sbr.rel (0) target = $region25
  $region24: #{gnn_dir2_encoder_forward.5} parent=0 // pred_region
    _
  $region25: #{gnn_dir2_encoder_forward.5} parent=0 // pred_fallthru
    _
  // Predicated region
  $region26: #{gnn_dir2_encoder_forward.5} parent=0 // pred_check
    _
  $region27: #{gnn_dir2_encoder_forward.5} parent=0 // pred_check_branch
    %28 = sbr.rel (0) target = $region29
  $region28: #{gnn_dir2_encoder_forward.5} parent=0 // pred_region
    _
  $region29: #{gnn_dir2_encoder_forward.5} parent=0 // pred_fallthru
    _
  // Predicated region
  $region30: #{gnn_dir2_encoder_forward.5} parent=0 // pred_check
    _
  $region31: #{gnn_dir2_encoder_forward.5} parent=0 // pred_check_branch
    %30 = sbr.rel (0) target = $region33
  $region32: #{gnn_dir2_encoder_forward.5} parent=0 // pred_region
    _
  $region33: #{gnn_dir2_encoder_forward.5} parent=0 // pred_fallthru
    _
  %v32 = vld [vmem:[%s3] sm:$0x1]
  %v33 = vld [vmem:[%s3 + $0x1] sm:$0x1]
  %v34 = vld [vmem:[%s3 + $0x2] sm:$0x1]
  %v35 = vld [vmem:[%s3 + $0x3] sm:$0x1]
  %v36 = vld [vmem:[%s0] sm:$0xff]
  %v37 = vld [vmem:[%s0 + $0x8] sm:$0xff]
  %v38 = vld [vmem:[%s0 + $0x10] sm:$0xff]
  %v39 = vld [vmem:[%s0 + $0x18] sm:$0xff]
  %v40 = vld [vmem:[%s0 + $0x20] sm:$0xff]
  %v41 = vld [vmem:[%s0 + $0x28] sm:$0xff]
  %v42 = vld [vmem:[%s0 + $0x30] sm:$0xff]
  %v43 = vld [vmem:[%s0 + $0x38] sm:$0xff]
  %v44 = vld [vmem:[%s0 + $0x40] sm:$0xff]
  %v45 = vld [vmem:[%s0 + $0x48] sm:$0xff]
  %v46 = vld [vmem:[%s0 + $0x50] sm:$0xff]
  %v47 = vld [vmem:[%s0 + $0x58] sm:$0xff]
  %v48 = vld [vmem:[%s0 + $0x60] sm:$0xff]
  %v49 = vld [vmem:[%s0 + $0x68] sm:$0xff]
  %v50 = vld [vmem:[%s0 + $0x70] sm:$0xff]
  %v51 = vld [vmem:[%s0 + $0x78] sm:$0xff]
  %v52 = vlaneseq
  %v53 = vshrl.u32 %v52, 7
  %v54 = vsub.s32 0, %v53
  %v55 = vrot.slane %v32, %v54
  %v56 = vmul.f32 %v36, %v55
  %v57 = vmul.f32 %v37, %v55
  %v58 = vmul.f32 %v38, %v55
  %v59 = vmul.f32 %v39, %v55
  %v60 = vmul.f32 %v40, %v55
  %v61 = vmul.f32 %v41, %v55
  %v62 = vmul.f32 %v42, %v55
  %v63 = vmul.f32 %v43, %v55
  %v64 = vmul.f32 %v44, %v55
  %v65 = vmul.f32 %v45, %v55
  %v66 = vmul.f32 %v46, %v55
  %v67 = vmul.f32 %v47, %v55
  %v68 = vmul.f32 %v48, %v55
  %v69 = vmul.f32 %v49, %v55
  %v70 = vmul.f32 %v50, %v55
  %v71 = vmul.f32 %v51, %v55
  %v72 = vlaneseq
  %v73 = vshrl.u32 %v72, 7
  %v74 = vsub.s32 0, %v73
  %v75 = vrot.slane %v33, %v74
  %v76 = vadd.f32 %v56, %v75
  %v77 = vadd.f32 %v57, %v75
  %v78 = vadd.f32 %v58, %v75
  %v79 = vadd.f32 %v59, %v75
  %v80 = vadd.f32 %v60, %v75
  %v81 = vadd.f32 %v61, %v75
  %v82 = vadd.f32 %v62, %v75
  %v83 = vadd.f32 %v63, %v75
  %v84 = vadd.f32 %v64, %v75
  %v85 = vadd.f32 %v65, %v75
  %v86 = vadd.f32 %v66, %v75
  %v87 = vadd.f32 %v67, %v75
  %v88 = vadd.f32 %v68, %v75
  %v89 = vadd.f32 %v69, %v75
  %v90 = vadd.f32 %v70, %v75
  %v91 = vadd.f32 %v71, %v75
  %v92 = vtanh.pop %v76
  %v93 = vtanh.pop %v77
  %v94 = vtanh.pop %v78
  %v95 = vtanh.pop %v79
  %v96 = vtanh.pop %v80
  %v97 = vtanh.pop %v81
  %v98 = vtanh.pop %v82
  %v99 = vtanh.pop %v83
  %v100 = vtanh.pop %v84
  %v101 = vtanh.pop %v85
  %v102 = vtanh.pop %v86
  %v103 = vtanh.pop %v87
  %v104 = vtanh.pop %v88
  %v105 = vtanh.pop %v89
  %v106 = vtanh.pop %v90
  %v107 = vtanh.pop %v91
  %v108 = vpack.c.bf16 %v93, %v92
  %v109 = vpack.c.bf16 %v95, %v94
  %v110 = vpack.c.bf16 %v97, %v96
  %v111 = vpack.c.bf16 %v99, %v98
  %v112 = vpack.c.bf16 %v101, %v100
  %v113 = vpack.c.bf16 %v103, %v102
  %v114 = vpack.c.bf16 %v105, %v104
  %v115 = vpack.c.bf16 %v107, %v106
  %v124 = vunpack.c.l.b16 %v108
  %v125 = vunpack.c.h.b16 %v108
  %v126 = vunpack.c.l.b16 %v109
  %v127 = vunpack.c.h.b16 %v109
  %v128 = vunpack.c.l.b16 %v110
  %v129 = vunpack.c.h.b16 %v110
  %v130 = vunpack.c.l.b16 %v111
  %v131 = vunpack.c.h.b16 %v111
  %v132 = vunpack.c.l.b16 %v112
  %v133 = vunpack.c.h.b16 %v112
  %v134 = vunpack.c.l.b16 %v113
  %v135 = vunpack.c.h.b16 %v113
  %v136 = vunpack.c.l.b16 %v114
  %v137 = vunpack.c.h.b16 %v114
  %v138 = vunpack.c.l.b16 %v115
  %v139 = vunpack.c.h.b16 %v115
  %v140 = vpack.c.b16 %v124, %v124
  %v141 = vpack.c.b16 %v125, %v125
  %v142 = vpack.c.b16 %v126, %v126
  %v143 = vpack.c.b16 %v127, %v127
  %v144 = vpack.c.b16 %v128, %v128
  %v145 = vpack.c.b16 %v129, %v129
  %v146 = vpack.c.b16 %v130, %v130
  %v147 = vpack.c.b16 %v131, %v131
  %v148 = vpack.c.b16 %v132, %v132
  %v149 = vpack.c.b16 %v133, %v133
  %v150 = vpack.c.b16 %v134, %v134
  %v151 = vpack.c.b16 %v135, %v135
  %v152 = vpack.c.b16 %v136, %v136
  %v153 = vpack.c.b16 %v137, %v137
  %v154 = vpack.c.b16 %v138, %v138
  %v155 = vpack.c.b16 %v139, %v139
  %172 = vst [vmem:[%s8] sm:$0xf] %v140
  %173 = vst [vmem:[%s8 + $0x4] sm:$0xf] %v141
  %174 = vst [vmem:[%s8 + $0x8] sm:$0xf] %v142
  %175 = vst [vmem:[%s8 + $0xc] sm:$0xf] %v143
  %176 = vst [vmem:[%s8 + $0x10] sm:$0xf] %v144
  %177 = vst [vmem:[%s8 + $0x14] sm:$0xf] %v145
  %178 = vst [vmem:[%s8 + $0x18] sm:$0xf] %v146
  %179 = vst [vmem:[%s8 + $0x1c] sm:$0xf] %v147
  %180 = vst [vmem:[%s8 + $0x20] sm:$0xf] %v148
  %181 = vst [vmem:[%s8 + $0x24] sm:$0xf] %v149
  %182 = vst [vmem:[%s8 + $0x28] sm:$0xf] %v150
  %183 = vst [vmem:[%s8 + $0x2c] sm:$0xf] %v151
  %184 = vst [vmem:[%s8 + $0x30] sm:$0xf] %v152
  %185 = vst [vmem:[%s8 + $0x34] sm:$0xf] %v153
  %186 = vst [vmem:[%s8 + $0x38] sm:$0xf] %v154
  %187 = vst [vmem:[%s8 + $0x3c] sm:$0xf] %v155
  %v188 = vld [vmem:[%s1] sm:$0xf]
  %v189 = vld [vmem:[%s1 + $0x4] sm:$0xf]
  %v190 = vld [vmem:[%s1 + $0x8] sm:$0xf]
  %v191 = vld [vmem:[%s1 + $0xc] sm:$0xf]
  %v192 = vld [vmem:[%s1 + $0x10] sm:$0xf]
  %v193 = vld [vmem:[%s1 + $0x14] sm:$0xf]
  %v194 = vld [vmem:[%s1 + $0x18] sm:$0xf]
  %v195 = vld [vmem:[%s1 + $0x1c] sm:$0xf]
  %v196 = vld [vmem:[%s1 + $0x20] sm:$0xf]
  %v197 = vld [vmem:[%s1 + $0x24] sm:$0xf]
  %v198 = vld [vmem:[%s1 + $0x28] sm:$0xf]
  %v199 = vld [vmem:[%s1 + $0x2c] sm:$0xf]
  %v200 = vld [vmem:[%s1 + $0x30] sm:$0xf]
  %v201 = vld [vmem:[%s1 + $0x34] sm:$0xf]
  %v202 = vld [vmem:[%s1 + $0x38] sm:$0xf]
  %v203 = vld [vmem:[%s1 + $0x3c] sm:$0xf]
  %v204 = vld [vmem:[%s4] sm:$0xf]
  %v205 = vld [vmem:[%s4 + $0x4] sm:$0xf]
  %v206 = vld [vmem:[%s4 + $0x8] sm:$0xf]
  %v207 = vld [vmem:[%s4 + $0xc] sm:$0xf]
  %v208 = vld [vmem:[%s4 + $0x10] sm:$0xf]
  %v209 = vld [vmem:[%s4 + $0x14] sm:$0xf]
  %v210 = vld [vmem:[%s4 + $0x18] sm:$0xf]
  %v211 = vld [vmem:[%s4 + $0x1c] sm:$0xf]
  %v212 = vld [vmem:[%s4 + $0x20] sm:$0xf]
  %v213 = vld [vmem:[%s4 + $0x24] sm:$0xf]
  %v214 = vld [vmem:[%s4 + $0x28] sm:$0xf]
  %v215 = vld [vmem:[%s4 + $0x2c] sm:$0xf]
  %v216 = vld [vmem:[%s4 + $0x30] sm:$0xf]
  %v217 = vld [vmem:[%s4 + $0x34] sm:$0xf]
  %v218 = vld [vmem:[%s4 + $0x38] sm:$0xf]
  %v219 = vld [vmem:[%s4 + $0x3c] sm:$0xf]
  %v220 = vld [vmem:[%s5] sm:$0xf]
  %v221 = vld [vmem:[%s5 + $0x4] sm:$0xf]
  %v222 = vld [vmem:[%s5 + $0x8] sm:$0xf]
  %v223 = vld [vmem:[%s5 + $0xc] sm:$0xf]
  %v224 = vld [vmem:[%s5 + $0x10] sm:$0xf]
  %v225 = vld [vmem:[%s5 + $0x14] sm:$0xf]
  %v226 = vld [vmem:[%s5 + $0x18] sm:$0xf]
  %v227 = vld [vmem:[%s5 + $0x1c] sm:$0xf]
  %v228 = vld [vmem:[%s5 + $0x20] sm:$0xf]
  %v229 = vld [vmem:[%s5 + $0x24] sm:$0xf]
  %v230 = vld [vmem:[%s5 + $0x28] sm:$0xf]
  %v231 = vld [vmem:[%s5 + $0x2c] sm:$0xf]
  %v232 = vld [vmem:[%s5 + $0x30] sm:$0xf]
  %v233 = vld [vmem:[%s5 + $0x34] sm:$0xf]
  %v234 = vld [vmem:[%s5 + $0x38] sm:$0xf]
  %v235 = vld [vmem:[%s5 + $0x3c] sm:$0xf]
  %v252 = vunpack.c.l.b16 %v188
  %v253 = vunpack.c.l.b16 %v189
  %v254 = vunpack.c.l.b16 %v190
  %v255 = vunpack.c.l.b16 %v191
  %v256 = vunpack.c.l.b16 %v192
  %v257 = vunpack.c.l.b16 %v193
  %v258 = vunpack.c.l.b16 %v194
  %v259 = vunpack.c.l.b16 %v195
  %v260 = vunpack.c.l.b16 %v196
  %v261 = vunpack.c.l.b16 %v197
  %v262 = vunpack.c.l.b16 %v198
  %v263 = vunpack.c.l.b16 %v199
  %v264 = vunpack.c.l.b16 %v200
  %v265 = vunpack.c.l.b16 %v201
  %v266 = vunpack.c.l.b16 %v202
  %v267 = vunpack.c.l.b16 %v203
  %v268 = vpack.c.b16 %v253, %v252
  %v269 = vpack.c.b16 %v255, %v254
  %v270 = vpack.c.b16 %v257, %v256
  %v271 = vpack.c.b16 %v259, %v258
  %v272 = vpack.c.b16 %v261, %v260
  %v273 = vpack.c.b16 %v263, %v262
  %v274 = vpack.c.b16 %v265, %v264
  %v275 = vpack.c.b16 %v267, %v266
  %v300 = vunpack.c.l.b16 %v220
  %v301 = vunpack.c.l.b16 %v221
  %v302 = vunpack.c.l.b16 %v222
  %v303 = vunpack.c.l.b16 %v223
  %v304 = vunpack.c.l.b16 %v224
  %v305 = vunpack.c.l.b16 %v225
  %v306 = vunpack.c.l.b16 %v226
  %v307 = vunpack.c.l.b16 %v227
  %v308 = vunpack.c.l.b16 %v228
  %v309 = vunpack.c.l.b16 %v229
  %v310 = vunpack.c.l.b16 %v230
  %v311 = vunpack.c.l.b16 %v231
  %v312 = vunpack.c.l.b16 %v232
  %v313 = vunpack.c.l.b16 %v233
  %v314 = vunpack.c.l.b16 %v234
  %v315 = vunpack.c.l.b16 %v235
  %v316 = vpack.c.b16 %v301, %v300
  %v317 = vpack.c.b16 %v303, %v302
  %v318 = vpack.c.b16 %v305, %v304
  %v319 = vpack.c.b16 %v307, %v306
  %v320 = vpack.c.b16 %v309, %v308
  %v321 = vpack.c.b16 %v311, %v310
  %v322 = vpack.c.b16 %v313, %v312
  %v323 = vpack.c.b16 %v315, %v314
  %332 = vmatprep.subr.bf16.mxu0 0
  %333 = vmatpush1.bf16.msra.mxu0 %v316
  %334 = vmatprep.subr.bf16.mxu0 0
  %335 = vmatpush1.bf16.msra.mxu0 %v317
  %336 = vmatprep.subr.bf16.mxu0 0
  %337 = vmatpush1.bf16.msra.mxu0 %v318
  %338 = vmatprep.subr.bf16.mxu0 0
  %339 = vmatpush1.bf16.msra.mxu0 %v319
  %340 = vmatprep.subr.bf16.mxu0 0
  %341 = vmatpush1.bf16.msra.mxu0 %v320
  %342 = vmatprep.subr.bf16.mxu0 0
  %343 = vmatpush1.bf16.msra.mxu0 %v321
  %344 = vmatprep.subr.bf16.mxu0 0
  %345 = vmatpush1.bf16.msra.mxu0 %v322
  %346 = vmatprep.subr.bf16.mxu0 0
  %347 = vmatpush1.bf16.msra.mxu0 %v323
  %348 = vmatprep.subr.bf16.mxu0 0
  %349 = vmatpush1.bf16.msra.mxu0 0
  %350 = vmatprep.subr.bf16.mxu0 0
  %351 = vmatpush1.bf16.msra.mxu0 0
  %352 = vmatprep.subr.bf16.mxu0 0
  %353 = vmatpush1.bf16.msra.mxu0 0
  %354 = vmatprep.subr.bf16.mxu0 0
  %355 = vmatpush1.bf16.msra.mxu0 0
  %356 = vmatprep.subr.bf16.mxu0 0
  %357 = vmatpush1.bf16.msra.mxu0 0
  %358 = vmatprep.subr.bf16.mxu0 0
  %359 = vmatpush1.bf16.msra.mxu0 0
  %360 = vmatprep.subr.bf16.mxu0 0
  %361 = vmatpush1.bf16.msra.mxu0 0
  %362 = vmatprep.subr.bf16.mxu0 0
  %363 = vmatpush1.bf16.msra.mxu0 0
  %364 = vmatprep.mubr.bf16.mxu0 0
  %365 = vmatmul.mubr.bf16.gmra.mrb[0].mxu0 %v268
  %v366 = vpop.f32.mrb[0].mxu0
  %v367 = vadd.f32 0.0, %v366
  %v368 = vpop.f32.mrb[0].mxu0
  %v369 = vpop.f32.mrb[0].mxu0
  %v370 = vadd.f32 0.0, %v369
  %v371 = vpop.f32.mrb[0].mxu0
  %372 = vmatprep.mubr.bf16.mxu0 0
  %373 = vmatmul.mubr.bf16.gmra.mrb[0].mxu0 %v269
  %v374 = vpop.f32.mrb[0].mxu0
  %v375 = vadd.f32 0.0, %v374
  %v376 = vpop.f32.mrb[0].mxu0
  %v377 = vpop.f32.mrb[0].mxu0
  %v378 = vadd.f32 0.0, %v377
  %v379 = vpop.f32.mrb[0].mxu0
  %380 = vmatprep.mubr.bf16.mxu0 0
  %381 = vmatmul.mubr.bf16.gmra.mrb[0].mxu0 %v270
  %v382 = vpop.f32.mrb[0].mxu0
  %v383 = vadd.f32 0.0, %v382
  %v384 = vpop.f32.mrb[0].mxu0
  %v385 = vpop.f32.mrb[0].mxu0
  %v386 = vadd.f32 0.0, %v385
  %v387 = vpop.f32.mrb[0].mxu0
  %388 = vmatprep.mubr.bf16.mxu0 0
  %389 = vmatmul.mubr.bf16.gmra.mrb[0].mxu0 %v271
  %v390 = vpop.f32.mrb[0].mxu0
  %v391 = vadd.f32 0.0, %v390
  %v392 = vpop.f32.mrb[0].mxu0
  %v393 = vpop.f32.mrb[0].mxu0
  %v394 = vadd.f32 0.0, %v393
  %v395 = vpop.f32.mrb[0].mxu0
  %396 = vmatprep.mubr.bf16.mxu0 0
  %397 = vmatmul.mubr.bf16.gmra.mrb[0].mxu0 %v272
  %v398 = vpop.f32.mrb[0].mxu0
  %v399 = vadd.f32 0.0, %v398
  %v400 = vpop.f32.mrb[0].mxu0
  %v401 = vpop.f32.mrb[0].mxu0
  %v402 = vadd.f32 0.0, %v401
  %v403 = vpop.f32.mrb[0].mxu0
  %404 = vmatprep.mubr.bf16.mxu0 0
  %405 = vmatmul.mubr.bf16.gmra.mrb[0].mxu0 %v273
  %v406 = vpop.f32.mrb[0].mxu0
  %v407 = vadd.f32 0.0, %v406
  %v408 = vpop.f32.mrb[0].mxu0
  %v409 = vpop.f32.mrb[0].mxu0
  %v410 = vadd.f32 0.0, %v409
  %v411 = vpop.f32.mrb[0].mxu0
  %412 = vmatprep.mubr.bf16.mxu0 0
  %413 = vmatmul.mubr.bf16.gmra.mrb[0].mxu0 %v274
  %v414 = vpop.f32.mrb[0].mxu0
  %v415 = vadd.f32 0.0, %v414
  %v416 = vpop.f32.mrb[0].mxu0
  %v417 = vpop.f32.mrb[0].mxu0
  %v418 = vadd.f32 0.0, %v417
  %v419 = vpop.f32.mrb[0].mxu0
  %420 = vmatprep.mubr.bf16.mxu0 0
  %421 = vmatmul.mubr.bf16.gmra.mrb[0].mxu0 %v275
  %v422 = vpop.f32.mrb[0].mxu0
  %v423 = vadd.f32 0.0, %v422
  %v424 = vpop.f32.mrb[0].mxu0
  %v425 = vpop.f32.mrb[0].mxu0
  %v426 = vadd.f32 0.0, %v425
  %v427 = vpop.f32.mrb[0].mxu0
  %428 = vdwg.mxu0
  %v445 = vunpack.c.l.b16 %v204
  %v446 = vunpack.c.l.b16 %v205
  %v447 = vunpack.c.l.b16 %v206
  %v448 = vunpack.c.l.b16 %v207
  %v449 = vunpack.c.l.b16 %v208
  %v450 = vunpack.c.l.b16 %v209
  %v451 = vunpack.c.l.b16 %v210
  %v452 = vunpack.c.l.b16 %v211
  %v453 = vunpack.c.l.b16 %v212
  %v454 = vunpack.c.l.b16 %v213
  %v455 = vunpack.c.l.b16 %v214
  %v456 = vunpack.c.l.b16 %v215
  %v457 = vunpack.c.l.b16 %v216
  %v458 = vunpack.c.l.b16 %v217
  %v459 = vunpack.c.l.b16 %v218
  %v460 = vunpack.c.l.b16 %v219
  %v461 = vpack.c.b16 %v446, %v445
  %v462 = vpack.c.b16 %v448, %v447
  %v463 = vpack.c.b16 %v450, %v449
  %v464 = vpack.c.b16 %v452, %v451
  %v465 = vpack.c.b16 %v454, %v453
  %v466 = vpack.c.b16 %v456, %v455
  %v467 = vpack.c.b16 %v458, %v457
  %v468 = vpack.c.b16 %v460, %v459
  %477 = vmatprep.subr.bf16.mxu0 0
  %478 = vmatpush1.bf16.msra.mxu0 %v461
  %479 = vmatprep.subr.bf16.mxu0 0
  %480 = vmatpush1.bf16.msra.mxu0 %v462
  %481 = vmatprep.subr.bf16.mxu0 0
  %482 = vmatpush1.bf16.msra.mxu0 %v463
  %483 = vmatprep.subr.bf16.mxu0 0
  %484 = vmatpush1.bf16.msra.mxu0 %v464
  %485 = vmatprep.subr.bf16.mxu0 0
  %486 = vmatpush1.bf16.msra.mxu0 %v465
  %487 = vmatprep.subr.bf16.mxu0 0
  %488 = vmatpush1.bf16.msra.mxu0 %v466
  %489 = vmatprep.subr.bf16.mxu0 0
  %490 = vmatpush1.bf16.msra.mxu0 %v467
  %491 = vmatprep.subr.bf16.mxu0 0
  %492 = vmatpush1.bf16.msra.mxu0 %v468
  %493 = vmatprep.subr.bf16.mxu0 0
  %494 = vmatpush1.bf16.msra.mxu0 0
  %495 = vmatprep.subr.bf16.mxu0 0
  %496 = vmatpush1.bf16.msra.mxu0 0
  %497 = vmatprep.subr.bf16.mxu0 0
  %498 = vmatpush1.bf16.msra.mxu0 0
  %499 = vmatprep.subr.bf16.mxu0 0
  %500 = vmatpush1.bf16.msra.mxu0 0
  %501 = vmatprep.subr.bf16.mxu0 0
  %502 = vmatpush1.bf16.msra.mxu0 0
  %503 = vmatprep.subr.bf16.mxu0 0
  %504 = vmatpush1.bf16.msra.mxu0 0
  %505 = vmatprep.subr.bf16.mxu0 0
  %506 = vmatpush1.bf16.msra.mxu0 0
  %507 = vmatprep.subr.bf16.mxu0 0
  %508 = vmatpush1.bf16.msra.mxu0 0
  %509 = vmatprep.mubr.bf16.mxu0 0
  %510 = vmatmul.mubr.bf16.gmra.mrb[0].mxu0 %v108
  %v511 = vpop.f32.mrb[0].mxu0
  %v512 = vadd.f32 %v367, %v511
  %v513 = vpop.f32.mrb[0].mxu0
  %v514 = vpop.f32.mrb[0].mxu0
  %v515 = vadd.f32 %v370, %v514
  %v516 = vpop.f32.mrb[0].mxu0
  %517 = vmatprep.mubr.bf16.mxu0 0
  %518 = vmatmul.mubr.bf16.gmra.mrb[0].mxu0 %v109
  %v519 = vpop.f32.mrb[0].mxu0
  %v520 = vadd.f32 %v375, %v519
  %v521 = vpop.f32.mrb[0].mxu0
  %v522 = vpop.f32.mrb[0].mxu0
  %v523 = vadd.f32 %v378, %v522
  %v524 = vpop.f32.mrb[0].mxu0
  %525 = vmatprep.mubr.bf16.mxu0 0
  %526 = vmatmul.mubr.bf16.gmra.mrb[0].mxu0 %v110
  %v527 = vpop.f32.mrb[0].mxu0
  %v528 = vadd.f32 %v383, %v527
  %v529 = vpop.f32.mrb[0].mxu0
  %v530 = vpop.f32.mrb[0].mxu0
  %v531 = vadd.f32 %v386, %v530
  %v532 = vpop.f32.mrb[0].mxu0
  %533 = vmatprep.mubr.bf16.mxu0 0
  %534 = vmatmul.mubr.bf16.gmra.mrb[0].mxu0 %v111
  %v535 = vpop.f32.mrb[0].mxu0
  %v536 = vadd.f32 %v391, %v535
  %v537 = vpop.f32.mrb[0].mxu0
  %v538 = vpop.f32.mrb[0].mxu0
  %v539 = vadd.f32 %v394, %v538
  %v540 = vpop.f32.mrb[0].mxu0
  %541 = vmatprep.mubr.bf16.mxu0 0
  %542 = vmatmul.mubr.bf16.gmra.mrb[0].mxu0 %v112
  %v543 = vpop.f32.mrb[0].mxu0
  %v544 = vadd.f32 %v399, %v543
  %v545 = vpop.f32.mrb[0].mxu0
  %v546 = vpop.f32.mrb[0].mxu0
  %v547 = vadd.f32 %v402, %v546
  %v548 = vpop.f32.mrb[0].mxu0
  %549 = vmatprep.mubr.bf16.mxu0 0
  %550 = vmatmul.mubr.bf16.gmra.mrb[0].mxu0 %v113
  %v551 = vpop.f32.mrb[0].mxu0
  %v552 = vadd.f32 %v407, %v551
  %v553 = vpop.f32.mrb[0].mxu0
  %v554 = vpop.f32.mrb[0].mxu0
  %v555 = vadd.f32 %v410, %v554
  %v556 = vpop.f32.mrb[0].mxu0
  %557 = vmatprep.mubr.bf16.mxu0 0
  %558 = vmatmul.mubr.bf16.gmra.mrb[0].mxu0 %v114
  %v559 = vpop.f32.mrb[0].mxu0
  %v560 = vadd.f32 %v415, %v559
  %v561 = vpop.f32.mrb[0].mxu0
  %v562 = vpop.f32.mrb[0].mxu0
  %v563 = vadd.f32 %v418, %v562
  %v564 = vpop.f32.mrb[0].mxu0
  %565 = vmatprep.mubr.bf16.mxu0 0
  %566 = vmatmul.mubr.bf16.gmra.mrb[0].mxu0 %v115
  %v567 = vpop.f32.mrb[0].mxu0
  %v568 = vadd.f32 %v423, %v567
  %v569 = vpop.f32.mrb[0].mxu0
  %v570 = vpop.f32.mrb[0].mxu0
  %v571 = vadd.f32 %v426, %v570
  %v572 = vpop.f32.mrb[0].mxu0
  %573 = vdwg.mxu0
  %v574 = vlaneseq
  %v575 = vshrl.u32 %v574, 7
  %v576 = vsub.s32 0, %v575
  %v577 = vrot.slane %v34, %v576
  %v578 = vadd.f32 %v512, %v577
  %v579 = vadd.f32 %v515, %v577
  %v580 = vadd.f32 %v520, %v577
  %v581 = vadd.f32 %v523, %v577
  %v582 = vadd.f32 %v528, %v577
  %v583 = vadd.f32 %v531, %v577
  %v584 = vadd.f32 %v536, %v577
  %v585 = vadd.f32 %v539, %v577
  %v586 = vadd.f32 %v544, %v577
  %v587 = vadd.f32 %v547, %v577
  %v588 = vadd.f32 %v552, %v577
  %v589 = vadd.f32 %v555, %v577
  %v590 = vadd.f32 %v560, %v577
  %v591 = vadd.f32 %v563, %v577
  %v592 = vadd.f32 %v568, %v577
  %v593 = vadd.f32 %v571, %v577
  %v594 = vld [vmem:[%s6] sm:$0xf]
  %v595 = vld [vmem:[%s6 + $0x4] sm:$0xf]
  %v596 = vld [vmem:[%s6 + $0x8] sm:$0xf]
  %v597 = vld [vmem:[%s6 + $0xc] sm:$0xf]
  %v598 = vld [vmem:[%s6 + $0x10] sm:$0xf]
  %v599 = vld [vmem:[%s6 + $0x14] sm:$0xf]
  %v600 = vld [vmem:[%s6 + $0x18] sm:$0xf]
  %v601 = vld [vmem:[%s6 + $0x1c] sm:$0xf]
  %v602 = vld [vmem:[%s6 + $0x20] sm:$0xf]
  %v603 = vld [vmem:[%s6 + $0x24] sm:$0xf]
  %v604 = vld [vmem:[%s6 + $0x28] sm:$0xf]
  %v605 = vld [vmem:[%s6 + $0x2c] sm:$0xf]
  %v606 = vld [vmem:[%s6 + $0x30] sm:$0xf]
  %v607 = vld [vmem:[%s6 + $0x34] sm:$0xf]
  %v608 = vld [vmem:[%s6 + $0x38] sm:$0xf]
  %v609 = vld [vmem:[%s6 + $0x3c] sm:$0xf]
  %v610 = vld [vmem:[%s7] sm:$0xf]
  %v611 = vld [vmem:[%s7 + $0x4] sm:$0xf]
  %v612 = vld [vmem:[%s7 + $0x8] sm:$0xf]
  %v613 = vld [vmem:[%s7 + $0xc] sm:$0xf]
  %v614 = vld [vmem:[%s7 + $0x10] sm:$0xf]
  %v615 = vld [vmem:[%s7 + $0x14] sm:$0xf]
  %v616 = vld [vmem:[%s7 + $0x18] sm:$0xf]
  %v617 = vld [vmem:[%s7 + $0x1c] sm:$0xf]
  %v618 = vld [vmem:[%s7 + $0x20] sm:$0xf]
  %v619 = vld [vmem:[%s7 + $0x24] sm:$0xf]
  %v620 = vld [vmem:[%s7 + $0x28] sm:$0xf]
  %v621 = vld [vmem:[%s7 + $0x2c] sm:$0xf]
  %v622 = vld [vmem:[%s7 + $0x30] sm:$0xf]
  %v623 = vld [vmem:[%s7 + $0x34] sm:$0xf]
  %v624 = vld [vmem:[%s7 + $0x38] sm:$0xf]
  %v625 = vld [vmem:[%s7 + $0x3c] sm:$0xf]
  %v642 = vunpack.c.l.b16 %v610
  %v643 = vunpack.c.l.b16 %v611
  %v644 = vunpack.c.l.b16 %v612
  %v645 = vunpack.c.l.b16 %v613
  %v646 = vunpack.c.l.b16 %v614
  %v647 = vunpack.c.l.b16 %v615
  %v648 = vunpack.c.l.b16 %v616
  %v649 = vunpack.c.l.b16 %v617
  %v650 = vunpack.c.l.b16 %v618
  %v651 = vunpack.c.l.b16 %v619
  %v652 = vunpack.c.l.b16 %v620
  %v653 = vunpack.c.l.b16 %v621
  %v654 = vunpack.c.l.b16 %v622
  %v655 = vunpack.c.l.b16 %v623
  %v656 = vunpack.c.l.b16 %v624
  %v657 = vunpack.c.l.b16 %v625
  %v658 = vpack.c.b16 %v643, %v642
  %v659 = vpack.c.b16 %v645, %v644
  %v660 = vpack.c.b16 %v647, %v646
  %v661 = vpack.c.b16 %v649, %v648
  %v662 = vpack.c.b16 %v651, %v650
  %v663 = vpack.c.b16 %v653, %v652
  %v664 = vpack.c.b16 %v655, %v654
  %v665 = vpack.c.b16 %v657, %v656
  %674 = vmatprep.subr.bf16.mxu0 0
  %675 = vmatpush1.bf16.msra.mxu0 %v658
  %676 = vmatprep.subr.bf16.mxu0 0
  %677 = vmatpush1.bf16.msra.mxu0 %v659
  %678 = vmatprep.subr.bf16.mxu0 0
  %679 = vmatpush1.bf16.msra.mxu0 %v660
  %680 = vmatprep.subr.bf16.mxu0 0
  %681 = vmatpush1.bf16.msra.mxu0 %v661
  %682 = vmatprep.subr.bf16.mxu0 0
  %683 = vmatpush1.bf16.msra.mxu0 %v662
  %684 = vmatprep.subr.bf16.mxu0 0
  %685 = vmatpush1.bf16.msra.mxu0 %v663
  %686 = vmatprep.subr.bf16.mxu0 0
  %687 = vmatpush1.bf16.msra.mxu0 %v664
  %688 = vmatprep.subr.bf16.mxu0 0
  %689 = vmatpush1.bf16.msra.mxu0 %v665
  %690 = vmatprep.subr.bf16.mxu0 0
  %691 = vmatpush1.bf16.msra.mxu0 0
  %692 = vmatprep.subr.bf16.mxu0 0
  %693 = vmatpush1.bf16.msra.mxu0 0
  %694 = vmatprep.subr.bf16.mxu0 0
  %695 = vmatpush1.bf16.msra.mxu0 0
  %696 = vmatprep.subr.bf16.mxu0 0
  %697 = vmatpush1.bf16.msra.mxu0 0
  %698 = vmatprep.subr.bf16.mxu0 0
  %699 = vmatpush1.bf16.msra.mxu0 0
  %700 = vmatprep.subr.bf16.mxu0 0
  %701 = vmatpush1.bf16.msra.mxu0 0
  %702 = vmatprep.subr.bf16.mxu0 0
  %703 = vmatpush1.bf16.msra.mxu0 0
  %704 = vmatprep.subr.bf16.mxu0 0
  %705 = vmatpush1.bf16.msra.mxu0 0
  %706 = vmatprep.mubr.bf16.mxu0 0
  %707 = vmatmul.mubr.bf16.gmra.mrb[0].mxu0 %v268
  %v708 = vpop.f32.mrb[0].mxu0
  %v709 = vadd.f32 0.0, %v708
  %v710 = vpop.f32.mrb[0].mxu0
  %v711 = vpop.f32.mrb[0].mxu0
  %v712 = vadd.f32 0.0, %v711
  %v713 = vpop.f32.mrb[0].mxu0
  %714 = vmatprep.mubr.bf16.mxu0 0
  %715 = vmatmul.mubr.bf16.gmra.mrb[0].mxu0 %v269
  %v716 = vpop.f32.mrb[0].mxu0
  %v717 = vadd.f32 0.0, %v716
  %v718 = vpop.f32.mrb[0].mxu0
  %v719 = vpop.f32.mrb[0].mxu0
  %v720 = vadd.f32 0.0, %v719
  %v721 = vpop.f32.mrb[0].mxu0
  %722 = vmatprep.mubr.bf16.mxu0 0
  %723 = vmatmul.mubr.bf16.gmra.mrb[0].mxu0 %v270
  %v724 = vpop.f32.mrb[0].mxu0
  %v725 = vadd.f32 0.0, %v724
  %v726 = vpop.f32.mrb[0].mxu0
  %v727 = vpop.f32.mrb[0].mxu0
  %v728 = vadd.f32 0.0, %v727
  %v729 = vpop.f32.mrb[0].mxu0
  %730 = vmatprep.mubr.bf16.mxu0 0
  %731 = vmatmul.mubr.bf16.gmra.mrb[0].mxu0 %v271
  %v732 = vpop.f32.mrb[0].mxu0
  %v733 = vadd.f32 0.0, %v732
  %v734 = vpop.f32.mrb[0].mxu0
  %v735 = vpop.f32.mrb[0].mxu0
  %v736 = vadd.f32 0.0, %v735
  %v737 = vpop.f32.mrb[0].mxu0
  %738 = vmatprep.mubr.bf16.mxu0 0
  %739 = vmatmul.mubr.bf16.gmra.mrb[0].mxu0 %v272
  %v740 = vpop.f32.mrb[0].mxu0
  %v741 = vadd.f32 0.0, %v740
  %v742 = vpop.f32.mrb[0].mxu0
  %v743 = vpop.f32.mrb[0].mxu0
  %v744 = vadd.f32 0.0, %v743
  %v745 = vpop.f32.mrb[0].mxu0
  %746 = vmatprep.mubr.bf16.mxu0 0
  %747 = vmatmul.mubr.bf16.gmra.mrb[0].mxu0 %v273
  %v748 = vpop.f32.mrb[0].mxu0
  %v749 = vadd.f32 0.0, %v748
  %v750 = vpop.f32.mrb[0].mxu0
  %v751 = vpop.f32.mrb[0].mxu0
  %v752 = vadd.f32 0.0, %v751
  %v753 = vpop.f32.mrb[0].mxu0
  %754 = vmatprep.mubr.bf16.mxu0 0
  %755 = vmatmul.mubr.bf16.gmra.mrb[0].mxu0 %v274
  %v756 = vpop.f32.mrb[0].mxu0
  %v757 = vadd.f32 0.0, %v756
  %v758 = vpop.f32.mrb[0].mxu0
  %v759 = vpop.f32.mrb[0].mxu0
  %v760 = vadd.f32 0.0, %v759
  %v761 = vpop.f32.mrb[0].mxu0
  %762 = vmatprep.mubr.bf16.mxu0 0
  %763 = vmatmul.mubr.bf16.gmra.mrb[0].mxu0 %v275
  %v764 = vpop.f32.mrb[0].mxu0
  %v765 = vadd.f32 0.0, %v764
  %v766 = vpop.f32.mrb[0].mxu0
  %v767 = vpop.f32.mrb[0].mxu0
  %v768 = vadd.f32 0.0, %v767
  %v769 = vpop.f32.mrb[0].mxu0
  %770 = vdwg.mxu0
  %v787 = vunpack.c.l.b16 %v594
  %v788 = vunpack.c.l.b16 %v595
  %v789 = vunpack.c.l.b16 %v596
  %v790 = vunpack.c.l.b16 %v597
  %v791 = vunpack.c.l.b16 %v598
  %v792 = vunpack.c.l.b16 %v599
  %v793 = vunpack.c.l.b16 %v600
  %v794 = vunpack.c.l.b16 %v601
  %v795 = vunpack.c.l.b16 %v602
  %v796 = vunpack.c.l.b16 %v603
  %v797 = vunpack.c.l.b16 %v604
  %v798 = vunpack.c.l.b16 %v605
  %v799 = vunpack.c.l.b16 %v606
  %v800 = vunpack.c.l.b16 %v607
  %v801 = vunpack.c.l.b16 %v608
  %v802 = vunpack.c.l.b16 %v609
  %v803 = vpack.c.b16 %v788, %v787
  %v804 = vpack.c.b16 %v790, %v789
  %v805 = vpack.c.b16 %v792, %v791
  %v806 = vpack.c.b16 %v794, %v793
  %v807 = vpack.c.b16 %v796, %v795
  %v808 = vpack.c.b16 %v798, %v797
  %v809 = vpack.c.b16 %v800, %v799
  %v810 = vpack.c.b16 %v802, %v801
  %819 = vmatprep.subr.bf16.mxu0 0
  %820 = vmatpush1.bf16.msra.mxu0 %v803
  %821 = vmatprep.subr.bf16.mxu0 0
  %822 = vmatpush1.bf16.msra.mxu0 %v804
  %823 = vmatprep.subr.bf16.mxu0 0
  %824 = vmatpush1.bf16.msra.mxu0 %v805
  %825 = vmatprep.subr.bf16.mxu0 0
  %826 = vmatpush1.bf16.msra.mxu0 %v806
  %827 = vmatprep.subr.bf16.mxu0 0
  %828 = vmatpush1.bf16.msra.mxu0 %v807
  %829 = vmatprep.subr.bf16.mxu0 0
  %830 = vmatpush1.bf16.msra.mxu0 %v808
  %831 = vmatprep.subr.bf16.mxu0 0
  %832 = vmatpush1.bf16.msra.mxu0 %v809
  %833 = vmatprep.subr.bf16.mxu0 0
  %834 = vmatpush1.bf16.msra.mxu0 %v810
  %835 = vmatprep.subr.bf16.mxu0 0
  %836 = vmatpush1.bf16.msra.mxu0 0
  %837 = vmatprep.subr.bf16.mxu0 0
  %838 = vmatpush1.bf16.msra.mxu0 0
  %839 = vmatprep.subr.bf16.mxu0 0
  %840 = vmatpush1.bf16.msra.mxu0 0
  %841 = vmatprep.subr.bf16.mxu0 0
  %842 = vmatpush1.bf16.msra.mxu0 0
  %843 = vmatprep.subr.bf16.mxu0 0
  %844 = vmatpush1.bf16.msra.mxu0 0
  %845 = vmatprep.subr.bf16.mxu0 0
  %846 = vmatpush1.bf16.msra.mxu0 0
  %847 = vmatprep.subr.bf16.mxu0 0
  %848 = vmatpush1.bf16.msra.mxu0 0
  %849 = vmatprep.subr.bf16.mxu0 0
  %850 = vmatpush1.bf16.msra.mxu0 0
  %851 = vmatprep.mubr.bf16.mxu0 0
  %852 = vmatmul.mubr.bf16.gmra.mrb[0].mxu0 %v108
  %v853 = vpop.f32.mrb[0].mxu0
  %v854 = vadd.f32 %v709, %v853
  %v855 = vpop.f32.mrb[0].mxu0
  %v856 = vpop.f32.mrb[0].mxu0
  %v857 = vadd.f32 %v712, %v856
  %v858 = vpop.f32.mrb[0].mxu0
  %859 = vmatprep.mubr.bf16.mxu0 0
  %860 = vmatmul.mubr.bf16.gmra.mrb[0].mxu0 %v109
  %v861 = vpop.f32.mrb[0].mxu0
  %v862 = vadd.f32 %v717, %v861
  %v863 = vpop.f32.mrb[0].mxu0
  %v864 = vpop.f32.mrb[0].mxu0
  %v865 = vadd.f32 %v720, %v864
  %v866 = vpop.f32.mrb[0].mxu0
  %867 = vmatprep.mubr.bf16.mxu0 0
  %868 = vmatmul.mubr.bf16.gmra.mrb[0].mxu0 %v110
  %v869 = vpop.f32.mrb[0].mxu0
  %v870 = vadd.f32 %v725, %v869
  %v871 = vpop.f32.mrb[0].mxu0
  %v872 = vpop.f32.mrb[0].mxu0
  %v873 = vadd.f32 %v728, %v872
  %v874 = vpop.f32.mrb[0].mxu0
  %875 = vmatprep.mubr.bf16.mxu0 0
  %876 = vmatmul.mubr.bf16.gmra.mrb[0].mxu0 %v111
  %v877 = vpop.f32.mrb[0].mxu0
  %v878 = vadd.f32 %v733, %v877
  %v879 = vpop.f32.mrb[0].mxu0
  %v880 = vpop.f32.mrb[0].mxu0
  %v881 = vadd.f32 %v736, %v880
  %v882 = vpop.f32.mrb[0].mxu0
  %883 = vmatprep.mubr.bf16.mxu0 0
  %884 = vmatmul.mubr.bf16.gmra.mrb[0].mxu0 %v112
  %v885 = vpop.f32.mrb[0].mxu0
  %v886 = vadd.f32 %v741, %v885
  %v887 = vpop.f32.mrb[0].mxu0
  %v888 = vpop.f32.mrb[0].mxu0
  %v889 = vadd.f32 %v744, %v888
  %v890 = vpop.f32.mrb[0].mxu0
  %891 = vmatprep.mubr.bf16.mxu0 0
  %892 = vmatmul.mubr.bf16.gmra.mrb[0].mxu0 %v113
  %v893 = vpop.f32.mrb[0].mxu0
  %v894 = vadd.f32 %v749, %v893
  %v895 = vpop.f32.mrb[0].mxu0
  %v896 = vpop.f32.mrb[0].mxu0
  %v897 = vadd.f32 %v752, %v896
  %v898 = vpop.f32.mrb[0].mxu0
  %899 = vmatprep.mubr.bf16.mxu0 0
  %900 = vmatmul.mubr.bf16.gmra.mrb[0].mxu0 %v114
  %v901 = vpop.f32.mrb[0].mxu0
  %v902 = vadd.f32 %v757, %v901
  %v903 = vpop.f32.mrb[0].mxu0
  %v904 = vpop.f32.mrb[0].mxu0
  %v905 = vadd.f32 %v760, %v904
  %v906 = vpop.f32.mrb[0].mxu0
  %907 = vmatprep.mubr.bf16.mxu0 0
  %908 = vmatmul.mubr.bf16.gmra.mrb[0].mxu0 %v115
  %v909 = vpop.f32.mrb[0].mxu0
  %v910 = vadd.f32 %v765, %v909
  %v911 = vpop.f32.mrb[0].mxu0
  %v912 = vpop.f32.mrb[0].mxu0
  %v913 = vadd.f32 %v768, %v912
  %v914 = vpop.f32.mrb[0].mxu0
  %915 = vdwg.mxu0
  %v916 = vlaneseq
  %v917 = vshrl.u32 %v916, 7
  %v918 = vsub.s32 0, %v917
  %v919 = vrot.slane %v35, %v918
  %v920 = vadd.f32 %v854, %v919
  %v921 = vadd.f32 %v857, %v919
  %v922 = vadd.f32 %v862, %v919
  %v923 = vadd.f32 %v865, %v919
  %v924 = vadd.f32 %v870, %v919
  %v925 = vadd.f32 %v873, %v919
  %v926 = vadd.f32 %v878, %v919
  %v927 = vadd.f32 %v881, %v919
  %v928 = vadd.f32 %v886, %v919
  %v929 = vadd.f32 %v889, %v919
  %v930 = vadd.f32 %v894, %v919
  %v931 = vadd.f32 %v897, %v919
  %v932 = vadd.f32 %v902, %v919
  %v933 = vadd.f32 %v905, %v919
  %v934 = vadd.f32 %v910, %v919
  %v935 = vadd.f32 %v913, %v919
  %v936 = vxor.u32 %v578, 2147483648
  %v937 = vxor.u32 %v579, 2147483648
  %v938 = vxor.u32 %v580, 2147483648
  %v939 = vxor.u32 %v581, 2147483648
  %v940 = vxor.u32 %v582, 2147483648
  %v941 = vxor.u32 %v583, 2147483648
  %v942 = vxor.u32 %v584, 2147483648
  %v943 = vxor.u32 %v585, 2147483648
  %v944 = vxor.u32 %v586, 2147483648
  %v945 = vxor.u32 %v587, 2147483648
  %v946 = vxor.u32 %v588, 2147483648
  %v947 = vxor.u32 %v589, 2147483648
  %v948 = vxor.u32 %v590, 2147483648
  %v949 = vxor.u32 %v591, 2147483648
  %v950 = vxor.u32 %v592, 2147483648
  %v951 = vxor.u32 %v593, 2147483648
  %v952 = vmul.f32 %v936, 1.442695
  %v953 = vpow.pop %v952
  %v954 = vmul.f32 %v937, 1.442695
  %v955 = vpow.pop %v954
  %v956 = vmul.f32 %v938, 1.442695
  %v957 = vpow.pop %v956
  %v958 = vmul.f32 %v939, 1.442695
  %v959 = vpow.pop %v958
  %v960 = vmul.f32 %v940, 1.442695
  %v961 = vpow.pop %v960
  %v962 = vmul.f32 %v941, 1.442695
  %v963 = vpow.pop %v962
  %v964 = vmul.f32 %v942, 1.442695
  %v965 = vpow.pop %v964
  %v966 = vmul.f32 %v943, 1.442695
  %v967 = vpow.pop %v966
  %v968 = vmul.f32 %v944, 1.442695
  %v969 = vpow.pop %v968
  %v970 = vmul.f32 %v945, 1.442695
  %v971 = vpow.pop %v970
  %v972 = vmul.f32 %v946, 1.442695
  %v973 = vpow.pop %v972
  %v974 = vmul.f32 %v947, 1.442695
  %v975 = vpow.pop %v974
  %v976 = vmul.f32 %v948, 1.442695
  %v977 = vpow.pop %v976
  %v978 = vmul.f32 %v949, 1.442695
  %v979 = vpow.pop %v978
  %v980 = vmul.f32 %v950, 1.442695
  %v981 = vpow.pop %v980
  %v982 = vmul.f32 %v951, 1.442695
  %v983 = vpow.pop %v982
  %v984 = vadd.f32 %v953, 1.0
  %v985 = vadd.f32 %v955, 1.0
  %v986 = vadd.f32 %v957, 1.0
  %v987 = vadd.f32 %v959, 1.0
  %v988 = vadd.f32 %v961, 1.0
  %v989 = vadd.f32 %v963, 1.0
  %v990 = vadd.f32 %v965, 1.0
  %v991 = vadd.f32 %v967, 1.0
  %v992 = vadd.f32 %v969, 1.0
  %v993 = vadd.f32 %v971, 1.0
  %v994 = vadd.f32 %v973, 1.0
  %v995 = vadd.f32 %v975, 1.0
  %v996 = vadd.f32 %v977, 1.0
  %v997 = vadd.f32 %v979, 1.0
  %v998 = vadd.f32 %v981, 1.0
  %v999 = vadd.f32 %v983, 1.0
  %v1000 = vrcp.pop %v984
  %v1001 = vmul.f32 1.0, %v1000
  %v1002 = vrcp.pop %v985
  %v1003 = vmul.f32 1.0, %v1002
  %v1004 = vrcp.pop %v986
  %v1005 = vmul.f32 1.0, %v1004
  %v1006 = vrcp.pop %v987
  %v1007 = vmul.f32 1.0, %v1006
  %v1008 = vrcp.pop %v988
  %v1009 = vmul.f32 1.0, %v1008
  %v1010 = vrcp.pop %v989
  %v1011 = vmul.f32 1.0, %v1010
  %v1012 = vrcp.pop %v990
  %v1013 = vmul.f32 1.0, %v1012
  %v1014 = vrcp.pop %v991
  %v1015 = vmul.f32 1.0, %v1014
  %v1016 = vrcp.pop %v992
  %v1017 = vmul.f32 1.0, %v1016
  %v1018 = vrcp.pop %v993
  %v1019 = vmul.f32 1.0, %v1018
  %v1020 = vrcp.pop %v994
  %v1021 = vmul.f32 1.0, %v1020
  %v1022 = vrcp.pop %v995
  %v1023 = vmul.f32 1.0, %v1022
  %v1024 = vrcp.pop %v996
  %v1025 = vmul.f32 1.0, %v1024
  %v1026 = vrcp.pop %v997
  %v1027 = vmul.f32 1.0, %v1026
  %v1028 = vrcp.pop %v998
  %v1029 = vmul.f32 1.0, %v1028
  %v1030 = vrcp.pop %v999
  %v1031 = vmul.f32 1.0, %v1030
  %v1032 = vtanh.pop %v920
  %v1033 = vtanh.pop %v921
  %v1034 = vtanh.pop %v922
  %v1035 = vtanh.pop %v923
  %v1036 = vtanh.pop %v924
  %v1037 = vtanh.pop %v925
  %v1038 = vtanh.pop %v926
  %v1039 = vtanh.pop %v927
  %v1040 = vtanh.pop %v928
  %v1041 = vtanh.pop %v929
  %v1042 = vtanh.pop %v930
  %v1043 = vtanh.pop %v931
  %v1044 = vtanh.pop %v932
  %v1045 = vtanh.pop %v933
  %v1046 = vtanh.pop %v934
  %v1047 = vtanh.pop %v935
  %v1048 = vmul.f32 %v1001, %v1032
  %v1049 = vmul.f32 %v1003, %v1033
  %v1050 = vmul.f32 %v1005, %v1034
  %v1051 = vmul.f32 %v1007, %v1035
  %v1052 = vmul.f32 %v1009, %v1036
  %v1053 = vmul.f32 %v1011, %v1037
  %v1054 = vmul.f32 %v1013, %v1038
  %v1055 = vmul.f32 %v1015, %v1039
  %v1056 = vmul.f32 %v1017, %v1040
  %v1057 = vmul.f32 %v1019, %v1041
  %v1058 = vmul.f32 %v1021, %v1042
  %v1059 = vmul.f32 %v1023, %v1043
  %v1060 = vmul.f32 %v1025, %v1044
  %v1061 = vmul.f32 %v1027, %v1045
  %v1062 = vmul.f32 %v1029, %v1046
  %v1063 = vmul.f32 %v1031, %v1047
  %v1064 = vld [vmem:[%s2] sm:$0x1]
  %v1065 = vpack.c.bf16 %v1049, %v1048
  %v1066 = vpack.c.bf16 %v1051, %v1050
  %v1067 = vpack.c.bf16 %v1053, %v1052
  %v1068 = vpack.c.bf16 %v1055, %v1054
  %v1069 = vpack.c.bf16 %v1057, %v1056
  %v1070 = vpack.c.bf16 %v1059, %v1058
  %v1071 = vpack.c.bf16 %v1061, %v1060
  %v1072 = vpack.c.bf16 %v1063, %v1062
  %1073 = vmatprep.subr.bf16.mxu0 0
  %1074 = vmatpush1.bf16.msra.mxu0 %v1065
  %1075 = vmatprep.subr.bf16.mxu0 0
  %1076 = vmatpush1.bf16.msra.mxu0 %v1066
  %1077 = vmatprep.subr.bf16.mxu0 0
  %1078 = vmatpush1.bf16.msra.mxu0 %v1067
  %1079 = vmatprep.subr.bf16.mxu0 0
  %1080 = vmatpush1.bf16.msra.mxu0 %v1068
  %1081 = vmatprep.subr.bf16.mxu0 0
  %1082 = vmatpush1.bf16.msra.mxu0 %v1069
  %1083 = vmatprep.subr.bf16.mxu0 0
  %1084 = vmatpush1.bf16.msra.mxu0 %v1070
  %1085 = vmatprep.subr.bf16.mxu0 0
  %1086 = vmatpush1.bf16.msra.mxu0 %v1071
  %1087 = vmatprep.subr.bf16.mxu0 0
  %1088 = vmatpush1.bf16.msra.mxu0 %v1072
  %1089 = vmatprep.subr.bf16.mxu0 0
  %1090 = vmatpush1.bf16.msra.mxu0 0
  %1091 = vmatprep.subr.bf16.mxu0 0
  %1092 = vmatpush1.bf16.msra.mxu0 0
  %1093 = vmatprep.subr.bf16.mxu0 0
  %1094 = vmatpush1.bf16.msra.mxu0 0
  %1095 = vmatprep.subr.bf16.mxu0 0
  %1096 = vmatpush1.bf16.msra.mxu0 0
  %1097 = vmatprep.subr.bf16.mxu0 0
  %1098 = vmatpush1.bf16.msra.mxu0 0
  %1099 = vmatprep.subr.bf16.mxu0 0
  %1100 = vmatpush1.bf16.msra.mxu0 0
  %1101 = vmatprep.subr.bf16.mxu0 0
  %1102 = vmatpush1.bf16.msra.mxu0 0
  %1103 = vmatprep.subr.bf16.mxu0 0
  %1104 = vmatpush1.bf16.msra.mxu0 0
  %1105 = vmatprep.mubr.bf16.mxu0 0
  %1106 = vmatmul.mubr.bf16.gmra.mrb[0].mxu0 %v1064
  %v1107 = vpop.f32.mrb[0].mxu0
  %v1108 = vadd.f32 0.0, %v1107
  %v1109 = vpop.f32.mrb[0].mxu0
  %v1110 = vpop.f32.mrb[0].mxu0
  %v1111 = vpop.f32.mrb[0].mxu0
  %1112 = vdwg.mxu0
  %1113 = vst [vmem:[%s9] sm:$0x3] %v1108
  // Predicated region
  $region34: #{gnn_dir2_encoder_forward.5} parent=0 // pred_check
    _
  $region35: #{gnn_dir2_encoder_forward.5} parent=0 // pred_check_branch
    %1115 = sbr.rel (0) target = $region37
  $region36: #{gnn_dir2_encoder_forward.5} parent=0 // pred_region
    _
  $region37: #{gnn_dir2_encoder_forward.5} parent=0 // pred_fallthru
    _
  // Predicated region
  $region38: #{gnn_dir2_encoder_forward.5} parent=0 // pred_check
    _
  $region39: #{gnn_dir2_encoder_forward.5} parent=0 // pred_check_branch
    %1117 = sbr.rel (0) target = $region41
  $region40: #{gnn_dir2_encoder_forward.5} parent=0 // pred_region
    _
  $region41: #{gnn_dir2_encoder_forward.5} parent=0 // pred_fallthru
    _
  // Predicated region
  $region42: #{gnn_dir2_encoder_forward.5} parent=0 // pred_check
    _
  $region43: #{gnn_dir2_encoder_forward.5} parent=0 // pred_check_branch
    %1119 = sbr.rel (0) target = $region45
  $region44: #{gnn_dir2_encoder_forward.5} parent=0 // pred_region
    _
  $region45: #{gnn_dir2_encoder_forward.5} parent=0 // pred_fallthru
    _
  // Predicated region
  $region46: #{gnn_dir2_encoder_forward.5} parent=0 // pred_check
    _
  $region47: #{gnn_dir2_encoder_forward.5} parent=0 // pred_check_branch
    %1121 = sbr.rel (0) target = $region49
  $region48: #{gnn_dir2_encoder_forward.5} parent=0 // pred_region
    _
  $region49: #{gnn_dir2_encoder_forward.5} parent=0 // pred_fallthru
    _

// kernel: gnn_dir2_encoder_forward.6
$region0: #{gnn_dir2_encoder_forward.6}
  #allocation0 [shape = 'u32[]', space=smem, size = 0x4, offset = 0x4, fixed_abs, tag = 'smem constant byte address 0x4 - core index']
  #allocation1 [shape = 'u32[144,128]{1,0:T(1,128)}', space=vmem, size = 0x12000, scoped, tag = 'internal scratch']
  %s0 = inlined_call_operand.vmem [shape: f32[2,128], index: 0, kind: input, shape index: {}]
  %s1 = inlined_call_operand.vmem [shape: bf16[128,128], index: 1, kind: input, shape index: {}]
  %s2 = inlined_call_operand.vmem [shape: bf16[128,128], index: 2, kind: input, shape index: {}]
  %s3 = inlined_call_operand.vmem [shape: f32[8,128], index: 3, kind: input, shape index: {}]
  %s4 = inlined_call_operand.hbm [shape: f32[2,128], index: 4, kind: output, shape index: {0}]
  %s5 = inlined_call_operand.hbm [shape: f32[2,128], index: 5, kind: output, shape index: {1}]
  %6 = xla_tuple %s4, %s5
  %s7 = sld [smem:[#allocation0]]
  $region34: #{gnn_dir2_encoder_forward.6} parent=0
    _
  %s9 = ssub.s32 1, %s7
  %s10 = scalar_select 0, %s9, %s7
  $region1: #{gnn_dir2_encoder_forward.6} parent=0
    #allocation2 [shape = 'u8[1024]{0}', space=vmem, size = 0x400, scoped, tag = 'output window, operand 0, single buffered']
    #allocation3 [shape = 's32[1]{0}', space=sflag, size = 0x4, scoped, tag = 'scoped memory for gnn_dir2_encoder_forward.6']
    #allocation4 [shape = 'u8[1024]{0}', space=vmem, size = 0x400, scoped, tag = 'output window, operand 1, single buffered']
    #allocation5 [shape = 's32[1]{0}', space=sflag, size = 0x4, scoped, tag = 'scoped memory for gnn_dir2_encoder_forward.6']
    %11 = vsyncpa [#allocation3], 0
    %12 = vsyncpa [#allocation5], 0
    // Predicated region
    $region2: #{gnn_dir2_encoder_forward.6} parent=1 // pred_check
      _
    $region3: #{gnn_dir2_encoder_forward.6} parent=1 // pred_check_branch
      %14 = sbr.rel (0) target = $region5
    $region4: #{gnn_dir2_encoder_forward.6} parent=1 // pred_region
      _
    $region5: #{gnn_dir2_encoder_forward.6} parent=1 // pred_fallthru
      _
    // Predicated region
    $region6: #{gnn_dir2_encoder_forward.6} parent=1 // pred_check
      _
    $region7: #{gnn_dir2_encoder_forward.6} parent=1 // pred_check_branch
      %16 = sbr.rel (0) target = $region9
    $region8: #{gnn_dir2_encoder_forward.6} parent=1 // pred_region
      _
    $region9: #{gnn_dir2_encoder_forward.6} parent=1 // pred_fallthru
      _
    // Predicated region
    $region10: #{gnn_dir2_encoder_forward.6} parent=1 // pred_check
      _
    $region11: #{gnn_dir2_encoder_forward.6} parent=1 // pred_check_branch
      %18 = sbr.rel (0) target = $region13
    $region12: #{gnn_dir2_encoder_forward.6} parent=1 // pred_region
      _
    $region13: #{gnn_dir2_encoder_forward.6} parent=1 // pred_fallthru
      _
    // Predicated region
    $region14: #{gnn_dir2_encoder_forward.6} parent=1 // pred_check
      _
    $region15: #{gnn_dir2_encoder_forward.6} parent=1 // pred_check_branch
      %20 = sbr.rel (0) target = $region17
    $region16: #{gnn_dir2_encoder_forward.6} parent=1 // pred_region
      _
    $region17: #{gnn_dir2_encoder_forward.6} parent=1 // pred_fallthru
      _
    %v22 = vld [vmem:[%s0] sm:$0x3]
    %v23 = vpack.c.bf16 %v22, %v22
    %v24 = vld [vmem:[%s3] sm:$0x1]
    %v25 = vld [vmem:[%s3 + $0x1] sm:$0x1]
    %v26 = vld [vmem:[%s3 + $0x2] sm:$0x1]
    %v27 = vld [vmem:[%s1] sm:$0xf]
    %v28 = vld [vmem:[%s1 + $0x4] sm:$0xf]
    %v29 = vld [vmem:[%s1 + $0x8] sm:$0xf]
    %v30 = vld [vmem:[%s1 + $0xc] sm:$0xf]
    %v31 = vld [vmem:[%s1 + $0x10] sm:$0xf]
    %v32 = vld [vmem:[%s1 + $0x14] sm:$0xf]
    %v33 = vld [vmem:[%s1 + $0x18] sm:$0xf]
    %v34 = vld [vmem:[%s1 + $0x1c] sm:$0xf]
    %v35 = vld [vmem:[%s1 + $0x20] sm:$0xf]
    %v36 = vld [vmem:[%s1 + $0x24] sm:$0xf]
    %v37 = vld [vmem:[%s1 + $0x28] sm:$0xf]
    %v38 = vld [vmem:[%s1 + $0x2c] sm:$0xf]
    %v39 = vld [vmem:[%s1 + $0x30] sm:$0xf]
    %v40 = vld [vmem:[%s1 + $0x34] sm:$0xf]
    %v41 = vld [vmem:[%s1 + $0x38] sm:$0xf]
    %v42 = vld [vmem:[%s1 + $0x3c] sm:$0xf]
    %v43 = vlaneseq
    %v44 = vshrl.u32 %v43, 7
    %v45 = vsub.s32 0, %v44
    %v46 = vrot.slane %v24, %v45
    %v63 = vunpack.c.l.b16 %v27
    %v64 = vunpack.c.l.b16 %v28
    %v65 = vunpack.c.l.b16 %v29
    %v66 = vunpack.c.l.b16 %v30
    %v67 = vunpack.c.l.b16 %v31
    %v68 = vunpack.c.l.b16 %v32
    %v69 = vunpack.c.l.b16 %v33
    %v70 = vunpack.c.l.b16 %v34
    %v71 = vunpack.c.l.b16 %v35
    %v72 = vunpack.c.l.b16 %v36
    %v73 = vunpack.c.l.b16 %v37
    %v74 = vunpack.c.l.b16 %v38
    %v75 = vunpack.c.l.b16 %v39
    %v76 = vunpack.c.l.b16 %v40
    %v77 = vunpack.c.l.b16 %v41
    %v78 = vunpack.c.l.b16 %v42
    %v79 = vpack.c.b16 %v64, %v63
    %v80 = vpack.c.b16 %v66, %v65
    %v81 = vpack.c.b16 %v68, %v67
    %v82 = vpack.c.b16 %v70, %v69
    %v83 = vpack.c.b16 %v72, %v71
    %v84 = vpack.c.b16 %v74, %v73
    %v85 = vpack.c.b16 %v76, %v75
    %v86 = vpack.c.b16 %v78, %v77
    %95 = vmatprep.subr.bf16.mxu0 0
    %96 = vmatpush1.bf16.msra.mxu0 %v79
    %97 = vmatprep.subr.bf16.mxu0 0
    %98 = vmatpush1.bf16.msra.mxu0 %v80
    %99 = vmatprep.subr.bf16.mxu0 0
    %100 = vmatpush1.bf16.msra.mxu0 %v81
    %101 = vmatprep.subr.bf16.mxu0 0
    %102 = vmatpush1.bf16.msra.mxu0 %v82
    %103 = vmatprep.subr.bf16.mxu0 0
    %104 = vmatpush1.bf16.msra.mxu0 %v83
    %105 = vmatprep.subr.bf16.mxu0 0
    %106 = vmatpush1.bf16.msra.mxu0 %v84
    %107 = vmatprep.subr.bf16.mxu0 0
    %108 = vmatpush1.bf16.msra.mxu0 %v85
    %109 = vmatprep.subr.bf16.mxu0 0
    %110 = vmatpush1.bf16.msra.mxu0 %v86
    %111 = vmatprep.subr.bf16.mxu0 0
    %112 = vmatpush1.bf16.msra.mxu0 0
    %113 = vmatprep.subr.bf16.mxu0 0
    %114 = vmatpush1.bf16.msra.mxu0 0
    %115 = vmatprep.subr.bf16.mxu0 0
    %116 = vmatpush1.bf16.msra.mxu0 0
    %117 = vmatprep.subr.bf16.mxu0 0
    %118 = vmatpush1.bf16.msra.mxu0 0
    %119 = vmatprep.subr.bf16.mxu0 0
    %120 = vmatpush1.bf16.msra.mxu0 0
    %121 = vmatprep.subr.bf16.mxu0 0
    %122 = vmatpush1.bf16.msra.mxu0 0
    %123 = vmatprep.subr.bf16.mxu0 0
    %124 = vmatpush1.bf16.msra.mxu0 0
    %125 = vmatprep.subr.bf16.mxu0 0
    %126 = vmatpush1.bf16.msra.mxu0 0
    %127 = vmatprep.mubr.bf16.mxu0 0
    %128 = vmatmul.mubr.bf16.gmra.mrb[0].mxu0 %v23
    %v129 = vpop.f32.mrb[0].mxu0
    %v130 = vadd.f32 %v46, %v129
    %v131 = vpop.f32.mrb[0].mxu0
    %v132 = vpop.f32.mrb[0].mxu0
    %v133 = vpop.f32.mrb[0].mxu0
    %134 = vdwg.mxu0
    %vm135 = vcmask 1041408
    %v136 = vsel %vm135, %v130, 0.0
    %v137 = vrot.slane %v136, 4
    %v138 = vadd.f32 %v136, %v137
    %v139 = vrot.slane %v138, 2
    %v140 = vadd.f32 %v138, %v139
    %v141 = vrot.slane %v140, 1
    %v142 = vadd.f32 %v140, %v141
    %v143 = vrcp.pop 2.0
    %v144 = vmul.f32 %v142, %v143
    %v145 = vsub.f32 %v130, %v144
    %v146 = vmul.f32 %v145, %v145
    %v147 = vsel %vm135, %v146, 0.0
    %v148 = vrot.slane %v147, 4
    %v149 = vadd.f32 %v147, %v148
    %v150 = vrot.slane %v149, 2
    %v151 = vadd.f32 %v149, %v150
    %v152 = vrot.slane %v151, 1
    %v153 = vadd.f32 %v151, %v152
    %v154 = vmul.f32 %v153, %v143
    %v155 = vadd.f32 %v154, 1e-05
    %v156 = vrsqrt.pop %v155
    %v157 = vmul.f32 %v145, %v156
    %v158 = vlaneseq
    %v159 = vshrl.u32 %v158, 7
    %v160 = vsub.s32 0, %v159
    %v161 = vrot.slane %v25, %v160
    %v162 = vadd.f32 %v157, %v161
    %163 = vst [vmem:[#allocation2] sm:$0x3] %v162
    %v164 = vld [vmem:[%s2] sm:$0xf]
    %v165 = vld [vmem:[%s2 + $0x4] sm:$0xf]
    %v166 = vld [vmem:[%s2 + $0x8] sm:$0xf]
    %v167 = vld [vmem:[%s2 + $0xc] sm:$0xf]
    %v168 = vld [vmem:[%s2 + $0x10] sm:$0xf]
    %v169 = vld [vmem:[%s2 + $0x14] sm:$0xf]
    %v170 = vld [vmem:[%s2 + $0x18] sm:$0xf]
    %v171 = vld [vmem:[%s2 + $0x1c] sm:$0xf]
    %v172 = vld [vmem:[%s2 + $0x20] sm:$0xf]
    %v173 = vld [vmem:[%s2 + $0x24] sm:$0xf]
    %v174 = vld [vmem:[%s2 + $0x28] sm:$0xf]
    %v175 = vld [vmem:[%s2 + $0x2c] sm:$0xf]
    %v176 = vld [vmem:[%s2 + $0x30] sm:$0xf]
    %v177 = vld [vmem:[%s2 + $0x34] sm:$0xf]
    %v178 = vld [vmem:[%s2 + $0x38] sm:$0xf]
    %v179 = vld [vmem:[%s2 + $0x3c] sm:$0xf]
    %v180 = vlaneseq
    %v181 = vshrl.u32 %v180, 7
    %v182 = vsub.s32 0, %v181
    %v183 = vrot.slane %v26, %v182
    %v200 = vunpack.c.l.b16 %v164
    %v201 = vunpack.c.l.b16 %v165
    %v202 = vunpack.c.l.b16 %v166
    %v203 = vunpack.c.l.b16 %v167
    %v204 = vunpack.c.l.b16 %v168
    %v205 = vunpack.c.l.b16 %v169
    %v206 = vunpack.c.l.b16 %v170
    %v207 = vunpack.c.l.b16 %v171
    %v208 = vunpack.c.l.b16 %v172
    %v209 = vunpack.c.l.b16 %v173
    %v210 = vunpack.c.l.b16 %v174
    %v211 = vunpack.c.l.b16 %v175
    %v212 = vunpack.c.l.b16 %v176
    %v213 = vunpack.c.l.b16 %v177
    %v214 = vunpack.c.l.b16 %v178
    %v215 = vunpack.c.l.b16 %v179
    %v216 = vpack.c.b16 %v201, %v200
    %v217 = vpack.c.b16 %v203, %v202
    %v218 = vpack.c.b16 %v205, %v204
    %v219 = vpack.c.b16 %v207, %v206
    %v220 = vpack.c.b16 %v209, %v208
    %v221 = vpack.c.b16 %v211, %v210
    %v222 = vpack.c.b16 %v213, %v212
    %v223 = vpack.c.b16 %v215, %v214
    %232 = vmatprep.subr.bf16.mxu0 0
    %233 = vmatpush1.bf16.msra.mxu0 %v216
    %234 = vmatprep.subr.bf16.mxu0 0
    %235 = vmatpush1.bf16.msra.mxu0 %v217
    %236 = vmatprep.subr.bf16.mxu0 0
    %237 = vmatpush1.bf16.msra.mxu0 %v218
    %238 = vmatprep.subr.bf16.mxu0 0
    %239 = vmatpush1.bf16.msra.mxu0 %v219
    %240 = vmatprep.subr.bf16.mxu0 0
    %241 = vmatpush1.bf16.msra.mxu0 %v220
    %242 = vmatprep.subr.bf16.mxu0 0
    %243 = vmatpush1.bf16.msra.mxu0 %v221
    %244 = vmatprep.subr.bf16.mxu0 0
    %245 = vmatpush1.bf16.msra.mxu0 %v222
    %246 = vmatprep.subr.bf16.mxu0 0
    %247 = vmatpush1.bf16.msra.mxu0 %v223
    %248 = vmatprep.subr.bf16.mxu0 0
    %249 = vmatpush1.bf16.msra.mxu0 0
    %250 = vmatprep.subr.bf16.mxu0 0
    %251 = vmatpush1.bf16.msra.mxu0 0
    %252 = vmatprep.subr.bf16.mxu0 0
    %253 = vmatpush1.bf16.msra.mxu0 0
    %254 = vmatprep.subr.bf16.mxu0 0
    %255 = vmatpush1.bf16.msra.mxu0 0
    %256 = vmatprep.subr.bf16.mxu0 0
    %257 = vmatpush1.bf16.msra.mxu0 0
    %258 = vmatprep.subr.bf16.mxu0 0
    %259 = vmatpush1.bf16.msra.mxu0 0
    %260 = vmatprep.subr.bf16.mxu0 0
    %261 = vmatpush1.bf16.msra.mxu0 0
    %262 = vmatprep.subr.bf16.mxu0 0
    %263 = vmatpush1.bf16.msra.mxu0 0
    %264 = vmatprep.mubr.bf16.mxu0 0
    %265 = vmatmul.mubr.bf16.gmra.mrb[0].mxu0 %v23
    %v266 = vpop.f32.mrb[0].mxu0
    %v267 = vadd.f32 %v183, %v266
    %v268 = vpop.f32.mrb[0].mxu0
    %v269 = vpop.f32.mrb[0].mxu0
    %v270 = vpop.f32.mrb[0].mxu0
    %271 = vdwg.mxu0
    %272 = vst [vmem:[#allocation4] sm:$0x3] %v267
    // Predicated region
    $region18: #{gnn_dir2_encoder_forward.6} parent=1 // pred_check
      _
    $region19: #{gnn_dir2_encoder_forward.6} parent=1 // pred_check_branch
      %274 = sbr.rel (0) target = $region21
    $region20: #{gnn_dir2_encoder_forward.6} parent=1 // pred_region
      %s276 = ssub.s32 32, 32
      %277 = vsyncadd [#allocation3], %s276
      %s279 = sshll.u32 [#allocation2], 4
      %s280 = int_to_ptr.vmem [resolvable:$true] %s279
      %282 = dma.vmem_to_hbm [thread:$0]  %s280, 32, %s4, [#allocation3]
    $region21: #{gnn_dir2_encoder_forward.6} parent=1 // pred_fallthru
      _
    // Predicated region
    $region22: #{gnn_dir2_encoder_forward.6} parent=1 // pred_check
      _
    $region23: #{gnn_dir2_encoder_forward.6} parent=1 // pred_check_branch
      %284 = sbr.rel (0) target = $region25
    $region24: #{gnn_dir2_encoder_forward.6} parent=1 // pred_region
      %s286 = ssub.s32 32, 32
      %287 = vsyncadd [#allocation5], %s286
      %s289 = sshll.u32 [#allocation4], 4
      %s290 = int_to_ptr.vmem [resolvable:$true] %s289
      %292 = dma.vmem_to_hbm [thread:$0]  %s290, 32, %s5, [#allocation5]
    $region25: #{gnn_dir2_encoder_forward.6} parent=1 // pred_fallthru
      _
    // Predicated region
    $region26: #{gnn_dir2_encoder_forward.6} parent=1 // pred_check
      _
    $region27: #{gnn_dir2_encoder_forward.6} parent=1 // pred_check_branch
      %294 = sbr.rel (0) target = $region29
    $region28: #{gnn_dir2_encoder_forward.6} parent=1 // pred_region
      %295 = dma.done [#allocation3], 32
    $region29: #{gnn_dir2_encoder_forward.6} parent=1 // pred_fallthru
      _
    // Predicated region
    $region30: #{gnn_dir2_encoder_forward.6} parent=1 // pred_check
      _
    $region31: #{gnn_dir2_encoder_forward.6} parent=1 // pred_check_branch
      %297 = sbr.rel (0) target = $region33
    $region32: #{gnn_dir2_encoder_forward.6} parent=1 // pred_region
      %298 = dma.done [#allocation5], 32
    $region33: #{gnn_dir2_encoder_forward.6} parent=1 // pred_fallthru
      _
    %299 = vsyncpa [#allocation3], 1
    %300 = vsyncpa [#allocation5], 1

// kernel: gnn_dir2_encoder_forward.7
$region0: #{gnn_dir2_encoder_forward.7}
  #allocation0 [shape = 'u32[]', space=smem, size = 0x4, offset = 0x4, fixed_abs, tag = 'smem constant byte address 0x4 - core index']
  #allocation1 [shape = 'u32[144,128]{1,0:T(1,128)}', space=vmem, size = 0x12000, scoped, tag = 'internal scratch']
  %s0 = inlined_call_operand.vmem [shape: bf16[128,128], index: 0, kind: input, shape index: {}]
  %s1 = inlined_call_operand.vmem [shape: bf16[128,128], index: 1, kind: input, shape index: {}]
  %s2 = inlined_call_operand.vmem [shape: bf16[2,128], index: 2, kind: input, shape index: {}]
  %s3 = inlined_call_operand.vmem [shape: bf16[2,128], index: 3, kind: input, shape index: {}]
  %s4 = inlined_call_operand.vmem [shape: bf16[128,128], index: 4, kind: input, shape index: {}]
  %s5 = inlined_call_operand.vmem [shape: bf16[128,128], index: 5, kind: input, shape index: {}]
  %s6 = inlined_call_operand.vmem [shape: bf16[128,128], index: 6, kind: input, shape index: {}]
  %s7 = inlined_call_operand.vmem [shape: f32[1,128], index: 7, kind: input, shape index: {}]
  %s8 = inlined_call_operand.vmem [shape: f32[128,128], index: 8, kind: output, shape index: {}]
  %s9 = sld [smem:[#allocation0]]
  $region42: #{gnn_dir2_encoder_forward.7} parent=0
    _
  %s11 = ssub.s32 1, %s9
  %s12 = scalar_select 0, %s11, %s9
  // Predicated region
  $region2: #{gnn_dir2_encoder_forward.7} parent=0 // pred_check
    _
  $region3: #{gnn_dir2_encoder_forward.7} parent=0 // pred_check_branch
    %14 = sbr.rel (0) target = $region5
  $region4: #{gnn_dir2_encoder_forward.7} parent=0 // pred_region
    _
  $region5: #{gnn_dir2_encoder_forward.7} parent=0 // pred_fallthru
    _
  // Predicated region
  $region6: #{gnn_dir2_encoder_forward.7} parent=0 // pred_check
    _
  $region7: #{gnn_dir2_encoder_forward.7} parent=0 // pred_check_branch
    %16 = sbr.rel (0) target = $region9
  $region8: #{gnn_dir2_encoder_forward.7} parent=0 // pred_region
    _
  $region9: #{gnn_dir2_encoder_forward.7} parent=0 // pred_fallthru
    _
  // Predicated region
  $region10: #{gnn_dir2_encoder_forward.7} parent=0 // pred_check
    _
  $region11: #{gnn_dir2_encoder_forward.7} parent=0 // pred_check_branch
    %18 = sbr.rel (0) target = $region13
  $region12: #{gnn_dir2_encoder_forward.7} parent=0 // pred_region
    _
  $region13: #{gnn_dir2_encoder_forward.7} parent=0 // pred_fallthru
    _
  // Predicated region
  $region14: #{gnn_dir2_encoder_forward.7} parent=0 // pred_check
    _
  $region15: #{gnn_dir2_encoder_forward.7} parent=0 // pred_check_branch
    %20 = sbr.rel (0) target = $region17
  $region16: #{gnn_dir2_encoder_forward.7} parent=0 // pred_region
    _
  $region17: #{gnn_dir2_encoder_forward.7} parent=0 // pred_fallthru
    _
  // Predicated region
  $region18: #{gnn_dir2_encoder_forward.7} parent=0 // pred_check
    _
  $region19: #{gnn_dir2_encoder_forward.7} parent=0 // pred_check_branch
    %22 = sbr.rel (0) target = $region21
  $region20: #{gnn_dir2_encoder_forward.7} parent=0 // pred_region
    _
  $region21: #{gnn_dir2_encoder_forward.7} parent=0 // pred_fallthru
    _
  // Predicated region
  $region22: #{gnn_dir2_encoder_forward.7} parent=0 // pred_check
    _
  $region23: #{gnn_dir2_encoder_forward.7} parent=0 // pred_check_branch
    %24 = sbr.rel (0) target = $region25
  $region24: #{gnn_dir2_encoder_forward.7} parent=0 // pred_region
    _
  $region25: #{gnn_dir2_encoder_forward.7} parent=0 // pred_fallthru
    _
  // Predicated region
  $region26: #{gnn_dir2_encoder_forward.7} parent=0 // pred_check
    _
  $region27: #{gnn_dir2_encoder_forward.7} parent=0 // pred_check_branch
    %26 = sbr.rel (0) target = $region29
  $region28: #{gnn_dir2_encoder_forward.7} parent=0 // pred_region
    _
  $region29: #{gnn_dir2_encoder_forward.7} parent=0 // pred_fallthru
    _
  // Predicated region
  $region30: #{gnn_dir2_encoder_forward.7} parent=0 // pred_check
    _
  $region31: #{gnn_dir2_encoder_forward.7} parent=0 // pred_check_branch
    %28 = sbr.rel (0) target = $region33
  $region32: #{gnn_dir2_encoder_forward.7} parent=0 // pred_region
    _
  $region33: #{gnn_dir2_encoder_forward.7} parent=0 // pred_fallthru
    _
  %v30 = vld [vmem:[%s2] sm:$0x1]
  %v31 = vld [vmem:[%s3] sm:$0x1]
  %32 = vxpose.xlu0.c.b16.start [1/8] %v30, 128
  %33 = vxpose.xlu0.c.b16.cont [2/8] 0, 128
  %34 = vxpose.xlu0.c.b16.cont [3/8] 0, 128
  %35 = vxpose.xlu0.c.b16.cont [4/8] 0, 128
  %36 = vxpose.xlu0.c.b16.cont [5/8] 0, 128
  %37 = vxpose.xlu0.c.b16.cont [6/8] 0, 128
  %38 = vxpose.xlu0.c.b16.cont [7/8] 0, 128
  %39 = vxpose.xlu0.c.b16.end [8/8] 0, 128
  %v40 = vpop.trf.xlu0
  %v41 = vpop.trf.xlu0
  %v42 = vpop.trf.xlu0
  %v43 = vpop.trf.xlu0
  %v44 = vpop.trf.xlu0
  %v45 = vpop.trf.xlu0
  %v46 = vpop.trf.xlu0
  %v47 = vpop.trf.xlu0
  %vm48 = vcmask 15360
  %v50 = vsel %vm48, %v40, 0
  %v53 = vsel %vm48, %v41, 0
  %v56 = vsel %vm48, %v42, 0
  %v59 = vsel %vm48, %v43, 0
  %v62 = vsel %vm48, %v44, 0
  %v65 = vsel %vm48, %v45, 0
  %v68 = vsel %vm48, %v46, 0
  %v71 = vsel %vm48, %v47, 0
  %vm73 = vcmask 1040384
  %v75 = vsel %vm73, %v31, 0
  %77 = vmatprep.subr.bf16.mxu0 0
  %78 = vmatpush1.bf16.msra.mxu0 %v75
  %79 = vmatprep.subr.bf16.mxu0 0
  %80 = vmatpush1.bf16.msra.mxu0 0
  %81 = vmatprep.subr.bf16.mxu0 0
  %82 = vmatpush1.bf16.msra.mxu0 0
  %83 = vmatprep.subr.bf16.mxu0 0
  %84 = vmatpush1.bf16.msra.mxu0 0
  %85 = vmatprep.subr.bf16.mxu0 0
  %86 = vmatpush1.bf16.msra.mxu0 0
  %87 = vmatprep.subr.bf16.mxu0 0
  %88 = vmatpush1.bf16.msra.mxu0 0
  %89 = vmatprep.subr.bf16.mxu0 0
  %90 = vmatpush1.bf16.msra.mxu0 0
  %91 = vmatprep.subr.bf16.mxu0 0
  %92 = vmatpush1.bf16.msra.mxu0 0
  %93 = vmatprep.subr.bf16.mxu0 0
  %94 = vmatpush1.bf16.msra.mxu0 0
  %95 = vmatprep.subr.bf16.mxu0 0
  %96 = vmatpush1.bf16.msra.mxu0 0
  %97 = vmatprep.subr.bf16.mxu0 0
  %98 = vmatpush1.bf16.msra.mxu0 0
  %99 = vmatprep.subr.bf16.mxu0 0
  %100 = vmatpush1.bf16.msra.mxu0 0
  %101 = vmatprep.subr.bf16.mxu0 0
  %102 = vmatpush1.bf16.msra.mxu0 0
  %103 = vmatprep.subr.bf16.mxu0 0
  %104 = vmatpush1.bf16.msra.mxu0 0
  %105 = vmatprep.subr.bf16.mxu0 0
  %106 = vmatpush1.bf16.msra.mxu0 0
  %107 = vmatprep.subr.bf16.mxu0 0
  %108 = vmatpush1.bf16.msra.mxu0 0
  %109 = vmatprep.mubr.bf16.mxu0 0
  %110 = vmatmul.mubr.bf16.gmra.mrb[0].mxu0 %v50
  %v111 = vpop.f32.mrb[0].mxu0
  %v112 = vadd.f32 0.0, %v111
  %v113 = vpop.f32.mrb[0].mxu0
  %v114 = vpop.f32.mrb[0].mxu0
  %v115 = vadd.f32 0.0, %v114
  %v116 = vpop.f32.mrb[0].mxu0
  %117 = vmatprep.mubr.bf16.mxu0 0
  %118 = vmatmul.mubr.bf16.gmra.mrb[0].mxu0 %v53
  %v119 = vpop.f32.mrb[0].mxu0
  %v120 = vadd.f32 0.0, %v119
  %v121 = vpop.f32.mrb[0].mxu0
  %v122 = vpop.f32.mrb[0].mxu0
  %v123 = vadd.f32 0.0, %v122
  %v124 = vpop.f32.mrb[0].mxu0
  %125 = vmatprep.mubr.bf16.mxu0 0
  %126 = vmatmul.mubr.bf16.gmra.mrb[0].mxu0 %v56
  %v127 = vpop.f32.mrb[0].mxu0
  %v128 = vadd.f32 0.0, %v127
  %v129 = vpop.f32.mrb[0].mxu0
  %v130 = vpop.f32.mrb[0].mxu0
  %v131 = vadd.f32 0.0, %v130
  %v132 = vpop.f32.mrb[0].mxu0
  %133 = vmatprep.mubr.bf16.mxu0 0
  %134 = vmatmul.mubr.bf16.gmra.mrb[0].mxu0 %v59
  %v135 = vpop.f32.mrb[0].mxu0
  %v136 = vadd.f32 0.0, %v135
  %v137 = vpop.f32.mrb[0].mxu0
  %v138 = vpop.f32.mrb[0].mxu0
  %v139 = vadd.f32 0.0, %v138
  %v140 = vpop.f32.mrb[0].mxu0
  %141 = vmatprep.mubr.bf16.mxu0 0
  %142 = vmatmul.mubr.bf16.gmra.mrb[0].mxu0 %v62
  %v143 = vpop.f32.mrb[0].mxu0
  %v144 = vadd.f32 0.0, %v143
  %v145 = vpop.f32.mrb[0].mxu0
  %v146 = vpop.f32.mrb[0].mxu0
  %v147 = vadd.f32 0.0, %v146
  %v148 = vpop.f32.mrb[0].mxu0
  %149 = vmatprep.mubr.bf16.mxu0 0
  %150 = vmatmul.mubr.bf16.gmra.mrb[0].mxu0 %v65
  %v151 = vpop.f32.mrb[0].mxu0
  %v152 = vadd.f32 0.0, %v151
  %v153 = vpop.f32.mrb[0].mxu0
  %v154 = vpop.f32.mrb[0].mxu0
  %v155 = vadd.f32 0.0, %v154
  %v156 = vpop.f32.mrb[0].mxu0
  %157 = vmatprep.mubr.bf16.mxu0 0
  %158 = vmatmul.mubr.bf16.gmra.mrb[0].mxu0 %v68
  %v159 = vpop.f32.mrb[0].mxu0
  %v160 = vadd.f32 0.0, %v159
  %v161 = vpop.f32.mrb[0].mxu0
  %v162 = vpop.f32.mrb[0].mxu0
  %v163 = vadd.f32 0.0, %v162
  %v164 = vpop.f32.mrb[0].mxu0
  %165 = vmatprep.mubr.bf16.mxu0 0
  %166 = vmatmul.mubr.bf16.gmra.mrb[0].mxu0 %v71
  %v167 = vpop.f32.mrb[0].mxu0
  %v168 = vadd.f32 0.0, %v167
  %v169 = vpop.f32.mrb[0].mxu0
  %v170 = vpop.f32.mrb[0].mxu0
  %v171 = vadd.f32 0.0, %v170
  %v172 = vpop.f32.mrb[0].mxu0
  %173 = vdwg.mxu0
  %v174 = vld [vmem:[%s0] sm:$0xf]
  %v175 = vld [vmem:[%s0 + $0x4] sm:$0xf]
  %v176 = vld [vmem:[%s0 + $0x8] sm:$0xf]
  %v177 = vld [vmem:[%s0 + $0xc] sm:$0xf]
  %v178 = vld [vmem:[%s0 + $0x10] sm:$0xf]
  %v179 = vld [vmem:[%s0 + $0x14] sm:$0xf]
  %v180 = vld [vmem:[%s0 + $0x18] sm:$0xf]
  %v181 = vld [vmem:[%s0 + $0x1c] sm:$0xf]
  %v182 = vld [vmem:[%s0 + $0x20] sm:$0xf]
  %v183 = vld [vmem:[%s0 + $0x24] sm:$0xf]
  %v184 = vld [vmem:[%s0 + $0x28] sm:$0xf]
  %v185 = vld [vmem:[%s0 + $0x2c] sm:$0xf]
  %v186 = vld [vmem:[%s0 + $0x30] sm:$0xf]
  %v187 = vld [vmem:[%s0 + $0x34] sm:$0xf]
  %v188 = vld [vmem:[%s0 + $0x38] sm:$0xf]
  %v189 = vld [vmem:[%s0 + $0x3c] sm:$0xf]
  %v190 = vld [vmem:[%s4] sm:$0xf]
  %v191 = vld [vmem:[%s4 + $0x4] sm:$0xf]
  %v192 = vld [vmem:[%s4 + $0x8] sm:$0xf]
  %v193 = vld [vmem:[%s4 + $0xc] sm:$0xf]
  %v194 = vld [vmem:[%s4 + $0x10] sm:$0xf]
  %v195 = vld [vmem:[%s4 + $0x14] sm:$0xf]
  %v196 = vld [vmem:[%s4 + $0x18] sm:$0xf]
  %v197 = vld [vmem:[%s4 + $0x1c] sm:$0xf]
  %v198 = vld [vmem:[%s4 + $0x20] sm:$0xf]
  %v199 = vld [vmem:[%s4 + $0x24] sm:$0xf]
  %v200 = vld [vmem:[%s4 + $0x28] sm:$0xf]
  %v201 = vld [vmem:[%s4 + $0x2c] sm:$0xf]
  %v202 = vld [vmem:[%s4 + $0x30] sm:$0xf]
  %v203 = vld [vmem:[%s4 + $0x34] sm:$0xf]
  %v204 = vld [vmem:[%s4 + $0x38] sm:$0xf]
  %v205 = vld [vmem:[%s4 + $0x3c] sm:$0xf]
  %v206 = vld [vmem:[%s1] sm:$0xf]
  %v207 = vld [vmem:[%s1 + $0x4] sm:$0xf]
  %v208 = vld [vmem:[%s1 + $0x8] sm:$0xf]
  %v209 = vld [vmem:[%s1 + $0xc] sm:$0xf]
  %v210 = vld [vmem:[%s1 + $0x10] sm:$0xf]
  %v211 = vld [vmem:[%s1 + $0x14] sm:$0xf]
  %v212 = vld [vmem:[%s1 + $0x18] sm:$0xf]
  %v213 = vld [vmem:[%s1 + $0x1c] sm:$0xf]
  %v214 = vld [vmem:[%s1 + $0x20] sm:$0xf]
  %v215 = vld [vmem:[%s1 + $0x24] sm:$0xf]
  %v216 = vld [vmem:[%s1 + $0x28] sm:$0xf]
  %v217 = vld [vmem:[%s1 + $0x2c] sm:$0xf]
  %v218 = vld [vmem:[%s1 + $0x30] sm:$0xf]
  %v219 = vld [vmem:[%s1 + $0x34] sm:$0xf]
  %v220 = vld [vmem:[%s1 + $0x38] sm:$0xf]
  %v221 = vld [vmem:[%s1 + $0x3c] sm:$0xf]
  %v222 = vld [vmem:[%s5] sm:$0xf]
  %v223 = vld [vmem:[%s5 + $0x4] sm:$0xf]
  %v224 = vld [vmem:[%s5 + $0x8] sm:$0xf]
  %v225 = vld [vmem:[%s5 + $0xc] sm:$0xf]
  %v226 = vld [vmem:[%s5 + $0x10] sm:$0xf]
  %v227 = vld [vmem:[%s5 + $0x14] sm:$0xf]
  %v228 = vld [vmem:[%s5 + $0x18] sm:$0xf]
  %v229 = vld [vmem:[%s5 + $0x1c] sm:$0xf]
  %v230 = vld [vmem:[%s5 + $0x20] sm:$0xf]
  %v231 = vld [vmem:[%s5 + $0x24] sm:$0xf]
  %v232 = vld [vmem:[%s5 + $0x28] sm:$0xf]
  %v233 = vld [vmem:[%s5 + $0x2c] sm:$0xf]
  %v234 = vld [vmem:[%s5 + $0x30] sm:$0xf]
  %v235 = vld [vmem:[%s5 + $0x34] sm:$0xf]
  %v236 = vld [vmem:[%s5 + $0x38] sm:$0xf]
  %v237 = vld [vmem:[%s5 + $0x3c] sm:$0xf]
  %v254 = vunpack.c.l.b16 %v206
  %v255 = vunpack.c.l.b16 %v207
  %v256 = vunpack.c.l.b16 %v208
  %v257 = vunpack.c.l.b16 %v209
  %v258 = vunpack.c.l.b16 %v210
  %v259 = vunpack.c.l.b16 %v211
  %v260 = vunpack.c.l.b16 %v212
  %v261 = vunpack.c.l.b16 %v213
  %v262 = vunpack.c.l.b16 %v214
  %v263 = vunpack.c.l.b16 %v215
  %v264 = vunpack.c.l.b16 %v216
  %v265 = vunpack.c.l.b16 %v217
  %v266 = vunpack.c.l.b16 %v218
  %v267 = vunpack.c.l.b16 %v219
  %v268 = vunpack.c.l.b16 %v220
  %v269 = vunpack.c.l.b16 %v221
  %v270 = vpack.c.b16 %v255, %v254
  %v271 = vpack.c.b16 %v257, %v256
  %v272 = vpack.c.b16 %v259, %v258
  %v273 = vpack.c.b16 %v261, %v260
  %v274 = vpack.c.b16 %v263, %v262
  %v275 = vpack.c.b16 %v265, %v264
  %v276 = vpack.c.b16 %v267, %v266
  %v277 = vpack.c.b16 %v269, %v268
  %v302 = vunpack.c.l.b16 %v222
  %v303 = vunpack.c.l.b16 %v223
  %v304 = vunpack.c.l.b16 %v224
  %v305 = vunpack.c.l.b16 %v225
  %v306 = vunpack.c.l.b16 %v226
  %v307 = vunpack.c.l.b16 %v227
  %v308 = vunpack.c.l.b16 %v228
  %v309 = vunpack.c.l.b16 %v229
  %v310 = vunpack.c.l.b16 %v230
  %v311 = vunpack.c.l.b16 %v231
  %v312 = vunpack.c.l.b16 %v232
  %v313 = vunpack.c.l.b16 %v233
  %v314 = vunpack.c.l.b16 %v234
  %v315 = vunpack.c.l.b16 %v235
  %v316 = vunpack.c.l.b16 %v236
  %v317 = vunpack.c.l.b16 %v237
  %v318 = vpack.c.b16 %v303, %v302
  %v319 = vpack.c.b16 %v305, %v304
  %v320 = vpack.c.b16 %v307, %v306
  %v321 = vpack.c.b16 %v309, %v308
  %v322 = vpack.c.b16 %v311, %v310
  %v323 = vpack.c.b16 %v313, %v312
  %v324 = vpack.c.b16 %v315, %v314
  %v325 = vpack.c.b16 %v317, %v316
  %334 = vmatprep.subr.bf16.mxu0 0
  %335 = vmatpush1.bf16.msra.mxu0 %v318
  %336 = vmatprep.subr.bf16.mxu0 0
  %337 = vmatpush1.bf16.msra.mxu0 %v319
  %338 = vmatprep.subr.bf16.mxu0 0
  %339 = vmatpush1.bf16.msra.mxu0 %v320
  %340 = vmatprep.subr.bf16.mxu0 0
  %341 = vmatpush1.bf16.msra.mxu0 %v321
  %342 = vmatprep.subr.bf16.mxu0 0
  %343 = vmatpush1.bf16.msra.mxu0 %v322
  %344 = vmatprep.subr.bf16.mxu0 0
  %345 = vmatpush1.bf16.msra.mxu0 %v323
  %346 = vmatprep.subr.bf16.mxu0 0
  %347 = vmatpush1.bf16.msra.mxu0 %v324
  %348 = vmatprep.subr.bf16.mxu0 0
  %349 = vmatpush1.bf16.msra.mxu0 %v325
  %350 = vmatprep.subr.bf16.mxu0 0
  %351 = vmatpush1.bf16.msra.mxu0 0
  %352 = vmatprep.subr.bf16.mxu0 0
  %353 = vmatpush1.bf16.msra.mxu0 0
  %354 = vmatprep.subr.bf16.mxu0 0
  %355 = vmatpush1.bf16.msra.mxu0 0
  %356 = vmatprep.subr.bf16.mxu0 0
  %357 = vmatpush1.bf16.msra.mxu0 0
  %358 = vmatprep.subr.bf16.mxu0 0
  %359 = vmatpush1.bf16.msra.mxu0 0
  %360 = vmatprep.subr.bf16.mxu0 0
  %361 = vmatpush1.bf16.msra.mxu0 0
  %362 = vmatprep.subr.bf16.mxu0 0
  %363 = vmatpush1.bf16.msra.mxu0 0
  %364 = vmatprep.subr.bf16.mxu0 0
  %365 = vmatpush1.bf16.msra.mxu0 0
  %366 = vmatprep.mubr.bf16.mxu0 0
  %367 = vmatmul.mubr.bf16.gmra.mrb[0].mxu0 %v270
  %v368 = vpop.f32.mrb[0].mxu0
  %v369 = vadd.f32 0.0, %v368
  %v370 = vpop.f32.mrb[0].mxu0
  %v371 = vpop.f32.mrb[0].mxu0
  %v372 = vadd.f32 0.0, %v371
  %v373 = vpop.f32.mrb[0].mxu0
  %374 = vmatprep.mubr.bf16.mxu0 0
  %375 = vmatmul.mubr.bf16.gmra.mrb[0].mxu0 %v271
  %v376 = vpop.f32.mrb[0].mxu0
  %v377 = vadd.f32 0.0, %v376
  %v378 = vpop.f32.mrb[0].mxu0
  %v379 = vpop.f32.mrb[0].mxu0
  %v380 = vadd.f32 0.0, %v379
  %v381 = vpop.f32.mrb[0].mxu0
  %382 = vmatprep.mubr.bf16.mxu0 0
  %383 = vmatmul.mubr.bf16.gmra.mrb[0].mxu0 %v272
  %v384 = vpop.f32.mrb[0].mxu0
  %v385 = vadd.f32 0.0, %v384
  %v386 = vpop.f32.mrb[0].mxu0
  %v387 = vpop.f32.mrb[0].mxu0
  %v388 = vadd.f32 0.0, %v387
  %v389 = vpop.f32.mrb[0].mxu0
  %390 = vmatprep.mubr.bf16.mxu0 0
  %391 = vmatmul.mubr.bf16.gmra.mrb[0].mxu0 %v273
  %v392 = vpop.f32.mrb[0].mxu0
  %v393 = vadd.f32 0.0, %v392
  %v394 = vpop.f32.mrb[0].mxu0
  %v395 = vpop.f32.mrb[0].mxu0
  %v396 = vadd.f32 0.0, %v395
  %v397 = vpop.f32.mrb[0].mxu0
  %398 = vmatprep.mubr.bf16.mxu0 0
  %399 = vmatmul.mubr.bf16.gmra.mrb[0].mxu0 %v274
  %v400 = vpop.f32.mrb[0].mxu0
  %v401 = vadd.f32 0.0, %v400
  %v402 = vpop.f32.mrb[0].mxu0
  %v403 = vpop.f32.mrb[0].mxu0
  %v404 = vadd.f32 0.0, %v403
  %v405 = vpop.f32.mrb[0].mxu0
  %406 = vmatprep.mubr.bf16.mxu0 0
  %407 = vmatmul.mubr.bf16.gmra.mrb[0].mxu0 %v275
  %v408 = vpop.f32.mrb[0].mxu0
  %v409 = vadd.f32 0.0, %v408
  %v410 = vpop.f32.mrb[0].mxu0
  %v411 = vpop.f32.mrb[0].mxu0
  %v412 = vadd.f32 0.0, %v411
  %v413 = vpop.f32.mrb[0].mxu0
  %414 = vmatprep.mubr.bf16.mxu0 0
  %415 = vmatmul.mubr.bf16.gmra.mrb[0].mxu0 %v276
  %v416 = vpop.f32.mrb[0].mxu0
  %v417 = vadd.f32 0.0, %v416
  %v418 = vpop.f32.mrb[0].mxu0
  %v419 = vpop.f32.mrb[0].mxu0
  %v420 = vadd.f32 0.0, %v419
  %v421 = vpop.f32.mrb[0].mxu0
  %422 = vmatprep.mubr.bf16.mxu0 0
  %423 = vmatmul.mubr.bf16.gmra.mrb[0].mxu0 %v277
  %v424 = vpop.f32.mrb[0].mxu0
  %v425 = vadd.f32 0.0, %v424
  %v426 = vpop.f32.mrb[0].mxu0
  %v427 = vpop.f32.mrb[0].mxu0
  %v428 = vadd.f32 0.0, %v427
  %v429 = vpop.f32.mrb[0].mxu0
  %430 = vdwg.mxu0
  %v447 = vunpack.c.l.b16 %v174
  %v448 = vunpack.c.l.b16 %v175
  %v449 = vunpack.c.l.b16 %v176
  %v450 = vunpack.c.l.b16 %v177
  %v451 = vunpack.c.l.b16 %v178
  %v452 = vunpack.c.l.b16 %v179
  %v453 = vunpack.c.l.b16 %v180
  %v454 = vunpack.c.l.b16 %v181
  %v455 = vunpack.c.l.b16 %v182
  %v456 = vunpack.c.l.b16 %v183
  %v457 = vunpack.c.l.b16 %v184
  %v458 = vunpack.c.l.b16 %v185
  %v459 = vunpack.c.l.b16 %v186
  %v460 = vunpack.c.l.b16 %v187
  %v461 = vunpack.c.l.b16 %v188
  %v462 = vunpack.c.l.b16 %v189
  %v463 = vpack.c.b16 %v448, %v447
  %v464 = vpack.c.b16 %v450, %v449
  %v465 = vpack.c.b16 %v452, %v451
  %v466 = vpack.c.b16 %v454, %v453
  %v467 = vpack.c.b16 %v456, %v455
  %v468 = vpack.c.b16 %v458, %v457
  %v469 = vpack.c.b16 %v460, %v459
  %v470 = vpack.c.b16 %v462, %v461
  %v495 = vunpack.c.l.b16 %v190
  %v496 = vunpack.c.l.b16 %v191
  %v497 = vunpack.c.l.b16 %v192
  %v498 = vunpack.c.l.b16 %v193
  %v499 = vunpack.c.l.b16 %v194
  %v500 = vunpack.c.l.b16 %v195
  %v501 = vunpack.c.l.b16 %v196
  %v502 = vunpack.c.l.b16 %v197
  %v503 = vunpack.c.l.b16 %v198
  %v504 = vunpack.c.l.b16 %v199
  %v505 = vunpack.c.l.b16 %v200
  %v506 = vunpack.c.l.b16 %v201
  %v507 = vunpack.c.l.b16 %v202
  %v508 = vunpack.c.l.b16 %v203
  %v509 = vunpack.c.l.b16 %v204
  %v510 = vunpack.c.l.b16 %v205
  %v511 = vpack.c.b16 %v496, %v495
  %v512 = vpack.c.b16 %v498, %v497
  %v513 = vpack.c.b16 %v500, %v499
  %v514 = vpack.c.b16 %v502, %v501
  %v515 = vpack.c.b16 %v504, %v503
  %v516 = vpack.c.b16 %v506, %v505
  %v517 = vpack.c.b16 %v508, %v507
  %v518 = vpack.c.b16 %v510, %v509
  %527 = vmatprep.subr.bf16.mxu0 0
  %528 = vmatpush1.bf16.msra.mxu0 %v511
  %529 = vmatprep.subr.bf16.mxu0 0
  %530 = vmatpush1.bf16.msra.mxu0 %v512
  %531 = vmatprep.subr.bf16.mxu0 0
  %532 = vmatpush1.bf16.msra.mxu0 %v513
  %533 = vmatprep.subr.bf16.mxu0 0
  %534 = vmatpush1.bf16.msra.mxu0 %v514
  %535 = vmatprep.subr.bf16.mxu0 0
  %536 = vmatpush1.bf16.msra.mxu0 %v515
  %537 = vmatprep.subr.bf16.mxu0 0
  %538 = vmatpush1.bf16.msra.mxu0 %v516
  %539 = vmatprep.subr.bf16.mxu0 0
  %540 = vmatpush1.bf16.msra.mxu0 %v517
  %541 = vmatprep.subr.bf16.mxu0 0
  %542 = vmatpush1.bf16.msra.mxu0 %v518
  %543 = vmatprep.subr.bf16.mxu0 0
  %544 = vmatpush1.bf16.msra.mxu0 0
  %545 = vmatprep.subr.bf16.mxu0 0
  %546 = vmatpush1.bf16.msra.mxu0 0
  %547 = vmatprep.subr.bf16.mxu0 0
  %548 = vmatpush1.bf16.msra.mxu0 0
  %549 = vmatprep.subr.bf16.mxu0 0
  %550 = vmatpush1.bf16.msra.mxu0 0
  %551 = vmatprep.subr.bf16.mxu0 0
  %552 = vmatpush1.bf16.msra.mxu0 0
  %553 = vmatprep.subr.bf16.mxu0 0
  %554 = vmatpush1.bf16.msra.mxu0 0
  %555 = vmatprep.subr.bf16.mxu0 0
  %556 = vmatpush1.bf16.msra.mxu0 0
  %557 = vmatprep.subr.bf16.mxu0 0
  %558 = vmatpush1.bf16.msra.mxu0 0
  %559 = vmatprep.mubr.bf16.mxu0 0
  %560 = vmatmul.mubr.bf16.gmra.mrb[0].mxu0 %v463
  %v561 = vpop.f32.mrb[0].mxu0
  %v562 = vadd.f32 %v369, %v561
  %v563 = vpop.f32.mrb[0].mxu0
  %v564 = vpop.f32.mrb[0].mxu0
  %v565 = vadd.f32 %v372, %v564
  %v566 = vpop.f32.mrb[0].mxu0
  %567 = vmatprep.mubr.bf16.mxu0 0
  %568 = vmatmul.mubr.bf16.gmra.mrb[0].mxu0 %v464
  %v569 = vpop.f32.mrb[0].mxu0
  %v570 = vadd.f32 %v377, %v569
  %v571 = vpop.f32.mrb[0].mxu0
  %v572 = vpop.f32.mrb[0].mxu0
  %v573 = vadd.f32 %v380, %v572
  %v574 = vpop.f32.mrb[0].mxu0
  %575 = vmatprep.mubr.bf16.mxu0 0
  %576 = vmatmul.mubr.bf16.gmra.mrb[0].mxu0 %v465
  %v577 = vpop.f32.mrb[0].mxu0
  %v578 = vadd.f32 %v385, %v577
  %v579 = vpop.f32.mrb[0].mxu0
  %v580 = vpop.f32.mrb[0].mxu0
  %v581 = vadd.f32 %v388, %v580
  %v582 = vpop.f32.mrb[0].mxu0
  %583 = vmatprep.mubr.bf16.mxu0 0
  %584 = vmatmul.mubr.bf16.gmra.mrb[0].mxu0 %v466
  %v585 = vpop.f32.mrb[0].mxu0
  %v586 = vadd.f32 %v393, %v585
  %v587 = vpop.f32.mrb[0].mxu0
  %v588 = vpop.f32.mrb[0].mxu0
  %v589 = vadd.f32 %v396, %v588
  %v590 = vpop.f32.mrb[0].mxu0
  %591 = vmatprep.mubr.bf16.mxu0 0
  %592 = vmatmul.mubr.bf16.gmra.mrb[0].mxu0 %v467
  %v593 = vpop.f32.mrb[0].mxu0
  %v594 = vadd.f32 %v401, %v593
  %v595 = vpop.f32.mrb[0].mxu0
  %v596 = vpop.f32.mrb[0].mxu0
  %v597 = vadd.f32 %v404, %v596
  %v598 = vpop.f32.mrb[0].mxu0
  %599 = vmatprep.mubr.bf16.mxu0 0
  %600 = vmatmul.mubr.bf16.gmra.mrb[0].mxu0 %v468
  %v601 = vpop.f32.mrb[0].mxu0
  %v602 = vadd.f32 %v409, %v601
  %v603 = vpop.f32.mrb[0].mxu0
  %v604 = vpop.f32.mrb[0].mxu0
  %v605 = vadd.f32 %v412, %v604
  %v606 = vpop.f32.mrb[0].mxu0
  %607 = vmatprep.mubr.bf16.mxu0 0
  %608 = vmatmul.mubr.bf16.gmra.mrb[0].mxu0 %v469
  %v609 = vpop.f32.mrb[0].mxu0
  %v610 = vadd.f32 %v417, %v609
  %v611 = vpop.f32.mrb[0].mxu0
  %v612 = vpop.f32.mrb[0].mxu0
  %v613 = vadd.f32 %v420, %v612
  %v614 = vpop.f32.mrb[0].mxu0
  %615 = vmatprep.mubr.bf16.mxu0 0
  %616 = vmatmul.mubr.bf16.gmra.mrb[0].mxu0 %v470
  %v617 = vpop.f32.mrb[0].mxu0
  %v618 = vadd.f32 %v425, %v617
  %v619 = vpop.f32.mrb[0].mxu0
  %v620 = vpop.f32.mrb[0].mxu0
  %v621 = vadd.f32 %v428, %v620
  %v622 = vpop.f32.mrb[0].mxu0
  %623 = vdwg.mxu0
  %v624 = vpack.c.bf16 %v115, %v112
  %v625 = vpack.c.bf16 %v123, %v120
  %v626 = vpack.c.bf16 %v131, %v128
  %v627 = vpack.c.bf16 %v139, %v136
  %v628 = vpack.c.bf16 %v147, %v144
  %v629 = vpack.c.bf16 %v155, %v152
  %v630 = vpack.c.bf16 %v163, %v160
  %v631 = vpack.c.bf16 %v171, %v168
  %v632 = vld [vmem:[%s6] sm:$0xf]
  %v633 = vld [vmem:[%s6 + $0x4] sm:$0xf]
  %v634 = vld [vmem:[%s6 + $0x8] sm:$0xf]
  %v635 = vld [vmem:[%s6 + $0xc] sm:$0xf]
  %v636 = vld [vmem:[%s6 + $0x10] sm:$0xf]
  %v637 = vld [vmem:[%s6 + $0x14] sm:$0xf]
  %v638 = vld [vmem:[%s6 + $0x18] sm:$0xf]
  %v639 = vld [vmem:[%s6 + $0x1c] sm:$0xf]
  %v640 = vld [vmem:[%s6 + $0x20] sm:$0xf]
  %v641 = vld [vmem:[%s6 + $0x24] sm:$0xf]
  %v642 = vld [vmem:[%s6 + $0x28] sm:$0xf]
  %v643 = vld [vmem:[%s6 + $0x2c] sm:$0xf]
  %v644 = vld [vmem:[%s6 + $0x30] sm:$0xf]
  %v645 = vld [vmem:[%s6 + $0x34] sm:$0xf]
  %v646 = vld [vmem:[%s6 + $0x38] sm:$0xf]
  %v647 = vld [vmem:[%s6 + $0x3c] sm:$0xf]
  %v664 = vunpack.c.l.b16 %v632
  %v665 = vunpack.c.l.b16 %v633
  %v666 = vunpack.c.l.b16 %v634
  %v667 = vunpack.c.l.b16 %v635
  %v668 = vunpack.c.l.b16 %v636
  %v669 = vunpack.c.l.b16 %v637
  %v670 = vunpack.c.l.b16 %v638
  %v671 = vunpack.c.l.b16 %v639
  %v672 = vunpack.c.l.b16 %v640
  %v673 = vunpack.c.l.b16 %v641
  %v674 = vunpack.c.l.b16 %v642
  %v675 = vunpack.c.l.b16 %v643
  %v676 = vunpack.c.l.b16 %v644
  %v677 = vunpack.c.l.b16 %v645
  %v678 = vunpack.c.l.b16 %v646
  %v679 = vunpack.c.l.b16 %v647
  %v680 = vpack.c.b16 %v665, %v664
  %v681 = vpack.c.b16 %v667, %v666
  %v682 = vpack.c.b16 %v669, %v668
  %v683 = vpack.c.b16 %v671, %v670
  %v684 = vpack.c.b16 %v673, %v672
  %v685 = vpack.c.b16 %v675, %v674
  %v686 = vpack.c.b16 %v677, %v676
  %v687 = vpack.c.b16 %v679, %v678
  %696 = vmatprep.subr.bf16.mxu0 0
  %697 = vmatpush1.bf16.msra.mxu0 %v680
  %698 = vmatprep.subr.bf16.mxu0 0
  %699 = vmatpush1.bf16.msra.mxu0 %v681
  %700 = vmatprep.subr.bf16.mxu0 0
  %701 = vmatpush1.bf16.msra.mxu0 %v682
  %702 = vmatprep.subr.bf16.mxu0 0
  %703 = vmatpush1.bf16.msra.mxu0 %v683
  %704 = vmatprep.subr.bf16.mxu0 0
  %705 = vmatpush1.bf16.msra.mxu0 %v684
  %706 = vmatprep.subr.bf16.mxu0 0
  %707 = vmatpush1.bf16.msra.mxu0 %v685
  %708 = vmatprep.subr.bf16.mxu0 0
  %709 = vmatpush1.bf16.msra.mxu0 %v686
  %710 = vmatprep.subr.bf16.mxu0 0
  %711 = vmatpush1.bf16.msra.mxu0 %v687
  %712 = vmatprep.subr.bf16.mxu0 0
  %713 = vmatpush1.bf16.msra.mxu0 0
  %714 = vmatprep.subr.bf16.mxu0 0
  %715 = vmatpush1.bf16.msra.mxu0 0
  %716 = vmatprep.subr.bf16.mxu0 0
  %717 = vmatpush1.bf16.msra.mxu0 0
  %718 = vmatprep.subr.bf16.mxu0 0
  %719 = vmatpush1.bf16.msra.mxu0 0
  %720 = vmatprep.subr.bf16.mxu0 0
  %721 = vmatpush1.bf16.msra.mxu0 0
  %722 = vmatprep.subr.bf16.mxu0 0
  %723 = vmatpush1.bf16.msra.mxu0 0
  %724 = vmatprep.subr.bf16.mxu0 0
  %725 = vmatpush1.bf16.msra.mxu0 0
  %726 = vmatprep.subr.bf16.mxu0 0
  %727 = vmatpush1.bf16.msra.mxu0 0
  %728 = vmatprep.mubr.bf16.mxu0 0
  %729 = vmatmul.mubr.bf16.gmra.mrb[0].mxu0 %v624
  %v730 = vpop.f32.mrb[0].mxu0
  %v731 = vadd.f32 0.0, %v730
  %v732 = vpop.f32.mrb[0].mxu0
  %v733 = vpop.f32.mrb[0].mxu0
  %v734 = vadd.f32 0.0, %v733
  %v735 = vpop.f32.mrb[0].mxu0
  %736 = vmatprep.mubr.bf16.mxu0 0
  %737 = vmatmul.mubr.bf16.gmra.mrb[0].mxu0 %v625
  %v738 = vpop.f32.mrb[0].mxu0
  %v739 = vadd.f32 0.0, %v738
  %v740 = vpop.f32.mrb[0].mxu0
  %v741 = vpop.f32.mrb[0].mxu0
  %v742 = vadd.f32 0.0, %v741
  %v743 = vpop.f32.mrb[0].mxu0
  %744 = vmatprep.mubr.bf16.mxu0 0
  %745 = vmatmul.mubr.bf16.gmra.mrb[0].mxu0 %v626
  %v746 = vpop.f32.mrb[0].mxu0
  %v747 = vadd.f32 0.0, %v746
  %v748 = vpop.f32.mrb[0].mxu0
  %v749 = vpop.f32.mrb[0].mxu0
  %v750 = vadd.f32 0.0, %v749
  %v751 = vpop.f32.mrb[0].mxu0
  %752 = vmatprep.mubr.bf16.mxu0 0
  %753 = vmatmul.mubr.bf16.gmra.mrb[0].mxu0 %v627
  %v754 = vpop.f32.mrb[0].mxu0
  %v755 = vadd.f32 0.0, %v754
  %v756 = vpop.f32.mrb[0].mxu0
  %v757 = vpop.f32.mrb[0].mxu0
  %v758 = vadd.f32 0.0, %v757
  %v759 = vpop.f32.mrb[0].mxu0
  %760 = vmatprep.mubr.bf16.mxu0 0
  %761 = vmatmul.mubr.bf16.gmra.mrb[0].mxu0 %v628
  %v762 = vpop.f32.mrb[0].mxu0
  %v763 = vadd.f32 0.0, %v762
  %v764 = vpop.f32.mrb[0].mxu0
  %v765 = vpop.f32.mrb[0].mxu0
  %v766 = vadd.f32 0.0, %v765
  %v767 = vpop.f32.mrb[0].mxu0
  %768 = vmatprep.mubr.bf16.mxu0 0
  %769 = vmatmul.mubr.bf16.gmra.mrb[0].mxu0 %v629
  %v770 = vpop.f32.mrb[0].mxu0
  %v771 = vadd.f32 0.0, %v770
  %v772 = vpop.f32.mrb[0].mxu0
  %v773 = vpop.f32.mrb[0].mxu0
  %v774 = vadd.f32 0.0, %v773
  %v775 = vpop.f32.mrb[0].mxu0
  %776 = vmatprep.mubr.bf16.mxu0 0
  %777 = vmatmul.mubr.bf16.gmra.mrb[0].mxu0 %v630
  %v778 = vpop.f32.mrb[0].mxu0
  %v779 = vadd.f32 0.0, %v778
  %v780 = vpop.f32.mrb[0].mxu0
  %v781 = vpop.f32.mrb[0].mxu0
  %v782 = vadd.f32 0.0, %v781
  %v783 = vpop.f32.mrb[0].mxu0
  %784 = vmatprep.mubr.bf16.mxu0 0
  %785 = vmatmul.mubr.bf16.gmra.mrb[0].mxu0 %v631
  %v786 = vpop.f32.mrb[0].mxu0
  %v787 = vadd.f32 0.0, %v786
  %v788 = vpop.f32.mrb[0].mxu0
  %v789 = vpop.f32.mrb[0].mxu0
  %v790 = vadd.f32 0.0, %v789
  %v791 = vpop.f32.mrb[0].mxu0
  %792 = vdwg.mxu0
  %v793 = vadd.f32 %v562, %v731
  %v794 = vadd.f32 %v565, %v734
  %v795 = vadd.f32 %v570, %v739
  %v796 = vadd.f32 %v573, %v742
  %v797 = vadd.f32 %v578, %v747
  %v798 = vadd.f32 %v581, %v750
  %v799 = vadd.f32 %v586, %v755
  %v800 = vadd.f32 %v589, %v758
  %v801 = vadd.f32 %v594, %v763
  %v802 = vadd.f32 %v597, %v766
  %v803 = vadd.f32 %v602, %v771
  %v804 = vadd.f32 %v605, %v774
  %v805 = vadd.f32 %v610, %v779
  %v806 = vadd.f32 %v613, %v782
  %v807 = vadd.f32 %v618, %v787
  %v808 = vadd.f32 %v621, %v790
  %v809 = vld [vmem:[%s7] sm:$0x1]
  %v811 = vlaneseq
  %v812 = vshrl.u32 %v811, 7
  %v813 = vsub.s32 0, %v812
  %v814 = vrot.slane %v809, %v813
  %v816 = vadd.f32 %v793, %v814
  %v817 = vadd.f32 %v794, %v814
  %v818 = vadd.f32 %v795, %v814
  %v819 = vadd.f32 %v796, %v814
  %v820 = vadd.f32 %v797, %v814
  %v821 = vadd.f32 %v798, %v814
  %v822 = vadd.f32 %v799, %v814
  %v823 = vadd.f32 %v800, %v814
  %v824 = vadd.f32 %v801, %v814
  %v825 = vadd.f32 %v802, %v814
  %v826 = vadd.f32 %v803, %v814
  %v827 = vadd.f32 %v804, %v814
  %v828 = vadd.f32 %v805, %v814
  %v829 = vadd.f32 %v806, %v814
  %v830 = vadd.f32 %v807, %v814
  %v831 = vadd.f32 %v808, %v814
  %v832 = vlaneseq
  %v833 = vand.u32 %v832, 127
  %vm834 = vcmp.lt.s32.totalorder %v833, 8
  %v835 = vsel %vm834, %v816, -1e+30
  %v836 = vsel %vm834, %v817, -1e+30
  %v837 = vsel %vm834, %v818, -1e+30
  %v838 = vsel %vm834, %v819, -1e+30
  %v839 = vsel %vm834, %v820, -1e+30
  %v840 = vsel %vm834, %v821, -1e+30
  %v841 = vsel %vm834, %v822, -1e+30
  %v842 = vsel %vm834, %v823, -1e+30
  %v843 = vsel %vm834, %v824, -1e+30
  %v844 = vsel %vm834, %v825, -1e+30
  %v845 = vsel %vm834, %v826, -1e+30
  %v846 = vsel %vm834, %v827, -1e+30
  %v847 = vsel %vm834, %v828, -1e+30
  %v848 = vsel %vm834, %v829, -1e+30
  %v849 = vsel %vm834, %v830, -1e+30
  %v850 = vsel %vm834, %v831, -1e+30
  %851 = vmax.xlane.f32.xlu0 %v835
  %v852 = vpop.xlane.xlu0 %851
  %853 = vmax.xlane.f32.xlu0 %v836
  %v854 = vpop.xlane.xlu0 %853
  %855 = vmax.xlane.f32.xlu0 %v837
  %v856 = vpop.xlane.xlu0 %855
  %857 = vmax.xlane.f32.xlu0 %v838
  %v858 = vpop.xlane.xlu0 %857
  %859 = vmax.xlane.f32.xlu0 %v839
  %v860 = vpop.xlane.xlu0 %859
  %861 = vmax.xlane.f32.xlu0 %v840
  %v862 = vpop.xlane.xlu0 %861
  %863 = vmax.xlane.f32.xlu0 %v841
  %v864 = vpop.xlane.xlu0 %863
  %865 = vmax.xlane.f32.xlu0 %v842
  %v866 = vpop.xlane.xlu0 %865
  %867 = vmax.xlane.f32.xlu0 %v843
  %v868 = vpop.xlane.xlu0 %867
  %869 = vmax.xlane.f32.xlu0 %v844
  %v870 = vpop.xlane.xlu0 %869
  %871 = vmax.xlane.f32.xlu0 %v845
  %v872 = vpop.xlane.xlu0 %871
  %873 = vmax.xlane.f32.xlu0 %v846
  %v874 = vpop.xlane.xlu0 %873
  %875 = vmax.xlane.f32.xlu0 %v847
  %v876 = vpop.xlane.xlu0 %875
  %877 = vmax.xlane.f32.xlu0 %v848
  %v878 = vpop.xlane.xlu0 %877
  %879 = vmax.xlane.f32.xlu0 %v849
  %v880 = vpop.xlane.xlu0 %879
  %881 = vmax.xlane.f32.xlu0 %v850
  %v882 = vpop.xlane.xlu0 %881
  %v883 = vsub.f32 %v835, %v852
  %v884 = vsub.f32 %v836, %v854
  %v885 = vsub.f32 %v837, %v856
  %v886 = vsub.f32 %v838, %v858
  %v887 = vsub.f32 %v839, %v860
  %v888 = vsub.f32 %v840, %v862
  %v889 = vsub.f32 %v841, %v864
  %v890 = vsub.f32 %v842, %v866
  %v891 = vsub.f32 %v843, %v868
  %v892 = vsub.f32 %v844, %v870
  %v893 = vsub.f32 %v845, %v872
  %v894 = vsub.f32 %v846, %v874
  %v895 = vsub.f32 %v847, %v876
  %v896 = vsub.f32 %v848, %v878
  %v897 = vsub.f32 %v849, %v880
  %v898 = vsub.f32 %v850, %v882
  %v899 = vmul.f32 %v883, 1.442695
  %v900 = vpow.pop %v899
  %v901 = vmul.f32 %v884, 1.442695
  %v902 = vpow.pop %v901
  %v903 = vmul.f32 %v885, 1.442695
  %v904 = vpow.pop %v903
  %v905 = vmul.f32 %v886, 1.442695
  %v906 = vpow.pop %v905
  %v907 = vmul.f32 %v887, 1.442695
  %v908 = vpow.pop %v907
  %v909 = vmul.f32 %v888, 1.442695
  %v910 = vpow.pop %v909
  %v911 = vmul.f32 %v889, 1.442695
  %v912 = vpow.pop %v911
  %v913 = vmul.f32 %v890, 1.442695
  %v914 = vpow.pop %v913
  %v915 = vmul.f32 %v891, 1.442695
  %v916 = vpow.pop %v915
  %v917 = vmul.f32 %v892, 1.442695
  %v918 = vpow.pop %v917
  %v919 = vmul.f32 %v893, 1.442695
  %v920 = vpow.pop %v919
  %v921 = vmul.f32 %v894, 1.442695
  %v922 = vpow.pop %v921
  %v923 = vmul.f32 %v895, 1.442695
  %v924 = vpow.pop %v923
  %v925 = vmul.f32 %v896, 1.442695
  %v926 = vpow.pop %v925
  %v927 = vmul.f32 %v897, 1.442695
  %v928 = vpow.pop %v927
  %v929 = vmul.f32 %v898, 1.442695
  %v930 = vpow.pop %v929
  %931 = vadd.xlane.f32.xlu0 %v900
  %v932 = vpop.xlane.xlu0 %931
  %933 = vadd.xlane.f32.xlu0 %v902
  %v934 = vpop.xlane.xlu0 %933
  %935 = vadd.xlane.f32.xlu0 %v904
  %v936 = vpop.xlane.xlu0 %935
  %937 = vadd.xlane.f32.xlu0 %v906
  %v938 = vpop.xlane.xlu0 %937
  %939 = vadd.xlane.f32.xlu0 %v908
  %v940 = vpop.xlane.xlu0 %939
  %941 = vadd.xlane.f32.xlu0 %v910
  %v942 = vpop.xlane.xlu0 %941
  %943 = vadd.xlane.f32.xlu0 %v912
  %v944 = vpop.xlane.xlu0 %943
  %945 = vadd.xlane.f32.xlu0 %v914
  %v946 = vpop.xlane.xlu0 %945
  %947 = vadd.xlane.f32.xlu0 %v916
  %v948 = vpop.xlane.xlu0 %947
  %949 = vadd.xlane.f32.xlu0 %v918
  %v950 = vpop.xlane.xlu0 %949
  %951 = vadd.xlane.f32.xlu0 %v920
  %v952 = vpop.xlane.xlu0 %951
  %953 = vadd.xlane.f32.xlu0 %v922
  %v954 = vpop.xlane.xlu0 %953
  %955 = vadd.xlane.f32.xlu0 %v924
  %v956 = vpop.xlane.xlu0 %955
  %957 = vadd.xlane.f32.xlu0 %v926
  %v958 = vpop.xlane.xlu0 %957
  %959 = vadd.xlane.f32.xlu0 %v928
  %v960 = vpop.xlane.xlu0 %959
  %961 = vadd.xlane.f32.xlu0 %v930
  %v962 = vpop.xlane.xlu0 %961
  %v963 = vrcp.pop %v932
  %v964 = vrcp.pop %v934
  %v965 = vrcp.pop %v936
  %v966 = vrcp.pop %v938
  %v967 = vrcp.pop %v940
  %v968 = vrcp.pop %v942
  %v969 = vrcp.pop %v944
  %v970 = vrcp.pop %v946
  %v971 = vrcp.pop %v948
  %v972 = vrcp.pop %v950
  %v973 = vrcp.pop %v952
  %v974 = vrcp.pop %v954
  %v975 = vrcp.pop %v956
  %v976 = vrcp.pop %v958
  %v977 = vrcp.pop %v960
  %v978 = vrcp.pop %v962
  %v979 = vmul.f32 %v900, %v963
  %v980 = vmul.f32 %v902, %v964
  %v981 = vmul.f32 %v904, %v965
  %v982 = vmul.f32 %v906, %v966
  %v983 = vmul.f32 %v908, %v967
  %v984 = vmul.f32 %v910, %v968
  %v985 = vmul.f32 %v912, %v969
  %v986 = vmul.f32 %v914, %v970
  %v987 = vmul.f32 %v916, %v971
  %v988 = vmul.f32 %v918, %v972
  %v989 = vmul.f32 %v920, %v973
  %v990 = vmul.f32 %v922, %v974
  %v991 = vmul.f32 %v924, %v975
  %v992 = vmul.f32 %v926, %v976
  %v993 = vmul.f32 %v928, %v977
  %v994 = vmul.f32 %v930, %v978
  %995 = vst [vmem:[%s8] sm:$0xff] %v979
  %996 = vst [vmem:[%s8 + $0x8] sm:$0xff] %v980
  %997 = vst [vmem:[%s8 + $0x10] sm:$0xff] %v981
  %998 = vst [vmem:[%s8 + $0x18] sm:$0xff] %v982
  %999 = vst [vmem:[%s8 + $0x20] sm:$0xff] %v983
  %1000 = vst [vmem:[%s8 + $0x28] sm:$0xff] %v984
  %1001 = vst [vmem:[%s8 + $0x30] sm:$0xff] %v985
  %1002 = vst [vmem:[%s8 + $0x38] sm:$0xff] %v986
  %1003 = vst [vmem:[%s8 + $0x40] sm:$0xff] %v987
  %1004 = vst [vmem:[%s8 + $0x48] sm:$0xff] %v988
  %1005 = vst [vmem:[%s8 + $0x50] sm:$0xff] %v989
  %1006 = vst [vmem:[%s8 + $0x58] sm:$0xff] %v990
  %1007 = vst [vmem:[%s8 + $0x60] sm:$0xff] %v991
  %1008 = vst [vmem:[%s8 + $0x68] sm:$0xff] %v992
  %1009 = vst [vmem:[%s8 + $0x70] sm:$0xff] %v993
  %1010 = vst [vmem:[%s8 + $0x78] sm:$0xff] %v994
  // Predicated region
  $region34: #{gnn_dir2_encoder_forward.7} parent=0 // pred_check
    _
  $region35: #{gnn_dir2_encoder_forward.7} parent=0 // pred_check_branch
    %1012 = sbr.rel (0) target = $region37
  $region36: #{gnn_dir2_encoder_forward.7} parent=0 // pred_region
    _
  $region37: #{gnn_dir2_encoder_forward.7} parent=0 // pred_fallthru
    _
  // Predicated region
  $region38: #{gnn_dir2_encoder_forward.7} parent=0 // pred_check
    _
  $region39: #{gnn_dir2_encoder_forward.7} parent=0 // pred_check_branch
    %1014 = sbr.rel (0) target = $region41
  $region40: #{gnn_dir2_encoder_forward.7} parent=0 // pred_region
    _
  $region41: #{gnn_dir2_encoder_forward.7} parent=0 // pred_fallthru
    _

</llo_original>
